<compile_context>
chip_gen: v7x
topology: tpu7x:2x2x1
jax: 0.10.0
libtpu: 0.0.40
codegen_flags: <defaults>
</compile_context>

<pallas_src>
import jax
import jax.numpy as jnp
from jax.experimental import pallas as pl
from jax.experimental.pallas import tpu as pltpu

EPS = 1e-5


def down_kernel(xp_ref, w1_ref, g1_ref, be1_ref, w2_ref, g2_ref, be2_ref,
                o_ref, pad_ref):
    # xp_ref : (4, N, Hp, Wp, Ci) f32   -- leading axis = flattened 2x2 pool window
    # w*_ref : (9, Cm, Co) matmul dtype -- tap-major, Cin zero-padded to Cm
    # g*/be* : (1, Co) f32
    # o_ref  : (N*Hp*Wp, Co) f32
    # pad_ref: (N, Hp+2, Wp+2, Cm) f32 shared SAME-padding scratch (both convs)
    _, N, Hp, Wp, Ci = xp_ref.shape
    Co = o_ref.shape[-1]
    Cm = pad_ref.shape[-1]
    rows = N * Hp * Wp
    inv_rows = 1.0 / rows

    # Zero the padded scratch once: provides the SAME-conv halo AND guarantees the
    # channel tail [Ci:Cm] is zero (never multiply stale VMEM — could be NaN).
    pad_ref[...] = jnp.zeros(pad_ref.shape, pad_ref.dtype)

    def conv3x3(w_ref):
        """3x3 SAME conv = 9 shifted-slab dots off pad_ref views, f32 accumulation."""
        mdt = w_ref.dtype  # bf16 on the MXU-friendly path, f32 on the exact path
        acc = jnp.zeros((rows, Co), jnp.float32)
        for tap in range(9):
            dy, dx = tap // 3, tap % 3
            # Full-lane-width slab read (K = Cm); the relayout for the leading-dim
            # collapse fuses with the dtype cast.  No im2col buffer is materialized.
            lhs = pad_ref[:, dy:dy + Hp, dx:dx + Wp, :].reshape(rows, Cm).astype(mdt)
            acc = acc + jnp.dot(lhs, w_ref[tap], preferred_element_type=jnp.float32)
        return acc                                                     # (rows, Co) f32

    def bn_relu(a, gamma, beta):
        """Training-mode BatchNorm (biased batch stats, single pass, f32) + ReLU."""
        mean = jnp.sum(a, axis=0, keepdims=True) * inv_rows            # (1, Co)
        ex2 = jnp.sum(a * a, axis=0, keepdims=True) * inv_rows
        var = ex2 - mean * mean
        scale = gamma * jax.lax.rsqrt(var + EPS)
        shift = beta - mean * scale
        return jnp.maximum(a * scale + shift, 0.0)                     # one FMA + max / elem

    # ---- MaxPool2d(2): window axis leading -> three lane-dense VPU maxima -------------
    pooled = jnp.maximum(jnp.maximum(xp_ref[0], xp_ref[1]),
                         jnp.maximum(xp_ref[2], xp_ref[3]))            # (N, Hp, Wp, Ci) f32

    # ---- Conv1 -> BN1 -> ReLU (conv bias omitted: cancelled by training-mode BN) -------
    pad_ref[:, 1:Hp + 1, 1:Wp + 1, :Ci] = pooled
    y = bn_relu(conv3x3(w1_ref), g1_ref[...], be1_ref[...])            # (rows, Co) f32

    # ---- Conv2 -> BN2 -> ReLU -----------------------------------------------------------
    pad_ref[:, 1:Hp + 1, 1:Wp + 1, :Co] = y.reshape(N, Hp, Wp, Co)
    z = bn_relu(conv3x3(w2_ref), g2_ref[...], be2_ref[...])

    o_ref[...] = z.astype(o_ref.dtype)


def _full_spec(shape):
    n = len(shape)
    return pl.BlockSpec(shape, lambda i, _n=n: (0,) * _n)


def _vmem_padded_bytes(shape, itemsize=4):
    """Approximate VMEM footprint: lane dim -> multiple of 128, sublane dim -> multiple of 8."""
    s = list(shape)
    s[-1] = ((s[-1] + 127) // 128) * 128
    if len(s) >= 2:
        s[-2] = ((s[-2] + 7) // 8) * 8
    n = itemsize
    for d in s:
        n *= int(d)
    return n


def down_forward(x_nchw, params, matmul_dtype=jnp.bfloat16):
    """x_nchw: (N, Ci, H, W) f32 -> (N, Co, H/2, W/2) f32.

    matmul_dtype: dtype of the MXU operands (bf16 = native MXU path; f32 = exact path).
    Accumulation, BatchNorm and ReLU are always f32.
    """
    w1, b1, g1, be1, w2, b2, g2, be2 = params   # b1/b2 unused: cancelled by train-mode BN
    N, Ci, H, W = x_nchw.shape
    Co = w1.shape[0]
    Hp, Wp = H // 2, W // 2
    Cm = max(Ci, Co)
    rows = N * Hp * Wp

    # Single relayout: NCHW -> pool-window-LEADING layout (4, N, Hp, Wp, Ci).
    xp = (x_nchw.reshape(N, Ci, Hp, 2, Wp, 2)
                .transpose(3, 5, 0, 2, 4, 1)
                .reshape(4, N, Hp, Wp, Ci))

    # Weights (Co, Cin, 3, 3) -> tap-major (9, Cm, Co), Cin zero-padded to Cm, MXU dtype.
    def prep_w(w, cin):
        wk = jnp.transpose(w, (2, 3, 1, 0)).reshape(9, cin, Co)
        if cin < Cm:
            wk = jnp.pad(wk, ((0, 0), (0, Cm - cin), (0, 0)))
        return wk.astype(matmul_dtype)

    w1_k = prep_w(w1, Ci)
    w2_k = prep_w(w2, Co)
    g1_k, be1_k = g1.reshape(1, Co), be1.reshape(1, Co)
    g2_k, be2_k = g2.reshape(1, Co), be2.reshape(1, Co)

    args = (xp, w1_k, g1_k, be1_k, w2_k, g2_k, be2_k)
    pad_shape = (N, Hp + 2, Wp + 2, Cm)

    # VMEM budget: actual padded footprints, single-buffered (grid=(1,): nothing to
    # pipeline), plus staging headroom, capped below the device's physical VMEM.
    need = sum(_vmem_padded_bytes(a.shape, a.dtype.itemsize) for a in args)
    need += _vmem_padded_bytes((rows, Co))                              # output
    need += _vmem_padded_bytes(pad_shape)                               # pad scratch (f32)
    need += 2 * _vmem_padded_bytes((rows, Cm), jnp.dtype(matmul_dtype).itemsize)  # tap slab
    need += 2 * _vmem_padded_bytes((rows, Co))                          # f32 accumulator
    try:
        cap = int(pltpu.get_tpu_info().vmem_capacity_bytes)
    except Exception:                                                   # pragma: no cover
        cap = 64 * 1024 * 1024                                          # v7x floor
    usable = (cap * 3) // 4
    vmem_limit = min(max(2 * need, 32 * 1024 * 1024), usable)

    out_flat = pl.pallas_call(
        down_kernel,
        out_shape=jax.ShapeDtypeStruct((rows, Co), jnp.float32),
        grid=(1,),
        in_specs=[_full_spec(a.shape) for a in args],
        out_specs=_full_spec((rows, Co)),
        scratch_shapes=[
            pltpu.VMEM(pad_shape, jnp.float32),   # shared SAME-padding buffer (both convs)
        ],
        compiler_params=pltpu.CompilerParams(
            dimension_semantics=("arbitrary",),
            vmem_limit_bytes=vmem_limit),
    )(*args)

    return out_flat.reshape(N, Hp, Wp, Co).transpose(0, 3, 1, 2)


# ----------------------------- pure-JAX reference --------------------------------
def _bn_train(y, gamma, beta):
    mean = y.mean(axis=(0, 1, 2), keepdims=True)
    var = ((y - mean) ** 2).mean(axis=(0, 1, 2), keepdims=True)
    return (y - mean) * jax.lax.rsqrt(var + EPS) * gamma + beta


def down_reference(x_nchw, params, matmul_dtype=jnp.float32):
    """Reference; matmul_dtype controls the conv operand precision (f32 accumulation)."""
    w1, b1, g1, be1, w2, b2, g2, be2 = params
    N, Ci, H, W = x_nchw.shape
    Hp, Wp = H // 2, W // 2
    x = jnp.transpose(x_nchw, (0, 2, 3, 1))                             # NHWC
    x = x.reshape(N, Hp, 2, Wp, 2, Ci).max(axis=(2, 4))                 # maxpool 2x2

    def conv(x, w, b):
        y = jax.lax.conv_general_dilated(
            x.astype(matmul_dtype),
            jnp.transpose(w, (2, 3, 1, 0)).astype(matmul_dtype),
            (1, 1), 'SAME',
            dimension_numbers=('NHWC', 'HWIO', 'NHWC'),
            preferred_element_type=jnp.float32)
        return y + b

    y = jnp.maximum(_bn_train(conv(x, w1, b1), g1, be1), 0.0)
    z = jnp.maximum(_bn_train(conv(y, w2, b2), g2, be2), 0.0)
    return jnp.transpose(z, (0, 3, 1, 2))


if __name__ == "__main__":
    N, Ci, Co, H, W = 2, 4, 8, 16, 16
    key = jax.random.PRNGKey(0)
    kx, kw1, kb1, kw2, kb2 = jax.random.split(key, 5)

    x = jax.random.normal(kx, (N, Ci, H, W), jnp.float32)

    # Deterministic parameter init (shapes from Conv2d/BatchNorm2d in __init__)
    w1 = jax.random.normal(kw1, (Co, Ci, 3, 3), jnp.float32) * 0.1
    b1 = jax.random.normal(kb1, (Co,), jnp.float32) * 0.1
    g1 = jnp.ones((Co,), jnp.float32)       # BatchNorm default gamma
    be1 = jnp.zeros((Co,), jnp.float32)     # BatchNorm default beta
    w2 = jax.random.normal(kw2, (Co, Co, 3, 3), jnp.float32) * 0.1
    b2 = jax.random.normal(kb2, (Co,), jnp.float32) * 0.1
    g2 = jnp.ones((Co,), jnp.float32)
    be2 = jnp.zeros((Co,), jnp.float32)

    params = (w1, b1, g1, be1, w2, b2, g2, be2)

    # --- Path 1: bf16 MXU operands (production path), f32 accumulate / BN / ReLU --------
    out_bf16 = jax.block_until_ready(down_forward(x, params))           # default bf16
    assert out_bf16.shape == (N, Co, H // 2, W // 2)

    ref_bf16 = jax.block_until_ready(down_reference(x, params, jnp.bfloat16))
    assert jnp.allclose(out_bf16, ref_bf16, atol=5e-3, rtol=5e-3), \
        float(jnp.max(jnp.abs(out_bf16 - ref_bf16)))

    ref_f32 = jax.block_until_ready(down_reference(x, params, jnp.float32))
    # Loose bound vs. the full-f32 reference: the gap is the bf16 operand quantization.
    assert jnp.allclose(out_bf16, ref_f32, atol=5e-2, rtol=5e-2), \
        float(jnp.max(jnp.abs(out_bf16 - ref_f32)))

    # --- Path 2: f32 MXU operands — bit-tight agreement with the f32 reference ----------
    out_f32 = jax.block_until_ready(down_forward(x, params, matmul_dtype=jnp.float32))
    assert jnp.allclose(out_f32, ref_f32, atol=1e-4, rtol=1e-4), \
        float(jnp.max(jnp.abs(out_f32 - ref_f32)))

    print("KERNEL_OK")
</pallas_src>

<mosaic_0001>
module attributes {stable_mosaic.version = 11 : i64} {
  func.func @down_kernel(%arg0: i32, %arg1: memref<4x2x8x8x4xf32, #tpu.memory_space<vmem>>, %arg2: memref<9x8x8xbf16, #tpu.memory_space<vmem>>, %arg3: memref<1x8xf32, #tpu.memory_space<vmem>>, %arg4: memref<1x8xf32, #tpu.memory_space<vmem>>, %arg5: memref<9x8x8xbf16, #tpu.memory_space<vmem>>, %arg6: memref<1x8xf32, #tpu.memory_space<vmem>>, %arg7: memref<1x8xf32, #tpu.memory_space<vmem>>, %arg8: memref<128x8xf32, #tpu.memory_space<vmem>>, %arg9: memref<2x10x10x8xf32, #tpu.memory_space<vmem>>) attributes {dimension_semantics = [#tpu.dimension_semantics<arbitrary>], iteration_bounds = array<i64: 1>, scalar_prefetch = 0 : i64, scratch_operands = 1 : i64, tpu.core_type = #tpu.core_type<tc>, window_params = [{pipeline_mode = #tpu.pipeline_mode<synchronous>, transform_indices = @transform_0, window_bounds = array<i64: 4, 2, 8, 8, 4>}, {pipeline_mode = #tpu.pipeline_mode<synchronous>, transform_indices = @transform_1, window_bounds = array<i64: 9, 8, 8>}, {pipeline_mode = #tpu.pipeline_mode<synchronous>, transform_indices = @transform_2, window_bounds = array<i64: 1, 8>}, {pipeline_mode = #tpu.pipeline_mode<synchronous>, transform_indices = @transform_3, window_bounds = array<i64: 1, 8>}, {pipeline_mode = #tpu.pipeline_mode<synchronous>, transform_indices = @transform_4, window_bounds = array<i64: 9, 8, 8>}, {pipeline_mode = #tpu.pipeline_mode<synchronous>, transform_indices = @transform_5, window_bounds = array<i64: 1, 8>}, {pipeline_mode = #tpu.pipeline_mode<synchronous>, transform_indices = @transform_6, window_bounds = array<i64: 1, 8>}, {pipeline_mode = #tpu.pipeline_mode<synchronous>, transform_indices = @transform_7, window_bounds = array<i64: 128, 8>}]} {
    %cst = arith.constant 0.000000e+00 : f32
    %0 = vector.broadcast %cst : f32 to vector<2x10x10x8xf32>
    %c0 = arith.constant 0 : index
    %c0_0 = arith.constant 0 : index
    %c0_1 = arith.constant 0 : index
    %c0_2 = arith.constant 0 : index
    %1 = vector.load %arg9[%c0, %c0_0, %c0_1, %c0_2] : memref<2x10x10x8xf32, #tpu.memory_space<vmem>>, vector<2x10x10x8xf32>
    tpu.vector_store %arg9[%c0, %c0_0, %c0_1, %c0_2], %0 {strides = array<i32>} : memref<2x10x10x8xf32, #tpu.memory_space<vmem>>, vector<2x10x10x8xf32>,
    %c0_3 = arith.constant 0 : index
    %c0_4 = arith.constant 0 : index
    %c0_5 = arith.constant 0 : index
    %c0_6 = arith.constant 0 : index
    %c0_7 = arith.constant 0 : index
    %2 = vector.load %arg1[%c0_3, %c0_4, %c0_5, %c0_6, %c0_7] : memref<4x2x8x8x4xf32, #tpu.memory_space<vmem>>, vector<1x2x8x8x4xf32>
    %3 = vector.shape_cast %2 : vector<1x2x8x8x4xf32> to vector<2x8x8x4xf32>
    %c1 = arith.constant 1 : index
    %c0_8 = arith.constant 0 : index
    %c0_9 = arith.constant 0 : index
    %c0_10 = arith.constant 0 : index
    %c0_11 = arith.constant 0 : index
    %4 = vector.load %arg1[%c1, %c0_8, %c0_9, %c0_10, %c0_11] : memref<4x2x8x8x4xf32, #tpu.memory_space<vmem>>, vector<1x2x8x8x4xf32>
    %5 = vector.shape_cast %4 : vector<1x2x8x8x4xf32> to vector<2x8x8x4xf32>
    %6 = arith.maximumf %3, %5 : vector<2x8x8x4xf32>
    %c2 = arith.constant 2 : index
    %c0_12 = arith.constant 0 : index
    %c0_13 = arith.constant 0 : index
    %c0_14 = arith.constant 0 : index
    %c0_15 = arith.constant 0 : index
    %7 = vector.load %arg1[%c2, %c0_12, %c0_13, %c0_14, %c0_15] : memref<4x2x8x8x4xf32, #tpu.memory_space<vmem>>, vector<1x2x8x8x4xf32>
    %8 = vector.shape_cast %7 : vector<1x2x8x8x4xf32> to vector<2x8x8x4xf32>
    %c3 = arith.constant 3 : index
    %c0_16 = arith.constant 0 : index
    %c0_17 = arith.constant 0 : index
    %c0_18 = arith.constant 0 : index
    %c0_19 = arith.constant 0 : index
    %9 = vector.load %arg1[%c3, %c0_16, %c0_17, %c0_18, %c0_19] : memref<4x2x8x8x4xf32, #tpu.memory_space<vmem>>, vector<1x2x8x8x4xf32>
    %10 = vector.shape_cast %9 : vector<1x2x8x8x4xf32> to vector<2x8x8x4xf32>
    %11 = arith.maximumf %8, %10 : vector<2x8x8x4xf32>
    %12 = arith.maximumf %6, %11 : vector<2x8x8x4xf32>
    %c0_20 = arith.constant 0 : index
    %c1_21 = arith.constant 1 : index
    %c1_22 = arith.constant 1 : index
    %c0_23 = arith.constant 0 : index
    %13 = vector.load %arg9[%c0_20, %c1_21, %c1_22, %c0_23] : memref<2x10x10x8xf32, #tpu.memory_space<vmem>>, vector<2x8x8x4xf32>
    tpu.vector_store %arg9[%c0_20, %c1_21, %c1_22, %c0_23], %12 {strides = array<i32>} : memref<2x10x10x8xf32, #tpu.memory_space<vmem>>, vector<2x8x8x4xf32>,
    %cst_24 = arith.constant 0.000000e+00 : f32
    %14 = vector.broadcast %cst_24 : f32 to vector<128x8xf32>
    %c0_25 = arith.constant 0 : index
    %c0_26 = arith.constant 0 : index
    %c0_27 = arith.constant 0 : index
    %c0_28 = arith.constant 0 : index
    %15 = vector.load %arg9[%c0_25, %c0_26, %c0_27, %c0_28] : memref<2x10x10x8xf32, #tpu.memory_space<vmem>>, vector<2x8x8x8xf32>
    %16 = vector.shape_cast %15 : vector<2x8x8x8xf32> to vector<128x8xf32>
    %17 = arith.truncf %16 : vector<128x8xf32> to vector<128x8xbf16>
    %c0_29 = arith.constant 0 : index
    %c0_30 = arith.constant 0 : index
    %c0_31 = arith.constant 0 : index
    %18 = vector.load %arg2[%c0_29, %c0_30, %c0_31] : memref<9x8x8xbf16, #tpu.memory_space<vmem>>, vector<1x8x8xbf16>
    %19 = vector.shape_cast %18 : vector<1x8x8xbf16> to vector<8x8xbf16>
    %cst_32 = arith.constant dense<0.000000e+00> : vector<128x8xf32>
    %20 = tpu.matmul %17, %19, %cst_32 {dimension_numbers = #tpu.dot_dimension_numbers<[1], [0], [0], [1], [0, 0, 1, 1], [], []>} : vector<128x8xbf16>, vector<8x8xbf16>, vector<128x8xf32> -> vector<128x8xf32>
    %21 = arith.addf %14, %20 : vector<128x8xf32>
    %c0_33 = arith.constant 0 : index
    %c0_34 = arith.constant 0 : index
    %c1_35 = arith.constant 1 : index
    %c0_36 = arith.constant 0 : index
    %22 = vector.load %arg9[%c0_33, %c0_34, %c1_35, %c0_36] : memref<2x10x10x8xf32, #tpu.memory_space<vmem>>, vector<2x8x8x8xf32>
    %23 = vector.shape_cast %22 : vector<2x8x8x8xf32> to vector<128x8xf32>
    %24 = arith.truncf %23 : vector<128x8xf32> to vector<128x8xbf16>
    %c1_37 = arith.constant 1 : index
    %c0_38 = arith.constant 0 : index
    %c0_39 = arith.constant 0 : index
    %25 = vector.load %arg2[%c1_37, %c0_38, %c0_39] : memref<9x8x8xbf16, #tpu.memory_space<vmem>>, vector<1x8x8xbf16>
    %26 = vector.shape_cast %25 : vector<1x8x8xbf16> to vector<8x8xbf16>
    %cst_40 = arith.constant dense<0.000000e+00> : vector<128x8xf32>
    %27 = tpu.matmul %24, %26, %cst_40 {dimension_numbers = #tpu.dot_dimension_numbers<[1], [0], [0], [1], [0, 0, 1, 1], [], []>} : vector<128x8xbf16>, vector<8x8xbf16>, vector<128x8xf32> -> vector<128x8xf32>
    %28 = arith.addf %21, %27 : vector<128x8xf32>
    %c0_41 = arith.constant 0 : index
    %c0_42 = arith.constant 0 : index
    %c2_43 = arith.constant 2 : index
    %c0_44 = arith.constant 0 : index
    %29 = vector.load %arg9[%c0_41, %c0_42, %c2_43, %c0_44] : memref<2x10x10x8xf32, #tpu.memory_space<vmem>>, vector<2x8x8x8xf32>
    %30 = vector.shape_cast %29 : vector<2x8x8x8xf32> to vector<128x8xf32>
    %31 = arith.truncf %30 : vector<128x8xf32> to vector<128x8xbf16>
    %c2_45 = arith.constant 2 : index
    %c0_46 = arith.constant 0 : index
    %c0_47 = arith.constant 0 : index
    %32 = vector.load %arg2[%c2_45, %c0_46, %c0_47] : memref<9x8x8xbf16, #tpu.memory_space<vmem>>, vector<1x8x8xbf16>
    %33 = vector.shape_cast %32 : vector<1x8x8xbf16> to vector<8x8xbf16>
    %cst_48 = arith.constant dense<0.000000e+00> : vector<128x8xf32>
    %34 = tpu.matmul %31, %33, %cst_48 {dimension_numbers = #tpu.dot_dimension_numbers<[1], [0], [0], [1], [0, 0, 1, 1], [], []>} : vector<128x8xbf16>, vector<8x8xbf16>, vector<128x8xf32> -> vector<128x8xf32>
    %35 = arith.addf %28, %34 : vector<128x8xf32>
    %c0_49 = arith.constant 0 : index
    %c1_50 = arith.constant 1 : index
    %c0_51 = arith.constant 0 : index
    %c0_52 = arith.constant 0 : index
    %36 = vector.load %arg9[%c0_49, %c1_50, %c0_51, %c0_52] : memref<2x10x10x8xf32, #tpu.memory_space<vmem>>, vector<2x8x8x8xf32>
    %37 = vector.shape_cast %36 : vector<2x8x8x8xf32> to vector<128x8xf32>
    %38 = arith.truncf %37 : vector<128x8xf32> to vector<128x8xbf16>
    %c3_53 = arith.constant 3 : index
    %c0_54 = arith.constant 0 : index
    %c0_55 = arith.constant 0 : index
    %39 = vector.load %arg2[%c3_53, %c0_54, %c0_55] : memref<9x8x8xbf16, #tpu.memory_space<vmem>>, vector<1x8x8xbf16>
    %40 = vector.shape_cast %39 : vector<1x8x8xbf16> to vector<8x8xbf16>
    %cst_56 = arith.constant dense<0.000000e+00> : vector<128x8xf32>
    %41 = tpu.matmul %38, %40, %cst_56 {dimension_numbers = #tpu.dot_dimension_numbers<[1], [0], [0], [1], [0, 0, 1, 1], [], []>} : vector<128x8xbf16>, vector<8x8xbf16>, vector<128x8xf32> -> vector<128x8xf32>
    %42 = arith.addf %35, %41 : vector<128x8xf32>
    %c0_57 = arith.constant 0 : index
    %c1_58 = arith.constant 1 : index
    %c1_59 = arith.constant 1 : index
    %c0_60 = arith.constant 0 : index
    %43 = vector.load %arg9[%c0_57, %c1_58, %c1_59, %c0_60] : memref<2x10x10x8xf32, #tpu.memory_space<vmem>>, vector<2x8x8x8xf32>
    %44 = vector.shape_cast %43 : vector<2x8x8x8xf32> to vector<128x8xf32>
    %45 = arith.truncf %44 : vector<128x8xf32> to vector<128x8xbf16>
    %c4 = arith.constant 4 : index
    %c0_61 = arith.constant 0 : index
    %c0_62 = arith.constant 0 : index
    %46 = vector.load %arg2[%c4, %c0_61, %c0_62] : memref<9x8x8xbf16, #tpu.memory_space<vmem>>, vector<1x8x8xbf16>
    %47 = vector.shape_cast %46 : vector<1x8x8xbf16> to vector<8x8xbf16>
    %cst_63 = arith.constant dense<0.000000e+00> : vector<128x8xf32>
    %48 = tpu.matmul %45, %47, %cst_63 {dimension_numbers = #tpu.dot_dimension_numbers<[1], [0], [0], [1], [0, 0, 1, 1], [], []>} : vector<128x8xbf16>, vector<8x8xbf16>, vector<128x8xf32> -> vector<128x8xf32>
    %49 = arith.addf %42, %48 : vector<128x8xf32>
    %c0_64 = arith.constant 0 : index
    %c1_65 = arith.constant 1 : index
    %c2_66 = arith.constant 2 : index
    %c0_67 = arith.constant 0 : index
    %50 = vector.load %arg9[%c0_64, %c1_65, %c2_66, %c0_67] : memref<2x10x10x8xf32, #tpu.memory_space<vmem>>, vector<2x8x8x8xf32>
    %51 = vector.shape_cast %50 : vector<2x8x8x8xf32> to vector<128x8xf32>
    %52 = arith.truncf %51 : vector<128x8xf32> to vector<128x8xbf16>
    %c5 = arith.constant 5 : index
    %c0_68 = arith.constant 0 : index
    %c0_69 = arith.constant 0 : index
    %53 = vector.load %arg2[%c5, %c0_68, %c0_69] : memref<9x8x8xbf16, #tpu.memory_space<vmem>>, vector<1x8x8xbf16>
    %54 = vector.shape_cast %53 : vector<1x8x8xbf16> to vector<8x8xbf16>
    %cst_70 = arith.constant dense<0.000000e+00> : vector<128x8xf32>
    %55 = tpu.matmul %52, %54, %cst_70 {dimension_numbers = #tpu.dot_dimension_numbers<[1], [0], [0], [1], [0, 0, 1, 1], [], []>} : vector<128x8xbf16>, vector<8x8xbf16>, vector<128x8xf32> -> vector<128x8xf32>
    %56 = arith.addf %49, %55 : vector<128x8xf32>
    %c0_71 = arith.constant 0 : index
    %c2_72 = arith.constant 2 : index
    %c0_73 = arith.constant 0 : index
    %c0_74 = arith.constant 0 : index
    %57 = vector.load %arg9[%c0_71, %c2_72, %c0_73, %c0_74] : memref<2x10x10x8xf32, #tpu.memory_space<vmem>>, vector<2x8x8x8xf32>
    %58 = vector.shape_cast %57 : vector<2x8x8x8xf32> to vector<128x8xf32>
    %59 = arith.truncf %58 : vector<128x8xf32> to vector<128x8xbf16>
    %c6 = arith.constant 6 : index
    %c0_75 = arith.constant 0 : index
    %c0_76 = arith.constant 0 : index
    %60 = vector.load %arg2[%c6, %c0_75, %c0_76] : memref<9x8x8xbf16, #tpu.memory_space<vmem>>, vector<1x8x8xbf16>
    %61 = vector.shape_cast %60 : vector<1x8x8xbf16> to vector<8x8xbf16>
    %cst_77 = arith.constant dense<0.000000e+00> : vector<128x8xf32>
    %62 = tpu.matmul %59, %61, %cst_77 {dimension_numbers = #tpu.dot_dimension_numbers<[1], [0], [0], [1], [0, 0, 1, 1], [], []>} : vector<128x8xbf16>, vector<8x8xbf16>, vector<128x8xf32> -> vector<128x8xf32>
    %63 = arith.addf %56, %62 : vector<128x8xf32>
    %c0_78 = arith.constant 0 : index
    %c2_79 = arith.constant 2 : index
    %c1_80 = arith.constant 1 : index
    %c0_81 = arith.constant 0 : index
    %64 = vector.load %arg9[%c0_78, %c2_79, %c1_80, %c0_81] : memref<2x10x10x8xf32, #tpu.memory_space<vmem>>, vector<2x8x8x8xf32>
    %65 = vector.shape_cast %64 : vector<2x8x8x8xf32> to vector<128x8xf32>
    %66 = arith.truncf %65 : vector<128x8xf32> to vector<128x8xbf16>
    %c7 = arith.constant 7 : index
    %c0_82 = arith.constant 0 : index
    %c0_83 = arith.constant 0 : index
    %67 = vector.load %arg2[%c7, %c0_82, %c0_83] : memref<9x8x8xbf16, #tpu.memory_space<vmem>>, vector<1x8x8xbf16>
    %68 = vector.shape_cast %67 : vector<1x8x8xbf16> to vector<8x8xbf16>
    %cst_84 = arith.constant dense<0.000000e+00> : vector<128x8xf32>
    %69 = tpu.matmul %66, %68, %cst_84 {dimension_numbers = #tpu.dot_dimension_numbers<[1], [0], [0], [1], [0, 0, 1, 1], [], []>} : vector<128x8xbf16>, vector<8x8xbf16>, vector<128x8xf32> -> vector<128x8xf32>
    %70 = arith.addf %63, %69 : vector<128x8xf32>
    %c0_85 = arith.constant 0 : index
    %c2_86 = arith.constant 2 : index
    %c2_87 = arith.constant 2 : index
    %c0_88 = arith.constant 0 : index
    %71 = vector.load %arg9[%c0_85, %c2_86, %c2_87, %c0_88] : memref<2x10x10x8xf32, #tpu.memory_space<vmem>>, vector<2x8x8x8xf32>
    %72 = vector.shape_cast %71 : vector<2x8x8x8xf32> to vector<128x8xf32>
    %73 = arith.truncf %72 : vector<128x8xf32> to vector<128x8xbf16>
    %c8 = arith.constant 8 : index
    %c0_89 = arith.constant 0 : index
    %c0_90 = arith.constant 0 : index
    %74 = vector.load %arg2[%c8, %c0_89, %c0_90] : memref<9x8x8xbf16, #tpu.memory_space<vmem>>, vector<1x8x8xbf16>
    %75 = vector.shape_cast %74 : vector<1x8x8xbf16> to vector<8x8xbf16>
    %cst_91 = arith.constant dense<0.000000e+00> : vector<128x8xf32>
    %76 = tpu.matmul %73, %75, %cst_91 {dimension_numbers = #tpu.dot_dimension_numbers<[1], [0], [0], [1], [0, 0, 1, 1], [], []>} : vector<128x8xbf16>, vector<8x8xbf16>, vector<128x8xf32> -> vector<128x8xf32>
    %77 = arith.addf %70, %76 : vector<128x8xf32>
    %c0_92 = arith.constant 0 : index
    %c0_93 = arith.constant 0 : index
    %78 = vector.load %arg3[%c0_92, %c0_93] : memref<1x8xf32, #tpu.memory_space<vmem>>, vector<1x8xf32>
    %c0_94 = arith.constant 0 : index
    %c0_95 = arith.constant 0 : index
    %79 = vector.load %arg4[%c0_94, %c0_95] : memref<1x8xf32, #tpu.memory_space<vmem>>, vector<1x8xf32>
    %cst_96 = arith.constant dense<0.000000e+00> : vector<8xf32>
    %80 = vector.multi_reduction <add>, %77, %cst_96 [0] : vector<128x8xf32> to vector<8xf32>
    %81 = vector.shape_cast %80 : vector<8xf32> to vector<1x8xf32>
    %cst_97 = arith.constant 7.812500e-03 : f32
    %82 = vector.broadcast %cst_97 : f32 to vector<1x8xf32>
    %83 = arith.mulf %81, %82 : vector<1x8xf32>
    %84 = arith.mulf %77, %77 : vector<128x8xf32>
    %cst_98 = arith.constant dense<0.000000e+00> : vector<8xf32>
    %85 = vector.multi_reduction <add>, %84, %cst_98 [0] : vector<128x8xf32> to vector<8xf32>
    %86 = vector.shape_cast %85 : vector<8xf32> to vector<1x8xf32>
    %cst_99 = arith.constant 7.812500e-03 : f32
    %87 = vector.broadcast %cst_99 : f32 to vector<1x8xf32>
    %88 = arith.mulf %86, %87 : vector<1x8xf32>
    %89 = arith.mulf %83, %83 : vector<1x8xf32>
    %90 = arith.subf %88, %89 : vector<1x8xf32>
    %cst_100 = arith.constant 9.99999974E-6 : f32
    %91 = vector.broadcast %cst_100 : f32 to vector<1x8xf32>
    %92 = arith.addf %90, %91 : vector<1x8xf32>
    %93 = math.rsqrt %92 : vector<1x8xf32>
    %94 = arith.mulf %78, %93 : vector<1x8xf32>
    %95 = arith.mulf %83, %94 : vector<1x8xf32>
    %96 = arith.subf %79, %95 : vector<1x8xf32>
    %97 = vector.broadcast %94 : vector<1x8xf32> to vector<128x8xf32>
    %98 = arith.mulf %77, %97 : vector<128x8xf32>
    %99 = vector.broadcast %96 : vector<1x8xf32> to vector<128x8xf32>
    %100 = arith.addf %98, %99 : vector<128x8xf32>
    %cst_101 = arith.constant 0.000000e+00 : f32
    %101 = vector.broadcast %cst_101 : f32 to vector<128x8xf32>
    %102 = arith.maximumf %100, %101 : vector<128x8xf32>
    %103 = vector.shape_cast %102 : vector<128x8xf32> to vector<2x8x8x8xf32>
    %c0_102 = arith.constant 0 : index
    %c1_103 = arith.constant 1 : index
    %c1_104 = arith.constant 1 : index
    %c0_105 = arith.constant 0 : index
    %104 = vector.load %arg9[%c0_102, %c1_103, %c1_104, %c0_105] : memref<2x10x10x8xf32, #tpu.memory_space<vmem>>, vector<2x8x8x8xf32>
    tpu.vector_store %arg9[%c0_102, %c1_103, %c1_104, %c0_105], %103 {strides = array<i32>} : memref<2x10x10x8xf32, #tpu.memory_space<vmem>>, vector<2x8x8x8xf32>,
    %cst_106 = arith.constant 0.000000e+00 : f32
    %105 = vector.broadcast %cst_106 : f32 to vector<128x8xf32>
    %c0_107 = arith.constant 0 : index
    %c0_108 = arith.constant 0 : index
    %c0_109 = arith.constant 0 : index
    %c0_110 = arith.constant 0 : index
    %106 = vector.load %arg9[%c0_107, %c0_108, %c0_109, %c0_110] : memref<2x10x10x8xf32, #tpu.memory_space<vmem>>, vector<2x8x8x8xf32>
    %107 = vector.shape_cast %106 : vector<2x8x8x8xf32> to vector<128x8xf32>
    %108 = arith.truncf %107 : vector<128x8xf32> to vector<128x8xbf16>
    %c0_111 = arith.constant 0 : index
    %c0_112 = arith.constant 0 : index
    %c0_113 = arith.constant 0 : index
    %109 = vector.load %arg5[%c0_111, %c0_112, %c0_113] : memref<9x8x8xbf16, #tpu.memory_space<vmem>>, vector<1x8x8xbf16>
    %110 = vector.shape_cast %109 : vector<1x8x8xbf16> to vector<8x8xbf16>
    %cst_114 = arith.constant dense<0.000000e+00> : vector<128x8xf32>
    %111 = tpu.matmul %108, %110, %cst_114 {dimension_numbers = #tpu.dot_dimension_numbers<[1], [0], [0], [1], [0, 0, 1, 1], [], []>} : vector<128x8xbf16>, vector<8x8xbf16>, vector<128x8xf32> -> vector<128x8xf32>
    %112 = arith.addf %105, %111 : vector<128x8xf32>
    %c0_115 = arith.constant 0 : index
    %c0_116 = arith.constant 0 : index
    %c1_117 = arith.constant 1 : index
    %c0_118 = arith.constant 0 : index
    %113 = vector.load %arg9[%c0_115, %c0_116, %c1_117, %c0_118] : memref<2x10x10x8xf32, #tpu.memory_space<vmem>>, vector<2x8x8x8xf32>
    %114 = vector.shape_cast %113 : vector<2x8x8x8xf32> to vector<128x8xf32>
    %115 = arith.truncf %114 : vector<128x8xf32> to vector<128x8xbf16>
    %c1_119 = arith.constant 1 : index
    %c0_120 = arith.constant 0 : index
    %c0_121 = arith.constant 0 : index
    %116 = vector.load %arg5[%c1_119, %c0_120, %c0_121] : memref<9x8x8xbf16, #tpu.memory_space<vmem>>, vector<1x8x8xbf16>
    %117 = vector.shape_cast %116 : vector<1x8x8xbf16> to vector<8x8xbf16>
    %cst_122 = arith.constant dense<0.000000e+00> : vector<128x8xf32>
    %118 = tpu.matmul %115, %117, %cst_122 {dimension_numbers = #tpu.dot_dimension_numbers<[1], [0], [0], [1], [0, 0, 1, 1], [], []>} : vector<128x8xbf16>, vector<8x8xbf16>, vector<128x8xf32> -> vector<128x8xf32>
    %119 = arith.addf %112, %118 : vector<128x8xf32>
    %c0_123 = arith.constant 0 : index
    %c0_124 = arith.constant 0 : index
    %c2_125 = arith.constant 2 : index
    %c0_126 = arith.constant 0 : index
    %120 = vector.load %arg9[%c0_123, %c0_124, %c2_125, %c0_126] : memref<2x10x10x8xf32, #tpu.memory_space<vmem>>, vector<2x8x8x8xf32>
    %121 = vector.shape_cast %120 : vector<2x8x8x8xf32> to vector<128x8xf32>
    %122 = arith.truncf %121 : vector<128x8xf32> to vector<128x8xbf16>
    %c2_127 = arith.constant 2 : index
    %c0_128 = arith.constant 0 : index
    %c0_129 = arith.constant 0 : index
    %123 = vector.load %arg5[%c2_127, %c0_128, %c0_129] : memref<9x8x8xbf16, #tpu.memory_space<vmem>>, vector<1x8x8xbf16>
    %124 = vector.shape_cast %123 : vector<1x8x8xbf16> to vector<8x8xbf16>
    %cst_130 = arith.constant dense<0.000000e+00> : vector<128x8xf32>
    %125 = tpu.matmul %122, %124, %cst_130 {dimension_numbers = #tpu.dot_dimension_numbers<[1], [0], [0], [1], [0, 0, 1, 1], [], []>} : vector<128x8xbf16>, vector<8x8xbf16>, vector<128x8xf32> -> vector<128x8xf32>
    %126 = arith.addf %119, %125 : vector<128x8xf32>
    %c0_131 = arith.constant 0 : index
    %c1_132 = arith.constant 1 : index
    %c0_133 = arith.constant 0 : index
    %c0_134 = arith.constant 0 : index
    %127 = vector.load %arg9[%c0_131, %c1_132, %c0_133, %c0_134] : memref<2x10x10x8xf32, #tpu.memory_space<vmem>>, vector<2x8x8x8xf32>
    %128 = vector.shape_cast %127 : vector<2x8x8x8xf32> to vector<128x8xf32>
    %129 = arith.truncf %128 : vector<128x8xf32> to vector<128x8xbf16>
    %c3_135 = arith.constant 3 : index
    %c0_136 = arith.constant 0 : index
    %c0_137 = arith.constant 0 : index
    %130 = vector.load %arg5[%c3_135, %c0_136, %c0_137] : memref<9x8x8xbf16, #tpu.memory_space<vmem>>, vector<1x8x8xbf16>
    %131 = vector.shape_cast %130 : vector<1x8x8xbf16> to vector<8x8xbf16>
    %cst_138 = arith.constant dense<0.000000e+00> : vector<128x8xf32>
    %132 = tpu.matmul %129, %131, %cst_138 {dimension_numbers = #tpu.dot_dimension_numbers<[1], [0], [0], [1], [0, 0, 1, 1], [], []>} : vector<128x8xbf16>, vector<8x8xbf16>, vector<128x8xf32> -> vector<128x8xf32>
    %133 = arith.addf %126, %132 : vector<128x8xf32>
    %c0_139 = arith.constant 0 : index
    %c1_140 = arith.constant 1 : index
    %c1_141 = arith.constant 1 : index
    %c0_142 = arith.constant 0 : index
    %134 = vector.load %arg9[%c0_139, %c1_140, %c1_141, %c0_142] : memref<2x10x10x8xf32, #tpu.memory_space<vmem>>, vector<2x8x8x8xf32>
    %135 = vector.shape_cast %134 : vector<2x8x8x8xf32> to vector<128x8xf32>
    %136 = arith.truncf %135 : vector<128x8xf32> to vector<128x8xbf16>
    %c4_143 = arith.constant 4 : index
    %c0_144 = arith.constant 0 : index
    %c0_145 = arith.constant 0 : index
    %137 = vector.load %arg5[%c4_143, %c0_144, %c0_145] : memref<9x8x8xbf16, #tpu.memory_space<vmem>>, vector<1x8x8xbf16>
    %138 = vector.shape_cast %137 : vector<1x8x8xbf16> to vector<8x8xbf16>
    %cst_146 = arith.constant dense<0.000000e+00> : vector<128x8xf32>
    %139 = tpu.matmul %136, %138, %cst_146 {dimension_numbers = #tpu.dot_dimension_numbers<[1], [0], [0], [1], [0, 0, 1, 1], [], []>} : vector<128x8xbf16>, vector<8x8xbf16>, vector<128x8xf32> -> vector<128x8xf32>
    %140 = arith.addf %133, %139 : vector<128x8xf32>
    %c0_147 = arith.constant 0 : index
    %c1_148 = arith.constant 1 : index
    %c2_149 = arith.constant 2 : index
    %c0_150 = arith.constant 0 : index
    %141 = vector.load %arg9[%c0_147, %c1_148, %c2_149, %c0_150] : memref<2x10x10x8xf32, #tpu.memory_space<vmem>>, vector<2x8x8x8xf32>
    %142 = vector.shape_cast %141 : vector<2x8x8x8xf32> to vector<128x8xf32>
    %143 = arith.truncf %142 : vector<128x8xf32> to vector<128x8xbf16>
    %c5_151 = arith.constant 5 : index
    %c0_152 = arith.constant 0 : index
    %c0_153 = arith.constant 0 : index
    %144 = vector.load %arg5[%c5_151, %c0_152, %c0_153] : memref<9x8x8xbf16, #tpu.memory_space<vmem>>, vector<1x8x8xbf16>
    %145 = vector.shape_cast %144 : vector<1x8x8xbf16> to vector<8x8xbf16>
    %cst_154 = arith.constant dense<0.000000e+00> : vector<128x8xf32>
    %146 = tpu.matmul %143, %145, %cst_154 {dimension_numbers = #tpu.dot_dimension_numbers<[1], [0], [0], [1], [0, 0, 1, 1], [], []>} : vector<128x8xbf16>, vector<8x8xbf16>, vector<128x8xf32> -> vector<128x8xf32>
    %147 = arith.addf %140, %146 : vector<128x8xf32>
    %c0_155 = arith.constant 0 : index
    %c2_156 = arith.constant 2 : index
    %c0_157 = arith.constant 0 : index
    %c0_158 = arith.constant 0 : index
    %148 = vector.load %arg9[%c0_155, %c2_156, %c0_157, %c0_158] : memref<2x10x10x8xf32, #tpu.memory_space<vmem>>, vector<2x8x8x8xf32>
    %149 = vector.shape_cast %148 : vector<2x8x8x8xf32> to vector<128x8xf32>
    %150 = arith.truncf %149 : vector<128x8xf32> to vector<128x8xbf16>
    %c6_159 = arith.constant 6 : index
    %c0_160 = arith.constant 0 : index
    %c0_161 = arith.constant 0 : index
    %151 = vector.load %arg5[%c6_159, %c0_160, %c0_161] : memref<9x8x8xbf16, #tpu.memory_space<vmem>>, vector<1x8x8xbf16>
    %152 = vector.shape_cast %151 : vector<1x8x8xbf16> to vector<8x8xbf16>
    %cst_162 = arith.constant dense<0.000000e+00> : vector<128x8xf32>
    %153 = tpu.matmul %150, %152, %cst_162 {dimension_numbers = #tpu.dot_dimension_numbers<[1], [0], [0], [1], [0, 0, 1, 1], [], []>} : vector<128x8xbf16>, vector<8x8xbf16>, vector<128x8xf32> -> vector<128x8xf32>
    %154 = arith.addf %147, %153 : vector<128x8xf32>
    %c0_163 = arith.constant 0 : index
    %c2_164 = arith.constant 2 : index
    %c1_165 = arith.constant 1 : index
    %c0_166 = arith.constant 0 : index
    %155 = vector.load %arg9[%c0_163, %c2_164, %c1_165, %c0_166] : memref<2x10x10x8xf32, #tpu.memory_space<vmem>>, vector<2x8x8x8xf32>
    %156 = vector.shape_cast %155 : vector<2x8x8x8xf32> to vector<128x8xf32>
    %157 = arith.truncf %156 : vector<128x8xf32> to vector<128x8xbf16>
    %c7_167 = arith.constant 7 : index
    %c0_168 = arith.constant 0 : index
    %c0_169 = arith.constant 0 : index
    %158 = vector.load %arg5[%c7_167, %c0_168, %c0_169] : memref<9x8x8xbf16, #tpu.memory_space<vmem>>, vector<1x8x8xbf16>
    %159 = vector.shape_cast %158 : vector<1x8x8xbf16> to vector<8x8xbf16>
    %cst_170 = arith.constant dense<0.000000e+00> : vector<128x8xf32>
    %160 = tpu.matmul %157, %159, %cst_170 {dimension_numbers = #tpu.dot_dimension_numbers<[1], [0], [0], [1], [0, 0, 1, 1], [], []>} : vector<128x8xbf16>, vector<8x8xbf16>, vector<128x8xf32> -> vector<128x8xf32>
    %161 = arith.addf %154, %160 : vector<128x8xf32>
    %c0_171 = arith.constant 0 : index
    %c2_172 = arith.constant 2 : index
    %c2_173 = arith.constant 2 : index
    %c0_174 = arith.constant 0 : index
    %162 = vector.load %arg9[%c0_171, %c2_172, %c2_173, %c0_174] : memref<2x10x10x8xf32, #tpu.memory_space<vmem>>, vector<2x8x8x8xf32>
    %163 = vector.shape_cast %162 : vector<2x8x8x8xf32> to vector<128x8xf32>
    %164 = arith.truncf %163 : vector<128x8xf32> to vector<128x8xbf16>
    %c8_175 = arith.constant 8 : index
    %c0_176 = arith.constant 0 : index
    %c0_177 = arith.constant 0 : index
    %165 = vector.load %arg5[%c8_175, %c0_176, %c0_177] : memref<9x8x8xbf16, #tpu.memory_space<vmem>>, vector<1x8x8xbf16>
    %166 = vector.shape_cast %165 : vector<1x8x8xbf16> to vector<8x8xbf16>
    %cst_178 = arith.constant dense<0.000000e+00> : vector<128x8xf32>
    %167 = tpu.matmul %164, %166, %cst_178 {dimension_numbers = #tpu.dot_dimension_numbers<[1], [0], [0], [1], [0, 0, 1, 1], [], []>} : vector<128x8xbf16>, vector<8x8xbf16>, vector<128x8xf32> -> vector<128x8xf32>
    %168 = arith.addf %161, %167 : vector<128x8xf32>
    %c0_179 = arith.constant 0 : index
    %c0_180 = arith.constant 0 : index
    %169 = vector.load %arg6[%c0_179, %c0_180] : memref<1x8xf32, #tpu.memory_space<vmem>>, vector<1x8xf32>
    %c0_181 = arith.constant 0 : index
    %c0_182 = arith.constant 0 : index
    %170 = vector.load %arg7[%c0_181, %c0_182] : memref<1x8xf32, #tpu.memory_space<vmem>>, vector<1x8xf32>
    %cst_183 = arith.constant dense<0.000000e+00> : vector<8xf32>
    %171 = vector.multi_reduction <add>, %168, %cst_183 [0] : vector<128x8xf32> to vector<8xf32>
    %172 = vector.shape_cast %171 : vector<8xf32> to vector<1x8xf32>
    %cst_184 = arith.constant 7.812500e-03 : f32
    %173 = vector.broadcast %cst_184 : f32 to vector<1x8xf32>
    %174 = arith.mulf %172, %173 : vector<1x8xf32>
    %175 = arith.mulf %168, %168 : vector<128x8xf32>
    %cst_185 = arith.constant dense<0.000000e+00> : vector<8xf32>
    %176 = vector.multi_reduction <add>, %175, %cst_185 [0] : vector<128x8xf32> to vector<8xf32>
    %177 = vector.shape_cast %176 : vector<8xf32> to vector<1x8xf32>
    %cst_186 = arith.constant 7.812500e-03 : f32
    %178 = vector.broadcast %cst_186 : f32 to vector<1x8xf32>
    %179 = arith.mulf %177, %178 : vector<1x8xf32>
    %180 = arith.mulf %174, %174 : vector<1x8xf32>
    %181 = arith.subf %179, %180 : vector<1x8xf32>
    %cst_187 = arith.constant 9.99999974E-6 : f32
    %182 = vector.broadcast %cst_187 : f32 to vector<1x8xf32>
    %183 = arith.addf %181, %182 : vector<1x8xf32>
    %184 = math.rsqrt %183 : vector<1x8xf32>
    %185 = arith.mulf %169, %184 : vector<1x8xf32>
    %186 = arith.mulf %174, %185 : vector<1x8xf32>
    %187 = arith.subf %170, %186 : vector<1x8xf32>
    %188 = vector.broadcast %185 : vector<1x8xf32> to vector<128x8xf32>
    %189 = arith.mulf %168, %188 : vector<128x8xf32>
    %190 = vector.broadcast %187 : vector<1x8xf32> to vector<128x8xf32>
    %191 = arith.addf %189, %190 : vector<128x8xf32>
    %cst_188 = arith.constant 0.000000e+00 : f32
    %192 = vector.broadcast %cst_188 : f32 to vector<128x8xf32>
    %193 = arith.maximumf %191, %192 : vector<128x8xf32>
    %c0_189 = arith.constant 0 : index
    %c0_190 = arith.constant 0 : index
    %194 = vector.load %arg8[%c0_189, %c0_190] : memref<128x8xf32, #tpu.memory_space<vmem>>, vector<128x8xf32>
    tpu.vector_store %arg8[%c0_189, %c0_190], %193 {strides = array<i32>} : memref<128x8xf32, #tpu.memory_space<vmem>>, vector<128x8xf32>,
    return
  }
  func.func @transform_0(%arg0: i32) -> (i32, i32, i32, i32, i32) {
    %c0_i32 = arith.constant 0 : i32
    %c0_i32_0 = arith.constant 0 : i32
    %c0_i32_1 = arith.constant 0 : i32
    %c0_i32_2 = arith.constant 0 : i32
    %c0_i32_3 = arith.constant 0 : i32
    %c0_i32_4 = arith.constant 0 : i32
    return %c0_i32, %c0_i32_0, %c0_i32_1, %c0_i32_2, %c0_i32_3 : i32, i32, i32, i32, i32
  }
  func.func @transform_1(%arg0: i32) -> (i32, i32, i32) {
    %c0_i32 = arith.constant 0 : i32
    %c0_i32_0 = arith.constant 0 : i32
    %c0_i32_1 = arith.constant 0 : i32
    %c0_i32_2 = arith.constant 0 : i32
    return %c0_i32, %c0_i32_0, %c0_i32_1 : i32, i32, i32
  }
  func.func @transform_2(%arg0: i32) -> (i32, i32) {
    %c0_i32 = arith.constant 0 : i32
    %c0_i32_0 = arith.constant 0 : i32
    %c0_i32_1 = arith.constant 0 : i32
    return %c0_i32, %c0_i32_0 : i32, i32
  }
  func.func @transform_3(%arg0: i32) -> (i32, i32) {
    %c0_i32 = arith.constant 0 : i32
    %c0_i32_0 = arith.constant 0 : i32
    %c0_i32_1 = arith.constant 0 : i32
    return %c0_i32, %c0_i32_0 : i32, i32
  }
  func.func @transform_4(%arg0: i32) -> (i32, i32, i32) {
    %c0_i32 = arith.constant 0 : i32
    %c0_i32_0 = arith.constant 0 : i32
    %c0_i32_1 = arith.constant 0 : i32
    %c0_i32_2 = arith.constant 0 : i32
    return %c0_i32, %c0_i32_0, %c0_i32_1 : i32, i32, i32
  }
  func.func @transform_5(%arg0: i32) -> (i32, i32) {
    %c0_i32 = arith.constant 0 : i32
    %c0_i32_0 = arith.constant 0 : i32
    %c0_i32_1 = arith.constant 0 : i32
    return %c0_i32, %c0_i32_0 : i32, i32
  }
  func.func @transform_6(%arg0: i32) -> (i32, i32) {
    %c0_i32 = arith.constant 0 : i32
    %c0_i32_0 = arith.constant 0 : i32
    %c0_i32_1 = arith.constant 0 : i32
    return %c0_i32, %c0_i32_0 : i32, i32
  }
  func.func @transform_7(%arg0: i32) -> (i32, i32) {
    %c0_i32 = arith.constant 0 : i32
    %c0_i32_0 = arith.constant 0 : i32
    %c0_i32_1 = arith.constant 0 : i32
    return %c0_i32, %c0_i32_0 : i32, i32
  }
}

</mosaic_0001>

<llo_original>
// kernel: tpu_custom_call.1
$region0: #{tpu_custom_call.1}
  #allocation0 [shape = 'u32[]', space=smem, size = 0x4, offset = 0x4, fixed_abs, tag = 'smem constant byte address 0x4 - core index']
  #allocation1 [shape = 'u32[144,128]{1,0:T(1,128)}', space=vmem, size = 0x12000, scoped, tag = 'internal scratch']
  #allocation2 [shape = 'f32[2,10,10,8]{3,2,1,0:T(8,128)}', space=vmem, size = 0x28000, scoped, tag = 'scratch operand']
  %s0 = inlined_call_operand.vmem [shape: f32[4,2,8,8,4], index: 0, kind: input, shape index: {}]
  %s1 = inlined_call_operand.vmem [shape: bf16[9,8,8], index: 1, kind: input, shape index: {}]
  %s2 = inlined_call_operand.vmem [shape: f32[1,8], index: 2, kind: input, shape index: {}]
  %s3 = inlined_call_operand.vmem [shape: f32[1,8], index: 3, kind: input, shape index: {}]
  %s4 = inlined_call_operand.vmem [shape: bf16[9,8,8], index: 4, kind: input, shape index: {}]
  %s5 = inlined_call_operand.vmem [shape: f32[1,8], index: 5, kind: input, shape index: {}]
  %s6 = inlined_call_operand.vmem [shape: f32[1,8], index: 6, kind: input, shape index: {}]
  %s7 = inlined_call_operand.vmem [shape: f32[128,8], index: 7, kind: output, shape index: {}]
  %s8 = sld [smem:[#allocation0]]
  $region38: #{tpu_custom_call.1} parent=0
    _
  %s10 = ssub.s32 1, %s8
  %s11 = scalar_select 0, %s10, %s8
  // Predicated region
  $region2: #{tpu_custom_call.1} parent=0 // pred_check
    _
  $region3: #{tpu_custom_call.1} parent=0 // pred_check_branch
    %13 = sbr.rel (0) target = $region5
  $region4: #{tpu_custom_call.1} parent=0 // pred_region
    _
  $region5: #{tpu_custom_call.1} parent=0 // pred_fallthru
    _
  // Predicated region
  $region6: #{tpu_custom_call.1} parent=0 // pred_check
    _
  $region7: #{tpu_custom_call.1} parent=0 // pred_check_branch
    %15 = sbr.rel (0) target = $region9
  $region8: #{tpu_custom_call.1} parent=0 // pred_region
    _
  $region9: #{tpu_custom_call.1} parent=0 // pred_fallthru
    _
  // Predicated region
  $region10: #{tpu_custom_call.1} parent=0 // pred_check
    _
  $region11: #{tpu_custom_call.1} parent=0 // pred_check_branch
    %17 = sbr.rel (0) target = $region13
  $region12: #{tpu_custom_call.1} parent=0 // pred_region
    _
  $region13: #{tpu_custom_call.1} parent=0 // pred_fallthru
    _
  // Predicated region
  $region14: #{tpu_custom_call.1} parent=0 // pred_check
    _
  $region15: #{tpu_custom_call.1} parent=0 // pred_check_branch
    %19 = sbr.rel (0) target = $region17
  $region16: #{tpu_custom_call.1} parent=0 // pred_region
    _
  $region17: #{tpu_custom_call.1} parent=0 // pred_fallthru
    _
  // Predicated region
  $region18: #{tpu_custom_call.1} parent=0 // pred_check
    _
  $region19: #{tpu_custom_call.1} parent=0 // pred_check_branch
    %21 = sbr.rel (0) target = $region21
  $region20: #{tpu_custom_call.1} parent=0 // pred_region
    _
  $region21: #{tpu_custom_call.1} parent=0 // pred_fallthru
    _
  // Predicated region
  $region22: #{tpu_custom_call.1} parent=0 // pred_check
    _
  $region23: #{tpu_custom_call.1} parent=0 // pred_check_branch
    %23 = sbr.rel (0) target = $region25
  $region24: #{tpu_custom_call.1} parent=0 // pred_region
    _
  $region25: #{tpu_custom_call.1} parent=0 // pred_fallthru
    _
  // Predicated region
  $region26: #{tpu_custom_call.1} parent=0 // pred_check
    _
  $region27: #{tpu_custom_call.1} parent=0 // pred_check_branch
    %25 = sbr.rel (0) target = $region29
  $region28: #{tpu_custom_call.1} parent=0 // pred_region
    _
  $region29: #{tpu_custom_call.1} parent=0 // pred_fallthru
    _
  %vm27 = vcmask 64512
  %28 = vst.msk [vmem:[#allocation2] sm:$0xff] %vm27, 0.0
  %vm29 = vcmask 58368
  %30 = vst.msk [vmem:[#allocation2 + $0x8] sm:$0x3] %vm29, 0.0
  %31 = vst.msk [vmem:[#allocation2 + $0x10] sm:$0xff] %vm27, 0.0
  %32 = vst.msk [vmem:[#allocation2 + $0x18] sm:$0x3] %vm29, 0.0
  %33 = vst.msk [vmem:[#allocation2 + $0x20] sm:$0xff] %vm27, 0.0
  %34 = vst.msk [vmem:[#allocation2 + $0x28] sm:$0x3] %vm29, 0.0
  %35 = vst.msk [vmem:[#allocation2 + $0x30] sm:$0xff] %vm27, 0.0
  %36 = vst.msk [vmem:[#allocation2 + $0x38] sm:$0x3] %vm29, 0.0
  %37 = vst.msk [vmem:[#allocation2 + $0x40] sm:$0xff] %vm27, 0.0
  %38 = vst.msk [vmem:[#allocation2 + $0x48] sm:$0x3] %vm29, 0.0
  %39 = vst.msk [vmem:[#allocation2 + $0x50] sm:$0xff] %vm27, 0.0
  %40 = vst.msk [vmem:[#allocation2 + $0x58] sm:$0x3] %vm29, 0.0
  %41 = vst.msk [vmem:[#allocation2 + $0x60] sm:$0xff] %vm27, 0.0
  %42 = vst.msk [vmem:[#allocation2 + $0x68] sm:$0x3] %vm29, 0.0
  %43 = vst.msk [vmem:[#allocation2 + $0x70] sm:$0xff] %vm27, 0.0
  %44 = vst.msk [vmem:[#allocation2 + $0x78] sm:$0x3] %vm29, 0.0
  %45 = vst.msk [vmem:[#allocation2 + $0x80] sm:$0xff] %vm27, 0.0
  %46 = vst.msk [vmem:[#allocation2 + $0x88] sm:$0x3] %vm29, 0.0
  %47 = vst.msk [vmem:[#allocation2 + $0x90] sm:$0xff] %vm27, 0.0
  %48 = vst.msk [vmem:[#allocation2 + $0x98] sm:$0x3] %vm29, 0.0
  %49 = vst.msk [vmem:[#allocation2 + $0xa0] sm:$0xff] %vm27, 0.0
  %50 = vst.msk [vmem:[#allocation2 + $0xa8] sm:$0x3] %vm29, 0.0
  %51 = vst.msk [vmem:[#allocation2 + $0xb0] sm:$0xff] %vm27, 0.0
  %52 = vst.msk [vmem:[#allocation2 + $0xb8] sm:$0x3] %vm29, 0.0
  %53 = vst.msk [vmem:[#allocation2 + $0xc0] sm:$0xff] %vm27, 0.0
  %54 = vst.msk [vmem:[#allocation2 + $0xc8] sm:$0x3] %vm29, 0.0
  %55 = vst.msk [vmem:[#allocation2 + $0xd0] sm:$0xff] %vm27, 0.0
  %56 = vst.msk [vmem:[#allocation2 + $0xd8] sm:$0x3] %vm29, 0.0
  %57 = vst.msk [vmem:[#allocation2 + $0xe0] sm:$0xff] %vm27, 0.0
  %58 = vst.msk [vmem:[#allocation2 + $0xe8] sm:$0x3] %vm29, 0.0
  %59 = vst.msk [vmem:[#allocation2 + $0xf0] sm:$0xff] %vm27, 0.0
  %60 = vst.msk [vmem:[#allocation2 + $0xf8] sm:$0x3] %vm29, 0.0
  %61 = vst.msk [vmem:[#allocation2 + $0x100] sm:$0xff] %vm27, 0.0
  %62 = vst.msk [vmem:[#allocation2 + $0x108] sm:$0x3] %vm29, 0.0
  %63 = vst.msk [vmem:[#allocation2 + $0x110] sm:$0xff] %vm27, 0.0
  %64 = vst.msk [vmem:[#allocation2 + $0x118] sm:$0x3] %vm29, 0.0
  %65 = vst.msk [vmem:[#allocation2 + $0x120] sm:$0xff] %vm27, 0.0
  %66 = vst.msk [vmem:[#allocation2 + $0x128] sm:$0x3] %vm29, 0.0
  %67 = vst.msk [vmem:[#allocation2 + $0x130] sm:$0xff] %vm27, 0.0
  %68 = vst.msk [vmem:[#allocation2 + $0x138] sm:$0x3] %vm29, 0.0
  %v69 = vld [vmem:[%s0] sm:$0xff]
  %v70 = vld [vmem:[%s0 + $0x8] sm:$0xff]
  %v71 = vld [vmem:[%s0 + $0x10] sm:$0xff]
  %v72 = vld [vmem:[%s0 + $0x18] sm:$0xff]
  %v73 = vld [vmem:[%s0 + $0x20] sm:$0xff]
  %v74 = vld [vmem:[%s0 + $0x28] sm:$0xff]
  %v75 = vld [vmem:[%s0 + $0x30] sm:$0xff]
  %v76 = vld [vmem:[%s0 + $0x38] sm:$0xff]
  %v77 = vld [vmem:[%s0 + $0x40] sm:$0xff]
  %v78 = vld [vmem:[%s0 + $0x48] sm:$0xff]
  %v79 = vld [vmem:[%s0 + $0x50] sm:$0xff]
  %v80 = vld [vmem:[%s0 + $0x58] sm:$0xff]
  %v81 = vld [vmem:[%s0 + $0x60] sm:$0xff]
  %v82 = vld [vmem:[%s0 + $0x68] sm:$0xff]
  %v83 = vld [vmem:[%s0 + $0x70] sm:$0xff]
  %v84 = vld [vmem:[%s0 + $0x78] sm:$0xff]
  %s85 = scalar_lea.vmem %s0, 128
  %v86 = vld [vmem:[%s85] sm:$0xff]
  %v87 = vld [vmem:[%s85 + $0x8] sm:$0xff]
  %v88 = vld [vmem:[%s85 + $0x10] sm:$0xff]
  %v89 = vld [vmem:[%s85 + $0x18] sm:$0xff]
  %v90 = vld [vmem:[%s85 + $0x20] sm:$0xff]
  %v91 = vld [vmem:[%s85 + $0x28] sm:$0xff]
  %v92 = vld [vmem:[%s85 + $0x30] sm:$0xff]
  %v93 = vld [vmem:[%s85 + $0x38] sm:$0xff]
  %v94 = vld [vmem:[%s85 + $0x40] sm:$0xff]
  %v95 = vld [vmem:[%s85 + $0x48] sm:$0xff]
  %v96 = vld [vmem:[%s85 + $0x50] sm:$0xff]
  %v97 = vld [vmem:[%s85 + $0x58] sm:$0xff]
  %v98 = vld [vmem:[%s85 + $0x60] sm:$0xff]
  %v99 = vld [vmem:[%s85 + $0x68] sm:$0xff]
  %v100 = vld [vmem:[%s85 + $0x70] sm:$0xff]
  %v101 = vld [vmem:[%s85 + $0x78] sm:$0xff]
  %v102 = vmax.f32 %v69, %v86
  %v103 = vmax.f32 %v70, %v87
  %v104 = vmax.f32 %v71, %v88
  %v105 = vmax.f32 %v72, %v89
  %v106 = vmax.f32 %v73, %v90
  %v107 = vmax.f32 %v74, %v91
  %v108 = vmax.f32 %v75, %v92
  %v109 = vmax.f32 %v76, %v93
  %v110 = vmax.f32 %v77, %v94
  %v111 = vmax.f32 %v78, %v95
  %v112 = vmax.f32 %v79, %v96
  %v113 = vmax.f32 %v80, %v97
  %v114 = vmax.f32 %v81, %v98
  %v115 = vmax.f32 %v82, %v99
  %v116 = vmax.f32 %v83, %v100
  %v117 = vmax.f32 %v84, %v101
  %s118 = scalar_lea.vmem %s0, 256
  %v119 = vld [vmem:[%s118] sm:$0xff]
  %v120 = vld [vmem:[%s118 + $0x8] sm:$0xff]
  %v121 = vld [vmem:[%s118 + $0x10] sm:$0xff]
  %v122 = vld [vmem:[%s118 + $0x18] sm:$0xff]
  %v123 = vld [vmem:[%s118 + $0x20] sm:$0xff]
  %v124 = vld [vmem:[%s118 + $0x28] sm:$0xff]
  %v125 = vld [vmem:[%s118 + $0x30] sm:$0xff]
  %v126 = vld [vmem:[%s118 + $0x38] sm:$0xff]
  %v127 = vld [vmem:[%s118 + $0x40] sm:$0xff]
  %v128 = vld [vmem:[%s118 + $0x48] sm:$0xff]
  %v129 = vld [vmem:[%s118 + $0x50] sm:$0xff]
  %v130 = vld [vmem:[%s118 + $0x58] sm:$0xff]
  %v131 = vld [vmem:[%s118 + $0x60] sm:$0xff]
  %v132 = vld [vmem:[%s118 + $0x68] sm:$0xff]
  %v133 = vld [vmem:[%s118 + $0x70] sm:$0xff]
  %v134 = vld [vmem:[%s118 + $0x78] sm:$0xff]
  %s135 = scalar_lea.vmem %s0, 384
  %v136 = vld [vmem:[%s135] sm:$0xff]
  %v137 = vld [vmem:[%s135 + $0x8] sm:$0xff]
  %v138 = vld [vmem:[%s135 + $0x10] sm:$0xff]
  %v139 = vld [vmem:[%s135 + $0x18] sm:$0xff]
  %v140 = vld [vmem:[%s135 + $0x20] sm:$0xff]
  %v141 = vld [vmem:[%s135 + $0x28] sm:$0xff]
  %v142 = vld [vmem:[%s135 + $0x30] sm:$0xff]
  %v143 = vld [vmem:[%s135 + $0x38] sm:$0xff]
  %v144 = vld [vmem:[%s135 + $0x40] sm:$0xff]
  %v145 = vld [vmem:[%s135 + $0x48] sm:$0xff]
  %v146 = vld [vmem:[%s135 + $0x50] sm:$0xff]
  %v147 = vld [vmem:[%s135 + $0x58] sm:$0xff]
  %v148 = vld [vmem:[%s135 + $0x60] sm:$0xff]
  %v149 = vld [vmem:[%s135 + $0x68] sm:$0xff]
  %v150 = vld [vmem:[%s135 + $0x70] sm:$0xff]
  %v151 = vld [vmem:[%s135 + $0x78] sm:$0xff]
  %v152 = vmax.f32 %v119, %v136
  %v153 = vmax.f32 %v120, %v137
  %v154 = vmax.f32 %v121, %v138
  %v155 = vmax.f32 %v122, %v139
  %v156 = vmax.f32 %v123, %v140
  %v157 = vmax.f32 %v124, %v141
  %v158 = vmax.f32 %v125, %v142
  %v159 = vmax.f32 %v126, %v143
  %v160 = vmax.f32 %v127, %v144
  %v161 = vmax.f32 %v128, %v145
  %v162 = vmax.f32 %v129, %v146
  %v163 = vmax.f32 %v130, %v147
  %v164 = vmax.f32 %v131, %v148
  %v165 = vmax.f32 %v132, %v149
  %v166 = vmax.f32 %v133, %v150
  %v167 = vmax.f32 %v134, %v151
  %v168 = vmax.f32 %v102, %v152
  %v169 = vmax.f32 %v103, %v153
  %v170 = vmax.f32 %v104, %v154
  %v171 = vmax.f32 %v105, %v155
  %v172 = vmax.f32 %v106, %v156
  %v173 = vmax.f32 %v107, %v157
  %v174 = vmax.f32 %v108, %v158
  %v175 = vmax.f32 %v109, %v159
  %v176 = vmax.f32 %v110, %v160
  %v177 = vmax.f32 %v111, %v161
  %v178 = vmax.f32 %v112, %v162
  %v179 = vmax.f32 %v113, %v163
  %v180 = vmax.f32 %v114, %v164
  %v181 = vmax.f32 %v115, %v165
  %v182 = vmax.f32 %v116, %v166
  %v183 = vmax.f32 %v117, %v167
  %s184 = scalar_lea.vmem [#allocation2], 16
  %vm185 = vcmask 31744
  %186 = vst.msk [vmem:[%s184 + $0x1] sm:$0xff] %vm185, %v168
  %187 = vst.msk [vmem:[%s184 + $0x11] sm:$0xff] %vm185, %v169
  %188 = vst.msk [vmem:[%s184 + $0x21] sm:$0xff] %vm185, %v170
  %189 = vst.msk [vmem:[%s184 + $0x31] sm:$0xff] %vm185, %v171
  %190 = vst.msk [vmem:[%s184 + $0x41] sm:$0xff] %vm185, %v172
  %191 = vst.msk [vmem:[%s184 + $0x51] sm:$0xff] %vm185, %v173
  %192 = vst.msk [vmem:[%s184 + $0x61] sm:$0xff] %vm185, %v174
  %193 = vst.msk [vmem:[%s184 + $0x71] sm:$0xff] %vm185, %v175
  %194 = vst.msk [vmem:[%s184 + $0xa1] sm:$0xff] %vm185, %v176
  %195 = vst.msk [vmem:[%s184 + $0xb1] sm:$0xff] %vm185, %v177
  %196 = vst.msk [vmem:[%s184 + $0xc1] sm:$0xff] %vm185, %v178
  %197 = vst.msk [vmem:[%s184 + $0xd1] sm:$0xff] %vm185, %v179
  %198 = vst.msk [vmem:[%s184 + $0xe1] sm:$0xff] %vm185, %v180
  %199 = vst.msk [vmem:[%s184 + $0xf1] sm:$0xff] %vm185, %v181
  %200 = vst.msk [vmem:[%s184 + $0x101] sm:$0xff] %vm185, %v182
  %201 = vst.msk [vmem:[%s184 + $0x111] sm:$0xff] %vm185, %v183
  %v202 = vld [vmem:[#allocation2] sm:$0xff]
  %v203 = vld [vmem:[#allocation2 + $0x10] sm:$0xff]
  %v204 = vld [vmem:[#allocation2 + $0x20] sm:$0xff]
  %v205 = vld [vmem:[#allocation2 + $0x30] sm:$0xff]
  %v206 = vld [vmem:[#allocation2 + $0x40] sm:$0xff]
  %v207 = vld [vmem:[#allocation2 + $0x50] sm:$0xff]
  %v208 = vld [vmem:[#allocation2 + $0x60] sm:$0xff]
  %v209 = vld [vmem:[#allocation2 + $0x70] sm:$0xff]
  %v210 = vld [vmem:[#allocation2 + $0xa0] sm:$0xff]
  %v211 = vld [vmem:[#allocation2 + $0xb0] sm:$0xff]
  %v212 = vld [vmem:[#allocation2 + $0xc0] sm:$0xff]
  %v213 = vld [vmem:[#allocation2 + $0xd0] sm:$0xff]
  %v214 = vld [vmem:[#allocation2 + $0xe0] sm:$0xff]
  %v215 = vld [vmem:[#allocation2 + $0xf0] sm:$0xff]
  %v216 = vld [vmem:[#allocation2 + $0x100] sm:$0xff]
  %v217 = vld [vmem:[#allocation2 + $0x110] sm:$0xff]
  %v218 = vpack.c.bf16 %v203, %v202
  %v219 = vpack.c.bf16 %v205, %v204
  %v220 = vpack.c.bf16 %v207, %v206
  %v221 = vpack.c.bf16 %v209, %v208
  %v222 = vpack.c.bf16 %v211, %v210
  %v223 = vpack.c.bf16 %v213, %v212
  %v224 = vpack.c.bf16 %v215, %v214
  %v225 = vpack.c.bf16 %v217, %v216
  %v226 = vld [vmem:[%s1] sm:$0xf]
  %v227 = vld [vmem:[#allocation2 + $0x1] sm:$0xff]
  %v228 = vld [vmem:[#allocation2 + $0x11] sm:$0xff]
  %v229 = vld [vmem:[#allocation2 + $0x21] sm:$0xff]
  %v230 = vld [vmem:[#allocation2 + $0x31] sm:$0xff]
  %v231 = vld [vmem:[#allocation2 + $0x41] sm:$0xff]
  %v232 = vld [vmem:[#allocation2 + $0x51] sm:$0xff]
  %v233 = vld [vmem:[#allocation2 + $0x61] sm:$0xff]
  %v234 = vld [vmem:[#allocation2 + $0x71] sm:$0xff]
  %v235 = vld [vmem:[#allocation2 + $0xa1] sm:$0xff]
  %v236 = vld [vmem:[#allocation2 + $0xb1] sm:$0xff]
  %v237 = vld [vmem:[#allocation2 + $0xc1] sm:$0xff]
  %v238 = vld [vmem:[#allocation2 + $0xd1] sm:$0xff]
  %v239 = vld [vmem:[#allocation2 + $0xe1] sm:$0xff]
  %v240 = vld [vmem:[#allocation2 + $0xf1] sm:$0xff]
  %v241 = vld [vmem:[#allocation2 + $0x101] sm:$0xff]
  %v242 = vld [vmem:[#allocation2 + $0x111] sm:$0xff]
  %v243 = vpack.c.bf16 %v228, %v227
  %v244 = vpack.c.bf16 %v230, %v229
  %v245 = vpack.c.bf16 %v232, %v231
  %v246 = vpack.c.bf16 %v234, %v233
  %v247 = vpack.c.bf16 %v236, %v235
  %v248 = vpack.c.bf16 %v238, %v237
  %v249 = vpack.c.bf16 %v240, %v239
  %v250 = vpack.c.bf16 %v242, %v241
  %s251 = scalar_lea.vmem %s1, 4
  %v252 = vld [vmem:[%s251] sm:$0xf]
  %v254 = vsel %vm27, %v243, 0
  %v257 = vsel %vm27, %v244, 0
  %v260 = vsel %vm27, %v245, 0
  %v263 = vsel %vm27, %v246, 0
  %v266 = vsel %vm27, %v247, 0
  %v269 = vsel %vm27, %v248, 0
  %v272 = vsel %vm27, %v249, 0
  %v275 = vsel %vm27, %v250, 0
  %vm277 = vcmask 1043456
  %v279 = vsel %vm277, %v252, 0
  %281 = vmatprep.subr.bf16.mxu0 0
  %282 = vmatpush1.bf16.msra.mxu0 %v279
  %283 = vmatprep.subr.bf16.mxu0 0
  %284 = vmatpush1.bf16.msra.mxu0 0
  %285 = vmatprep.subr.bf16.mxu0 0
  %286 = vmatpush1.bf16.msra.mxu0 0
  %287 = vmatprep.subr.bf16.mxu0 0
  %288 = vmatpush1.bf16.msra.mxu0 0
  %289 = vmatprep.subr.bf16.mxu0 0
  %290 = vmatpush1.bf16.msra.mxu0 0
  %291 = vmatprep.subr.bf16.mxu0 0
  %292 = vmatpush1.bf16.msra.mxu0 0
  %293 = vmatprep.subr.bf16.mxu0 0
  %294 = vmatpush1.bf16.msra.mxu0 0
  %295 = vmatprep.subr.bf16.mxu0 0
  %296 = vmatpush1.bf16.msra.mxu0 0
  %297 = vmatprep.subr.bf16.mxu0 0
  %298 = vmatpush1.bf16.msra.mxu0 0
  %299 = vmatprep.subr.bf16.mxu0 0
  %300 = vmatpush1.bf16.msra.mxu0 0
  %301 = vmatprep.subr.bf16.mxu0 0
  %302 = vmatpush1.bf16.msra.mxu0 0
  %303 = vmatprep.subr.bf16.mxu0 0
  %304 = vmatpush1.bf16.msra.mxu0 0
  %305 = vmatprep.subr.bf16.mxu0 0
  %306 = vmatpush1.bf16.msra.mxu0 0
  %307 = vmatprep.subr.bf16.mxu0 0
  %308 = vmatpush1.bf16.msra.mxu0 0
  %309 = vmatprep.subr.bf16.mxu0 0
  %310 = vmatpush1.bf16.msra.mxu0 0
  %311 = vmatprep.subr.bf16.mxu0 0
  %312 = vmatpush1.bf16.msra.mxu0 0
  %313 = vmatprep.mubr.bf16.mxu0 0
  %314 = vmatmul.mubr.bf16.gmra.mrb[0].mxu0 %v254
  %v315 = vpop.f32.mrb[0].mxu0
  %v316 = vadd.f32 0.0, %v315
  %v317 = vpop.f32.mrb[0].mxu0
  %v318 = vpop.f32.mrb[0].mxu0
  %v319 = vadd.f32 0.0, %v318
  %v320 = vpop.f32.mrb[0].mxu0
  %321 = vmatprep.mubr.bf16.mxu0 0
  %322 = vmatmul.mubr.bf16.gmra.mrb[0].mxu0 %v257
  %v323 = vpop.f32.mrb[0].mxu0
  %v324 = vadd.f32 0.0, %v323
  %v325 = vpop.f32.mrb[0].mxu0
  %v326 = vpop.f32.mrb[0].mxu0
  %v327 = vadd.f32 0.0, %v326
  %v328 = vpop.f32.mrb[0].mxu0
  %329 = vmatprep.mubr.bf16.mxu0 0
  %330 = vmatmul.mubr.bf16.gmra.mrb[0].mxu0 %v260
  %v331 = vpop.f32.mrb[0].mxu0
  %v332 = vadd.f32 0.0, %v331
  %v333 = vpop.f32.mrb[0].mxu0
  %v334 = vpop.f32.mrb[0].mxu0
  %v335 = vadd.f32 0.0, %v334
  %v336 = vpop.f32.mrb[0].mxu0
  %337 = vmatprep.mubr.bf16.mxu0 0
  %338 = vmatmul.mubr.bf16.gmra.mrb[0].mxu0 %v263
  %v339 = vpop.f32.mrb[0].mxu0
  %v340 = vadd.f32 0.0, %v339
  %v341 = vpop.f32.mrb[0].mxu0
  %v342 = vpop.f32.mrb[0].mxu0
  %v343 = vadd.f32 0.0, %v342
  %v344 = vpop.f32.mrb[0].mxu0
  %345 = vmatprep.mubr.bf16.mxu0 0
  %346 = vmatmul.mubr.bf16.gmra.mrb[0].mxu0 %v266
  %v347 = vpop.f32.mrb[0].mxu0
  %v348 = vadd.f32 0.0, %v347
  %v349 = vpop.f32.mrb[0].mxu0
  %v350 = vpop.f32.mrb[0].mxu0
  %v351 = vadd.f32 0.0, %v350
  %v352 = vpop.f32.mrb[0].mxu0
  %353 = vmatprep.mubr.bf16.mxu0 0
  %354 = vmatmul.mubr.bf16.gmra.mrb[0].mxu0 %v269
  %v355 = vpop.f32.mrb[0].mxu0
  %v356 = vadd.f32 0.0, %v355
  %v357 = vpop.f32.mrb[0].mxu0
  %v358 = vpop.f32.mrb[0].mxu0
  %v359 = vadd.f32 0.0, %v358
  %v360 = vpop.f32.mrb[0].mxu0
  %361 = vmatprep.mubr.bf16.mxu0 0
  %362 = vmatmul.mubr.bf16.gmra.mrb[0].mxu0 %v272
  %v363 = vpop.f32.mrb[0].mxu0
  %v364 = vadd.f32 0.0, %v363
  %v365 = vpop.f32.mrb[0].mxu0
  %v366 = vpop.f32.mrb[0].mxu0
  %v367 = vadd.f32 0.0, %v366
  %v368 = vpop.f32.mrb[0].mxu0
  %369 = vmatprep.mubr.bf16.mxu0 0
  %370 = vmatmul.mubr.bf16.gmra.mrb[0].mxu0 %v275
  %v371 = vpop.f32.mrb[0].mxu0
  %v372 = vadd.f32 0.0, %v371
  %v373 = vpop.f32.mrb[0].mxu0
  %v374 = vpop.f32.mrb[0].mxu0
  %v375 = vadd.f32 0.0, %v374
  %v376 = vpop.f32.mrb[0].mxu0
  %377 = vdwg.mxu0
  %v379 = vsel %vm27, %v218, 0
  %v382 = vsel %vm27, %v219, 0
  %v385 = vsel %vm27, %v220, 0
  %v388 = vsel %vm27, %v221, 0
  %v391 = vsel %vm27, %v222, 0
  %v394 = vsel %vm27, %v223, 0
  %v397 = vsel %vm27, %v224, 0
  %v400 = vsel %vm27, %v225, 0
  %v403 = vsel %vm277, %v226, 0
  %405 = vmatprep.subr.bf16.mxu0 0
  %406 = vmatpush1.bf16.msra.mxu0 %v403
  %407 = vmatprep.subr.bf16.mxu0 0
  %408 = vmatpush1.bf16.msra.mxu0 0
  %409 = vmatprep.subr.bf16.mxu0 0
  %410 = vmatpush1.bf16.msra.mxu0 0
  %411 = vmatprep.subr.bf16.mxu0 0
  %412 = vmatpush1.bf16.msra.mxu0 0
  %413 = vmatprep.subr.bf16.mxu0 0
  %414 = vmatpush1.bf16.msra.mxu0 0
  %415 = vmatprep.subr.bf16.mxu0 0
  %416 = vmatpush1.bf16.msra.mxu0 0
  %417 = vmatprep.subr.bf16.mxu0 0
  %418 = vmatpush1.bf16.msra.mxu0 0
  %419 = vmatprep.subr.bf16.mxu0 0
  %420 = vmatpush1.bf16.msra.mxu0 0
  %421 = vmatprep.subr.bf16.mxu0 0
  %422 = vmatpush1.bf16.msra.mxu0 0
  %423 = vmatprep.subr.bf16.mxu0 0
  %424 = vmatpush1.bf16.msra.mxu0 0
  %425 = vmatprep.subr.bf16.mxu0 0
  %426 = vmatpush1.bf16.msra.mxu0 0
  %427 = vmatprep.subr.bf16.mxu0 0
  %428 = vmatpush1.bf16.msra.mxu0 0
  %429 = vmatprep.subr.bf16.mxu0 0
  %430 = vmatpush1.bf16.msra.mxu0 0
  %431 = vmatprep.subr.bf16.mxu0 0
  %432 = vmatpush1.bf16.msra.mxu0 0
  %433 = vmatprep.subr.bf16.mxu0 0
  %434 = vmatpush1.bf16.msra.mxu0 0
  %435 = vmatprep.subr.bf16.mxu0 0
  %436 = vmatpush1.bf16.msra.mxu0 0
  %437 = vmatprep.mubr.bf16.mxu0 0
  %438 = vmatmul.mubr.bf16.gmra.mrb[0].mxu0 %v379
  %v439 = vpop.f32.mrb[0].mxu0
  %v440 = vadd.f32 %v316, %v439
  %v441 = vpop.f32.mrb[0].mxu0
  %v442 = vpop.f32.mrb[0].mxu0
  %v443 = vadd.f32 %v319, %v442
  %v444 = vpop.f32.mrb[0].mxu0
  %445 = vmatprep.mubr.bf16.mxu0 0
  %446 = vmatmul.mubr.bf16.gmra.mrb[0].mxu0 %v382
  %v447 = vpop.f32.mrb[0].mxu0
  %v448 = vadd.f32 %v324, %v447
  %v449 = vpop.f32.mrb[0].mxu0
  %v450 = vpop.f32.mrb[0].mxu0
  %v451 = vadd.f32 %v327, %v450
  %v452 = vpop.f32.mrb[0].mxu0
  %453 = vmatprep.mubr.bf16.mxu0 0
  %454 = vmatmul.mubr.bf16.gmra.mrb[0].mxu0 %v385
  %v455 = vpop.f32.mrb[0].mxu0
  %v456 = vadd.f32 %v332, %v455
  %v457 = vpop.f32.mrb[0].mxu0
  %v458 = vpop.f32.mrb[0].mxu0
  %v459 = vadd.f32 %v335, %v458
  %v460 = vpop.f32.mrb[0].mxu0
  %461 = vmatprep.mubr.bf16.mxu0 0
  %462 = vmatmul.mubr.bf16.gmra.mrb[0].mxu0 %v388
  %v463 = vpop.f32.mrb[0].mxu0
  %v464 = vadd.f32 %v340, %v463
  %v465 = vpop.f32.mrb[0].mxu0
  %v466 = vpop.f32.mrb[0].mxu0
  %v467 = vadd.f32 %v343, %v466
  %v468 = vpop.f32.mrb[0].mxu0
  %469 = vmatprep.mubr.bf16.mxu0 0
  %470 = vmatmul.mubr.bf16.gmra.mrb[0].mxu0 %v391
  %v471 = vpop.f32.mrb[0].mxu0
  %v472 = vadd.f32 %v348, %v471
  %v473 = vpop.f32.mrb[0].mxu0
  %v474 = vpop.f32.mrb[0].mxu0
  %v475 = vadd.f32 %v351, %v474
  %v476 = vpop.f32.mrb[0].mxu0
  %477 = vmatprep.mubr.bf16.mxu0 0
  %478 = vmatmul.mubr.bf16.gmra.mrb[0].mxu0 %v394
  %v479 = vpop.f32.mrb[0].mxu0
  %v480 = vadd.f32 %v356, %v479
  %v481 = vpop.f32.mrb[0].mxu0
  %v482 = vpop.f32.mrb[0].mxu0
  %v483 = vadd.f32 %v359, %v482
  %v484 = vpop.f32.mrb[0].mxu0
  %485 = vmatprep.mubr.bf16.mxu0 0
  %486 = vmatmul.mubr.bf16.gmra.mrb[0].mxu0 %v397
  %v487 = vpop.f32.mrb[0].mxu0
  %v488 = vadd.f32 %v364, %v487
  %v489 = vpop.f32.mrb[0].mxu0
  %v490 = vpop.f32.mrb[0].mxu0
  %v491 = vadd.f32 %v367, %v490
  %v492 = vpop.f32.mrb[0].mxu0
  %493 = vmatprep.mubr.bf16.mxu0 0
  %494 = vmatmul.mubr.bf16.gmra.mrb[0].mxu0 %v400
  %v495 = vpop.f32.mrb[0].mxu0
  %v496 = vadd.f32 %v372, %v495
  %v497 = vpop.f32.mrb[0].mxu0
  %v498 = vpop.f32.mrb[0].mxu0
  %v499 = vadd.f32 %v375, %v498
  %v500 = vpop.f32.mrb[0].mxu0
  %501 = vdwg.mxu0
  %v502 = vld [vmem:[#allocation2 + $0x2] sm:$0xff]
  %v503 = vld [vmem:[#allocation2 + $0x12] sm:$0xff]
  %v504 = vld [vmem:[#allocation2 + $0x22] sm:$0xff]
  %v505 = vld [vmem:[#allocation2 + $0x32] sm:$0xff]
  %v506 = vld [vmem:[#allocation2 + $0x42] sm:$0xff]
  %v507 = vld [vmem:[#allocation2 + $0x52] sm:$0xff]
  %v508 = vld [vmem:[#allocation2 + $0x62] sm:$0xff]
  %v509 = vld [vmem:[#allocation2 + $0x72] sm:$0xff]
  %v510 = vld [vmem:[#allocation2 + $0xa2] sm:$0xff]
  %v511 = vld [vmem:[#allocation2 + $0xb2] sm:$0xff]
  %v512 = vld [vmem:[#allocation2 + $0xc2] sm:$0xff]
  %v513 = vld [vmem:[#allocation2 + $0xd2] sm:$0xff]
  %v514 = vld [vmem:[#allocation2 + $0xe2] sm:$0xff]
  %v515 = vld [vmem:[#allocation2 + $0xf2] sm:$0xff]
  %v516 = vld [vmem:[#allocation2 + $0x102] sm:$0xff]
  %v517 = vld [vmem:[#allocation2 + $0x112] sm:$0xff]
  %v518 = vpack.c.bf16 %v503, %v502
  %v519 = vpack.c.bf16 %v505, %v504
  %v520 = vpack.c.bf16 %v507, %v506
  %v521 = vpack.c.bf16 %v509, %v508
  %v522 = vpack.c.bf16 %v511, %v510
  %v523 = vpack.c.bf16 %v513, %v512
  %v524 = vpack.c.bf16 %v515, %v514
  %v525 = vpack.c.bf16 %v517, %v516
  %s526 = scalar_lea.vmem %s1, 8
  %v527 = vld [vmem:[%s526] sm:$0xf]
  %v529 = vsel %vm27, %v518, 0
  %v532 = vsel %vm27, %v519, 0
  %v535 = vsel %vm27, %v520, 0
  %v538 = vsel %vm27, %v521, 0
  %v541 = vsel %vm27, %v522, 0
  %v544 = vsel %vm27, %v523, 0
  %v547 = vsel %vm27, %v524, 0
  %v550 = vsel %vm27, %v525, 0
  %v553 = vsel %vm277, %v527, 0
  %555 = vmatprep.subr.bf16.mxu0 0
  %556 = vmatpush1.bf16.msra.mxu0 %v553
  %557 = vmatprep.subr.bf16.mxu0 0
  %558 = vmatpush1.bf16.msra.mxu0 0
  %559 = vmatprep.subr.bf16.mxu0 0
  %560 = vmatpush1.bf16.msra.mxu0 0
  %561 = vmatprep.subr.bf16.mxu0 0
  %562 = vmatpush1.bf16.msra.mxu0 0
  %563 = vmatprep.subr.bf16.mxu0 0
  %564 = vmatpush1.bf16.msra.mxu0 0
  %565 = vmatprep.subr.bf16.mxu0 0
  %566 = vmatpush1.bf16.msra.mxu0 0
  %567 = vmatprep.subr.bf16.mxu0 0
  %568 = vmatpush1.bf16.msra.mxu0 0
  %569 = vmatprep.subr.bf16.mxu0 0
  %570 = vmatpush1.bf16.msra.mxu0 0
  %571 = vmatprep.subr.bf16.mxu0 0
  %572 = vmatpush1.bf16.msra.mxu0 0
  %573 = vmatprep.subr.bf16.mxu0 0
  %574 = vmatpush1.bf16.msra.mxu0 0
  %575 = vmatprep.subr.bf16.mxu0 0
  %576 = vmatpush1.bf16.msra.mxu0 0
  %577 = vmatprep.subr.bf16.mxu0 0
  %578 = vmatpush1.bf16.msra.mxu0 0
  %579 = vmatprep.subr.bf16.mxu0 0
  %580 = vmatpush1.bf16.msra.mxu0 0
  %581 = vmatprep.subr.bf16.mxu0 0
  %582 = vmatpush1.bf16.msra.mxu0 0
  %583 = vmatprep.subr.bf16.mxu0 0
  %584 = vmatpush1.bf16.msra.mxu0 0
  %585 = vmatprep.subr.bf16.mxu0 0
  %586 = vmatpush1.bf16.msra.mxu0 0
  %587 = vmatprep.mubr.bf16.mxu0 0
  %588 = vmatmul.mubr.bf16.gmra.mrb[0].mxu0 %v529
  %v589 = vpop.f32.mrb[0].mxu0
  %v590 = vadd.f32 0.0, %v589
  %v591 = vpop.f32.mrb[0].mxu0
  %v592 = vpop.f32.mrb[0].mxu0
  %v593 = vadd.f32 0.0, %v592
  %v594 = vpop.f32.mrb[0].mxu0
  %595 = vmatprep.mubr.bf16.mxu0 0
  %596 = vmatmul.mubr.bf16.gmra.mrb[0].mxu0 %v532
  %v597 = vpop.f32.mrb[0].mxu0
  %v598 = vadd.f32 0.0, %v597
  %v599 = vpop.f32.mrb[0].mxu0
  %v600 = vpop.f32.mrb[0].mxu0
  %v601 = vadd.f32 0.0, %v600
  %v602 = vpop.f32.mrb[0].mxu0
  %603 = vmatprep.mubr.bf16.mxu0 0
  %604 = vmatmul.mubr.bf16.gmra.mrb[0].mxu0 %v535
  %v605 = vpop.f32.mrb[0].mxu0
  %v606 = vadd.f32 0.0, %v605
  %v607 = vpop.f32.mrb[0].mxu0
  %v608 = vpop.f32.mrb[0].mxu0
  %v609 = vadd.f32 0.0, %v608
  %v610 = vpop.f32.mrb[0].mxu0
  %611 = vmatprep.mubr.bf16.mxu0 0
  %612 = vmatmul.mubr.bf16.gmra.mrb[0].mxu0 %v538
  %v613 = vpop.f32.mrb[0].mxu0
  %v614 = vadd.f32 0.0, %v613
  %v615 = vpop.f32.mrb[0].mxu0
  %v616 = vpop.f32.mrb[0].mxu0
  %v617 = vadd.f32 0.0, %v616
  %v618 = vpop.f32.mrb[0].mxu0
  %619 = vmatprep.mubr.bf16.mxu0 0
  %620 = vmatmul.mubr.bf16.gmra.mrb[0].mxu0 %v541
  %v621 = vpop.f32.mrb[0].mxu0
  %v622 = vadd.f32 0.0, %v621
  %v623 = vpop.f32.mrb[0].mxu0
  %v624 = vpop.f32.mrb[0].mxu0
  %v625 = vadd.f32 0.0, %v624
  %v626 = vpop.f32.mrb[0].mxu0
  %627 = vmatprep.mubr.bf16.mxu0 0
  %628 = vmatmul.mubr.bf16.gmra.mrb[0].mxu0 %v544
  %v629 = vpop.f32.mrb[0].mxu0
  %v630 = vadd.f32 0.0, %v629
  %v631 = vpop.f32.mrb[0].mxu0
  %v632 = vpop.f32.mrb[0].mxu0
  %v633 = vadd.f32 0.0, %v632
  %v634 = vpop.f32.mrb[0].mxu0
  %635 = vmatprep.mubr.bf16.mxu0 0
  %636 = vmatmul.mubr.bf16.gmra.mrb[0].mxu0 %v547
  %v637 = vpop.f32.mrb[0].mxu0
  %v638 = vadd.f32 0.0, %v637
  %v639 = vpop.f32.mrb[0].mxu0
  %v640 = vpop.f32.mrb[0].mxu0
  %v641 = vadd.f32 0.0, %v640
  %v642 = vpop.f32.mrb[0].mxu0
  %643 = vmatprep.mubr.bf16.mxu0 0
  %644 = vmatmul.mubr.bf16.gmra.mrb[0].mxu0 %v550
  %v645 = vpop.f32.mrb[0].mxu0
  %v646 = vadd.f32 0.0, %v645
  %v647 = vpop.f32.mrb[0].mxu0
  %v648 = vpop.f32.mrb[0].mxu0
  %v649 = vadd.f32 0.0, %v648
  %v650 = vpop.f32.mrb[0].mxu0
  %651 = vdwg.mxu0
  %v652 = vadd.f32 %v440, %v590
  %v653 = vadd.f32 %v443, %v593
  %v654 = vadd.f32 %v448, %v598
  %v655 = vadd.f32 %v451, %v601
  %v656 = vadd.f32 %v456, %v606
  %v657 = vadd.f32 %v459, %v609
  %v658 = vadd.f32 %v464, %v614
  %v659 = vadd.f32 %v467, %v617
  %v660 = vadd.f32 %v472, %v622
  %v661 = vadd.f32 %v475, %v625
  %v662 = vadd.f32 %v480, %v630
  %v663 = vadd.f32 %v483, %v633
  %v664 = vadd.f32 %v488, %v638
  %v665 = vadd.f32 %v491, %v641
  %v666 = vadd.f32 %v496, %v646
  %v667 = vadd.f32 %v499, %v649
  %v668 = vld [vmem:[%s184] sm:$0xff]
  %v669 = vld [vmem:[%s184 + $0x10] sm:$0xff]
  %v670 = vld [vmem:[%s184 + $0x20] sm:$0xff]
  %v671 = vld [vmem:[%s184 + $0x30] sm:$0xff]
  %v672 = vld [vmem:[%s184 + $0x40] sm:$0xff]
  %v673 = vld [vmem:[%s184 + $0x50] sm:$0xff]
  %v674 = vld [vmem:[%s184 + $0x60] sm:$0xff]
  %v675 = vld [vmem:[%s184 + $0x70] sm:$0xff]
  %v676 = vld [vmem:[%s184 + $0xa0] sm:$0xff]
  %v677 = vld [vmem:[%s184 + $0xb0] sm:$0xff]
  %v678 = vld [vmem:[%s184 + $0xc0] sm:$0xff]
  %v679 = vld [vmem:[%s184 + $0xd0] sm:$0xff]
  %v680 = vld [vmem:[%s184 + $0xe0] sm:$0xff]
  %v681 = vld [vmem:[%s184 + $0xf0] sm:$0xff]
  %v682 = vld [vmem:[%s184 + $0x100] sm:$0xff]
  %v683 = vld [vmem:[%s184 + $0x110] sm:$0xff]
  %v684 = vpack.c.bf16 %v669, %v668
  %v685 = vpack.c.bf16 %v671, %v670
  %v686 = vpack.c.bf16 %v673, %v672
  %v687 = vpack.c.bf16 %v675, %v674
  %v688 = vpack.c.bf16 %v677, %v676
  %v689 = vpack.c.bf16 %v679, %v678
  %v690 = vpack.c.bf16 %v681, %v680
  %v691 = vpack.c.bf16 %v683, %v682
  %s692 = scalar_lea.vmem %s1, 12
  %v693 = vld [vmem:[%s692] sm:$0xf]
  %v695 = vsel %vm27, %v684, 0
  %v698 = vsel %vm27, %v685, 0
  %v701 = vsel %vm27, %v686, 0
  %v704 = vsel %vm27, %v687, 0
  %v707 = vsel %vm27, %v688, 0
  %v710 = vsel %vm27, %v689, 0
  %v713 = vsel %vm27, %v690, 0
  %v716 = vsel %vm27, %v691, 0
  %v719 = vsel %vm277, %v693, 0
  %721 = vmatprep.subr.bf16.mxu0 0
  %722 = vmatpush1.bf16.msra.mxu0 %v719
  %723 = vmatprep.subr.bf16.mxu0 0
  %724 = vmatpush1.bf16.msra.mxu0 0
  %725 = vmatprep.subr.bf16.mxu0 0
  %726 = vmatpush1.bf16.msra.mxu0 0
  %727 = vmatprep.subr.bf16.mxu0 0
  %728 = vmatpush1.bf16.msra.mxu0 0
  %729 = vmatprep.subr.bf16.mxu0 0
  %730 = vmatpush1.bf16.msra.mxu0 0
  %731 = vmatprep.subr.bf16.mxu0 0
  %732 = vmatpush1.bf16.msra.mxu0 0
  %733 = vmatprep.subr.bf16.mxu0 0
  %734 = vmatpush1.bf16.msra.mxu0 0
  %735 = vmatprep.subr.bf16.mxu0 0
  %736 = vmatpush1.bf16.msra.mxu0 0
  %737 = vmatprep.subr.bf16.mxu0 0
  %738 = vmatpush1.bf16.msra.mxu0 0
  %739 = vmatprep.subr.bf16.mxu0 0
  %740 = vmatpush1.bf16.msra.mxu0 0
  %741 = vmatprep.subr.bf16.mxu0 0
  %742 = vmatpush1.bf16.msra.mxu0 0
  %743 = vmatprep.subr.bf16.mxu0 0
  %744 = vmatpush1.bf16.msra.mxu0 0
  %745 = vmatprep.subr.bf16.mxu0 0
  %746 = vmatpush1.bf16.msra.mxu0 0
  %747 = vmatprep.subr.bf16.mxu0 0
  %748 = vmatpush1.bf16.msra.mxu0 0
  %749 = vmatprep.subr.bf16.mxu0 0
  %750 = vmatpush1.bf16.msra.mxu0 0
  %751 = vmatprep.subr.bf16.mxu0 0
  %752 = vmatpush1.bf16.msra.mxu0 0
  %753 = vmatprep.mubr.bf16.mxu0 0
  %754 = vmatmul.mubr.bf16.gmra.mrb[0].mxu0 %v695
  %v755 = vpop.f32.mrb[0].mxu0
  %v756 = vadd.f32 0.0, %v755
  %v757 = vpop.f32.mrb[0].mxu0
  %v758 = vpop.f32.mrb[0].mxu0
  %v759 = vadd.f32 0.0, %v758
  %v760 = vpop.f32.mrb[0].mxu0
  %761 = vmatprep.mubr.bf16.mxu0 0
  %762 = vmatmul.mubr.bf16.gmra.mrb[0].mxu0 %v698
  %v763 = vpop.f32.mrb[0].mxu0
  %v764 = vadd.f32 0.0, %v763
  %v765 = vpop.f32.mrb[0].mxu0
  %v766 = vpop.f32.mrb[0].mxu0
  %v767 = vadd.f32 0.0, %v766
  %v768 = vpop.f32.mrb[0].mxu0
  %769 = vmatprep.mubr.bf16.mxu0 0
  %770 = vmatmul.mubr.bf16.gmra.mrb[0].mxu0 %v701
  %v771 = vpop.f32.mrb[0].mxu0
  %v772 = vadd.f32 0.0, %v771
  %v773 = vpop.f32.mrb[0].mxu0
  %v774 = vpop.f32.mrb[0].mxu0
  %v775 = vadd.f32 0.0, %v774
  %v776 = vpop.f32.mrb[0].mxu0
  %777 = vmatprep.mubr.bf16.mxu0 0
  %778 = vmatmul.mubr.bf16.gmra.mrb[0].mxu0 %v704
  %v779 = vpop.f32.mrb[0].mxu0
  %v780 = vadd.f32 0.0, %v779
  %v781 = vpop.f32.mrb[0].mxu0
  %v782 = vpop.f32.mrb[0].mxu0
  %v783 = vadd.f32 0.0, %v782
  %v784 = vpop.f32.mrb[0].mxu0
  %785 = vmatprep.mubr.bf16.mxu0 0
  %786 = vmatmul.mubr.bf16.gmra.mrb[0].mxu0 %v707
  %v787 = vpop.f32.mrb[0].mxu0
  %v788 = vadd.f32 0.0, %v787
  %v789 = vpop.f32.mrb[0].mxu0
  %v790 = vpop.f32.mrb[0].mxu0
  %v791 = vadd.f32 0.0, %v790
  %v792 = vpop.f32.mrb[0].mxu0
  %793 = vmatprep.mubr.bf16.mxu0 0
  %794 = vmatmul.mubr.bf16.gmra.mrb[0].mxu0 %v710
  %v795 = vpop.f32.mrb[0].mxu0
  %v796 = vadd.f32 0.0, %v795
  %v797 = vpop.f32.mrb[0].mxu0
  %v798 = vpop.f32.mrb[0].mxu0
  %v799 = vadd.f32 0.0, %v798
  %v800 = vpop.f32.mrb[0].mxu0
  %801 = vmatprep.mubr.bf16.mxu0 0
  %802 = vmatmul.mubr.bf16.gmra.mrb[0].mxu0 %v713
  %v803 = vpop.f32.mrb[0].mxu0
  %v804 = vadd.f32 0.0, %v803
  %v805 = vpop.f32.mrb[0].mxu0
  %v806 = vpop.f32.mrb[0].mxu0
  %v807 = vadd.f32 0.0, %v806
  %v808 = vpop.f32.mrb[0].mxu0
  %809 = vmatprep.mubr.bf16.mxu0 0
  %810 = vmatmul.mubr.bf16.gmra.mrb[0].mxu0 %v716
  %v811 = vpop.f32.mrb[0].mxu0
  %v812 = vadd.f32 0.0, %v811
  %v813 = vpop.f32.mrb[0].mxu0
  %v814 = vpop.f32.mrb[0].mxu0
  %v815 = vadd.f32 0.0, %v814
  %v816 = vpop.f32.mrb[0].mxu0
  %817 = vdwg.mxu0
  %v818 = vadd.f32 %v652, %v756
  %v819 = vadd.f32 %v653, %v759
  %v820 = vadd.f32 %v654, %v764
  %v821 = vadd.f32 %v655, %v767
  %v822 = vadd.f32 %v656, %v772
  %v823 = vadd.f32 %v657, %v775
  %v824 = vadd.f32 %v658, %v780
  %v825 = vadd.f32 %v659, %v783
  %v826 = vadd.f32 %v660, %v788
  %v827 = vadd.f32 %v661, %v791
  %v828 = vadd.f32 %v662, %v796
  %v829 = vadd.f32 %v663, %v799
  %v830 = vadd.f32 %v664, %v804
  %v831 = vadd.f32 %v665, %v807
  %v832 = vadd.f32 %v666, %v812
  %v833 = vadd.f32 %v667, %v815
  %v834 = vld [vmem:[%s184 + $0x1] sm:$0xff]
  %v835 = vld [vmem:[%s184 + $0x11] sm:$0xff]
  %v836 = vld [vmem:[%s184 + $0x21] sm:$0xff]
  %v837 = vld [vmem:[%s184 + $0x31] sm:$0xff]
  %v838 = vld [vmem:[%s184 + $0x41] sm:$0xff]
  %v839 = vld [vmem:[%s184 + $0x51] sm:$0xff]
  %v840 = vld [vmem:[%s184 + $0x61] sm:$0xff]
  %v841 = vld [vmem:[%s184 + $0x71] sm:$0xff]
  %v842 = vld [vmem:[%s184 + $0xa1] sm:$0xff]
  %v843 = vld [vmem:[%s184 + $0xb1] sm:$0xff]
  %v844 = vld [vmem:[%s184 + $0xc1] sm:$0xff]
  %v845 = vld [vmem:[%s184 + $0xd1] sm:$0xff]
  %v846 = vld [vmem:[%s184 + $0xe1] sm:$0xff]
  %v847 = vld [vmem:[%s184 + $0xf1] sm:$0xff]
  %v848 = vld [vmem:[%s184 + $0x101] sm:$0xff]
  %v849 = vld [vmem:[%s184 + $0x111] sm:$0xff]
  %v850 = vpack.c.bf16 %v835, %v834
  %v851 = vpack.c.bf16 %v837, %v836
  %v852 = vpack.c.bf16 %v839, %v838
  %v853 = vpack.c.bf16 %v841, %v840
  %v854 = vpack.c.bf16 %v843, %v842
  %v855 = vpack.c.bf16 %v845, %v844
  %v856 = vpack.c.bf16 %v847, %v846
  %v857 = vpack.c.bf16 %v849, %v848
  %s858 = scalar_lea.vmem %s1, 16
  %v859 = vld [vmem:[%s858] sm:$0xf]
  %v861 = vsel %vm27, %v850, 0
  %v864 = vsel %vm27, %v851, 0
  %v867 = vsel %vm27, %v852, 0
  %v870 = vsel %vm27, %v853, 0
  %v873 = vsel %vm27, %v854, 0
  %v876 = vsel %vm27, %v855, 0
  %v879 = vsel %vm27, %v856, 0
  %v882 = vsel %vm27, %v857, 0
  %v885 = vsel %vm277, %v859, 0
  %887 = vmatprep.subr.bf16.mxu0 0
  %888 = vmatpush1.bf16.msra.mxu0 %v885
  %889 = vmatprep.subr.bf16.mxu0 0
  %890 = vmatpush1.bf16.msra.mxu0 0
  %891 = vmatprep.subr.bf16.mxu0 0
  %892 = vmatpush1.bf16.msra.mxu0 0
  %893 = vmatprep.subr.bf16.mxu0 0
  %894 = vmatpush1.bf16.msra.mxu0 0
  %895 = vmatprep.subr.bf16.mxu0 0
  %896 = vmatpush1.bf16.msra.mxu0 0
  %897 = vmatprep.subr.bf16.mxu0 0
  %898 = vmatpush1.bf16.msra.mxu0 0
  %899 = vmatprep.subr.bf16.mxu0 0
  %900 = vmatpush1.bf16.msra.mxu0 0
  %901 = vmatprep.subr.bf16.mxu0 0
  %902 = vmatpush1.bf16.msra.mxu0 0
  %903 = vmatprep.subr.bf16.mxu0 0
  %904 = vmatpush1.bf16.msra.mxu0 0
  %905 = vmatprep.subr.bf16.mxu0 0
  %906 = vmatpush1.bf16.msra.mxu0 0
  %907 = vmatprep.subr.bf16.mxu0 0
  %908 = vmatpush1.bf16.msra.mxu0 0
  %909 = vmatprep.subr.bf16.mxu0 0
  %910 = vmatpush1.bf16.msra.mxu0 0
  %911 = vmatprep.subr.bf16.mxu0 0
  %912 = vmatpush1.bf16.msra.mxu0 0
  %913 = vmatprep.subr.bf16.mxu0 0
  %914 = vmatpush1.bf16.msra.mxu0 0
  %915 = vmatprep.subr.bf16.mxu0 0
  %916 = vmatpush1.bf16.msra.mxu0 0
  %917 = vmatprep.subr.bf16.mxu0 0
  %918 = vmatpush1.bf16.msra.mxu0 0
  %919 = vmatprep.mubr.bf16.mxu0 0
  %920 = vmatmul.mubr.bf16.gmra.mrb[0].mxu0 %v861
  %v921 = vpop.f32.mrb[0].mxu0
  %v922 = vadd.f32 0.0, %v921
  %v923 = vpop.f32.mrb[0].mxu0
  %v924 = vpop.f32.mrb[0].mxu0
  %v925 = vadd.f32 0.0, %v924
  %v926 = vpop.f32.mrb[0].mxu0
  %927 = vmatprep.mubr.bf16.mxu0 0
  %928 = vmatmul.mubr.bf16.gmra.mrb[0].mxu0 %v864
  %v929 = vpop.f32.mrb[0].mxu0
  %v930 = vadd.f32 0.0, %v929
  %v931 = vpop.f32.mrb[0].mxu0
  %v932 = vpop.f32.mrb[0].mxu0
  %v933 = vadd.f32 0.0, %v932
  %v934 = vpop.f32.mrb[0].mxu0
  %935 = vmatprep.mubr.bf16.mxu0 0
  %936 = vmatmul.mubr.bf16.gmra.mrb[0].mxu0 %v867
  %v937 = vpop.f32.mrb[0].mxu0
  %v938 = vadd.f32 0.0, %v937
  %v939 = vpop.f32.mrb[0].mxu0
  %v940 = vpop.f32.mrb[0].mxu0
  %v941 = vadd.f32 0.0, %v940
  %v942 = vpop.f32.mrb[0].mxu0
  %943 = vmatprep.mubr.bf16.mxu0 0
  %944 = vmatmul.mubr.bf16.gmra.mrb[0].mxu0 %v870
  %v945 = vpop.f32.mrb[0].mxu0
  %v946 = vadd.f32 0.0, %v945
  %v947 = vpop.f32.mrb[0].mxu0
  %v948 = vpop.f32.mrb[0].mxu0
  %v949 = vadd.f32 0.0, %v948
  %v950 = vpop.f32.mrb[0].mxu0
  %951 = vmatprep.mubr.bf16.mxu0 0
  %952 = vmatmul.mubr.bf16.gmra.mrb[0].mxu0 %v873
  %v953 = vpop.f32.mrb[0].mxu0
  %v954 = vadd.f32 0.0, %v953
  %v955 = vpop.f32.mrb[0].mxu0
  %v956 = vpop.f32.mrb[0].mxu0
  %v957 = vadd.f32 0.0, %v956
  %v958 = vpop.f32.mrb[0].mxu0
  %959 = vmatprep.mubr.bf16.mxu0 0
  %960 = vmatmul.mubr.bf16.gmra.mrb[0].mxu0 %v876
  %v961 = vpop.f32.mrb[0].mxu0
  %v962 = vadd.f32 0.0, %v961
  %v963 = vpop.f32.mrb[0].mxu0
  %v964 = vpop.f32.mrb[0].mxu0
  %v965 = vadd.f32 0.0, %v964
  %v966 = vpop.f32.mrb[0].mxu0
  %967 = vmatprep.mubr.bf16.mxu0 0
  %968 = vmatmul.mubr.bf16.gmra.mrb[0].mxu0 %v879
  %v969 = vpop.f32.mrb[0].mxu0
  %v970 = vadd.f32 0.0, %v969
  %v971 = vpop.f32.mrb[0].mxu0
  %v972 = vpop.f32.mrb[0].mxu0
  %v973 = vadd.f32 0.0, %v972
  %v974 = vpop.f32.mrb[0].mxu0
  %975 = vmatprep.mubr.bf16.mxu0 0
  %976 = vmatmul.mubr.bf16.gmra.mrb[0].mxu0 %v882
  %v977 = vpop.f32.mrb[0].mxu0
  %v978 = vadd.f32 0.0, %v977
  %v979 = vpop.f32.mrb[0].mxu0
  %v980 = vpop.f32.mrb[0].mxu0
  %v981 = vadd.f32 0.0, %v980
  %v982 = vpop.f32.mrb[0].mxu0
  %983 = vdwg.mxu0
  %v984 = vadd.f32 %v818, %v922
  %v985 = vadd.f32 %v819, %v925
  %v986 = vadd.f32 %v820, %v930
  %v987 = vadd.f32 %v821, %v933
  %v988 = vadd.f32 %v822, %v938
  %v989 = vadd.f32 %v823, %v941
  %v990 = vadd.f32 %v824, %v946
  %v991 = vadd.f32 %v825, %v949
  %v992 = vadd.f32 %v826, %v954
  %v993 = vadd.f32 %v827, %v957
  %v994 = vadd.f32 %v828, %v962
  %v995 = vadd.f32 %v829, %v965
  %v996 = vadd.f32 %v830, %v970
  %v997 = vadd.f32 %v831, %v973
  %v998 = vadd.f32 %v832, %v978
  %v999 = vadd.f32 %v833, %v981
  %v1000 = vld [vmem:[%s184 + $0x2] sm:$0xff]
  %v1001 = vld [vmem:[%s184 + $0x12] sm:$0xff]
  %v1002 = vld [vmem:[%s184 + $0x22] sm:$0xff]
  %v1003 = vld [vmem:[%s184 + $0x32] sm:$0xff]
  %v1004 = vld [vmem:[%s184 + $0x42] sm:$0xff]
  %v1005 = vld [vmem:[%s184 + $0x52] sm:$0xff]
  %v1006 = vld [vmem:[%s184 + $0x62] sm:$0xff]
  %v1007 = vld [vmem:[%s184 + $0x72] sm:$0xff]
  %v1008 = vld [vmem:[%s184 + $0xa2] sm:$0xff]
  %v1009 = vld [vmem:[%s184 + $0xb2] sm:$0xff]
  %v1010 = vld [vmem:[%s184 + $0xc2] sm:$0xff]
  %v1011 = vld [vmem:[%s184 + $0xd2] sm:$0xff]
  %v1012 = vld [vmem:[%s184 + $0xe2] sm:$0xff]
  %v1013 = vld [vmem:[%s184 + $0xf2] sm:$0xff]
  %v1014 = vld [vmem:[%s184 + $0x102] sm:$0xff]
  %v1015 = vld [vmem:[%s184 + $0x112] sm:$0xff]
  %v1016 = vpack.c.bf16 %v1001, %v1000
  %v1017 = vpack.c.bf16 %v1003, %v1002
  %v1018 = vpack.c.bf16 %v1005, %v1004
  %v1019 = vpack.c.bf16 %v1007, %v1006
  %v1020 = vpack.c.bf16 %v1009, %v1008
  %v1021 = vpack.c.bf16 %v1011, %v1010
  %v1022 = vpack.c.bf16 %v1013, %v1012
  %v1023 = vpack.c.bf16 %v1015, %v1014
  %s1024 = scalar_lea.vmem %s1, 20
  %v1025 = vld [vmem:[%s1024] sm:$0xf]
  %v1027 = vsel %vm27, %v1016, 0
  %v1030 = vsel %vm27, %v1017, 0
  %v1033 = vsel %vm27, %v1018, 0
  %v1036 = vsel %vm27, %v1019, 0
  %v1039 = vsel %vm27, %v1020, 0
  %v1042 = vsel %vm27, %v1021, 0
  %v1045 = vsel %vm27, %v1022, 0
  %v1048 = vsel %vm27, %v1023, 0
  %v1051 = vsel %vm277, %v1025, 0
  %1053 = vmatprep.subr.bf16.mxu0 0
  %1054 = vmatpush1.bf16.msra.mxu0 %v1051
  %1055 = vmatprep.subr.bf16.mxu0 0
  %1056 = vmatpush1.bf16.msra.mxu0 0
  %1057 = vmatprep.subr.bf16.mxu0 0
  %1058 = vmatpush1.bf16.msra.mxu0 0
  %1059 = vmatprep.subr.bf16.mxu0 0
  %1060 = vmatpush1.bf16.msra.mxu0 0
  %1061 = vmatprep.subr.bf16.mxu0 0
  %1062 = vmatpush1.bf16.msra.mxu0 0
  %1063 = vmatprep.subr.bf16.mxu0 0
  %1064 = vmatpush1.bf16.msra.mxu0 0
  %1065 = vmatprep.subr.bf16.mxu0 0
  %1066 = vmatpush1.bf16.msra.mxu0 0
  %1067 = vmatprep.subr.bf16.mxu0 0
  %1068 = vmatpush1.bf16.msra.mxu0 0
  %1069 = vmatprep.subr.bf16.mxu0 0
  %1070 = vmatpush1.bf16.msra.mxu0 0
  %1071 = vmatprep.subr.bf16.mxu0 0
  %1072 = vmatpush1.bf16.msra.mxu0 0
  %1073 = vmatprep.subr.bf16.mxu0 0
  %1074 = vmatpush1.bf16.msra.mxu0 0
  %1075 = vmatprep.subr.bf16.mxu0 0
  %1076 = vmatpush1.bf16.msra.mxu0 0
  %1077 = vmatprep.subr.bf16.mxu0 0
  %1078 = vmatpush1.bf16.msra.mxu0 0
  %1079 = vmatprep.subr.bf16.mxu0 0
  %1080 = vmatpush1.bf16.msra.mxu0 0
  %1081 = vmatprep.subr.bf16.mxu0 0
  %1082 = vmatpush1.bf16.msra.mxu0 0
  %1083 = vmatprep.subr.bf16.mxu0 0
  %1084 = vmatpush1.bf16.msra.mxu0 0
  %1085 = vmatprep.mubr.bf16.mxu0 0
  %1086 = vmatmul.mubr.bf16.gmra.mrb[0].mxu0 %v1027
  %v1087 = vpop.f32.mrb[0].mxu0
  %v1088 = vadd.f32 0.0, %v1087
  %v1089 = vpop.f32.mrb[0].mxu0
  %v1090 = vpop.f32.mrb[0].mxu0
  %v1091 = vadd.f32 0.0, %v1090
  %v1092 = vpop.f32.mrb[0].mxu0
  %1093 = vmatprep.mubr.bf16.mxu0 0
  %1094 = vmatmul.mubr.bf16.gmra.mrb[0].mxu0 %v1030
  %v1095 = vpop.f32.mrb[0].mxu0
  %v1096 = vadd.f32 0.0, %v1095
  %v1097 = vpop.f32.mrb[0].mxu0
  %v1098 = vpop.f32.mrb[0].mxu0
  %v1099 = vadd.f32 0.0, %v1098
  %v1100 = vpop.f32.mrb[0].mxu0
  %1101 = vmatprep.mubr.bf16.mxu0 0
  %1102 = vmatmul.mubr.bf16.gmra.mrb[0].mxu0 %v1033
  %v1103 = vpop.f32.mrb[0].mxu0
  %v1104 = vadd.f32 0.0, %v1103
  %v1105 = vpop.f32.mrb[0].mxu0
  %v1106 = vpop.f32.mrb[0].mxu0
  %v1107 = vadd.f32 0.0, %v1106
  %v1108 = vpop.f32.mrb[0].mxu0
  %1109 = vmatprep.mubr.bf16.mxu0 0
  %1110 = vmatmul.mubr.bf16.gmra.mrb[0].mxu0 %v1036
  %v1111 = vpop.f32.mrb[0].mxu0
  %v1112 = vadd.f32 0.0, %v1111
  %v1113 = vpop.f32.mrb[0].mxu0
  %v1114 = vpop.f32.mrb[0].mxu0
  %v1115 = vadd.f32 0.0, %v1114
  %v1116 = vpop.f32.mrb[0].mxu0
  %1117 = vmatprep.mubr.bf16.mxu0 0
  %1118 = vmatmul.mubr.bf16.gmra.mrb[0].mxu0 %v1039
  %v1119 = vpop.f32.mrb[0].mxu0
  %v1120 = vadd.f32 0.0, %v1119
  %v1121 = vpop.f32.mrb[0].mxu0
  %v1122 = vpop.f32.mrb[0].mxu0
  %v1123 = vadd.f32 0.0, %v1122
  %v1124 = vpop.f32.mrb[0].mxu0
  %1125 = vmatprep.mubr.bf16.mxu0 0
  %1126 = vmatmul.mubr.bf16.gmra.mrb[0].mxu0 %v1042
  %v1127 = vpop.f32.mrb[0].mxu0
  %v1128 = vadd.f32 0.0, %v1127
  %v1129 = vpop.f32.mrb[0].mxu0
  %v1130 = vpop.f32.mrb[0].mxu0
  %v1131 = vadd.f32 0.0, %v1130
  %v1132 = vpop.f32.mrb[0].mxu0
  %1133 = vmatprep.mubr.bf16.mxu0 0
  %1134 = vmatmul.mubr.bf16.gmra.mrb[0].mxu0 %v1045
  %v1135 = vpop.f32.mrb[0].mxu0
  %v1136 = vadd.f32 0.0, %v1135
  %v1137 = vpop.f32.mrb[0].mxu0
  %v1138 = vpop.f32.mrb[0].mxu0
  %v1139 = vadd.f32 0.0, %v1138
  %v1140 = vpop.f32.mrb[0].mxu0
  %1141 = vmatprep.mubr.bf16.mxu0 0
  %1142 = vmatmul.mubr.bf16.gmra.mrb[0].mxu0 %v1048
  %v1143 = vpop.f32.mrb[0].mxu0
  %v1144 = vadd.f32 0.0, %v1143
  %v1145 = vpop.f32.mrb[0].mxu0
  %v1146 = vpop.f32.mrb[0].mxu0
  %v1147 = vadd.f32 0.0, %v1146
  %v1148 = vpop.f32.mrb[0].mxu0
  %1149 = vdwg.mxu0
  %v1150 = vadd.f32 %v984, %v1088
  %v1151 = vadd.f32 %v985, %v1091
  %v1152 = vadd.f32 %v986, %v1096
  %v1153 = vadd.f32 %v987, %v1099
  %v1154 = vadd.f32 %v988, %v1104
  %v1155 = vadd.f32 %v989, %v1107
  %v1156 = vadd.f32 %v990, %v1112
  %v1157 = vadd.f32 %v991, %v1115
  %v1158 = vadd.f32 %v992, %v1120
  %v1159 = vadd.f32 %v993, %v1123
  %v1160 = vadd.f32 %v994, %v1128
  %v1161 = vadd.f32 %v995, %v1131
  %v1162 = vadd.f32 %v996, %v1136
  %v1163 = vadd.f32 %v997, %v1139
  %v1164 = vadd.f32 %v998, %v1144
  %v1165 = vadd.f32 %v999, %v1147
  %s1166 = scalar_lea.vmem [#allocation2], 32
  %v1167 = vld [vmem:[%s1166] sm:$0xff]
  %v1168 = vld [vmem:[%s1166 + $0x10] sm:$0xff]
  %v1169 = vld [vmem:[%s1166 + $0x20] sm:$0xff]
  %v1170 = vld [vmem:[%s1166 + $0x30] sm:$0xff]
  %v1171 = vld [vmem:[%s1166 + $0x40] sm:$0xff]
  %v1172 = vld [vmem:[%s1166 + $0x50] sm:$0xff]
  %v1173 = vld [vmem:[%s1166 + $0x60] sm:$0xff]
  %v1174 = vld [vmem:[%s1166 + $0x70] sm:$0xff]
  %v1175 = vld [vmem:[%s1166 + $0xa0] sm:$0xff]
  %v1176 = vld [vmem:[%s1166 + $0xb0] sm:$0xff]
  %v1177 = vld [vmem:[%s1166 + $0xc0] sm:$0xff]
  %v1178 = vld [vmem:[%s1166 + $0xd0] sm:$0xff]
  %v1179 = vld [vmem:[%s1166 + $0xe0] sm:$0xff]
  %v1180 = vld [vmem:[%s1166 + $0xf0] sm:$0xff]
  %v1181 = vld [vmem:[%s1166 + $0x100] sm:$0xff]
  %v1182 = vld [vmem:[%s1166 + $0x110] sm:$0xff]
  %v1183 = vpack.c.bf16 %v1168, %v1167
  %v1184 = vpack.c.bf16 %v1170, %v1169
  %v1185 = vpack.c.bf16 %v1172, %v1171
  %v1186 = vpack.c.bf16 %v1174, %v1173
  %v1187 = vpack.c.bf16 %v1176, %v1175
  %v1188 = vpack.c.bf16 %v1178, %v1177
  %v1189 = vpack.c.bf16 %v1180, %v1179
  %v1190 = vpack.c.bf16 %v1182, %v1181
  %s1191 = scalar_lea.vmem %s1, 24
  %v1192 = vld [vmem:[%s1191] sm:$0xf]
  %v1194 = vsel %vm27, %v1183, 0
  %v1197 = vsel %vm27, %v1184, 0
  %v1200 = vsel %vm27, %v1185, 0
  %v1203 = vsel %vm27, %v1186, 0
  %v1206 = vsel %vm27, %v1187, 0
  %v1209 = vsel %vm27, %v1188, 0
  %v1212 = vsel %vm27, %v1189, 0
  %v1215 = vsel %vm27, %v1190, 0
  %v1218 = vsel %vm277, %v1192, 0
  %1220 = vmatprep.subr.bf16.mxu0 0
  %1221 = vmatpush1.bf16.msra.mxu0 %v1218
  %1222 = vmatprep.subr.bf16.mxu0 0
  %1223 = vmatpush1.bf16.msra.mxu0 0
  %1224 = vmatprep.subr.bf16.mxu0 0
  %1225 = vmatpush1.bf16.msra.mxu0 0
  %1226 = vmatprep.subr.bf16.mxu0 0
  %1227 = vmatpush1.bf16.msra.mxu0 0
  %1228 = vmatprep.subr.bf16.mxu0 0
  %1229 = vmatpush1.bf16.msra.mxu0 0
  %1230 = vmatprep.subr.bf16.mxu0 0
  %1231 = vmatpush1.bf16.msra.mxu0 0
  %1232 = vmatprep.subr.bf16.mxu0 0
  %1233 = vmatpush1.bf16.msra.mxu0 0
  %1234 = vmatprep.subr.bf16.mxu0 0
  %1235 = vmatpush1.bf16.msra.mxu0 0
  %1236 = vmatprep.subr.bf16.mxu0 0
  %1237 = vmatpush1.bf16.msra.mxu0 0
  %1238 = vmatprep.subr.bf16.mxu0 0
  %1239 = vmatpush1.bf16.msra.mxu0 0
  %1240 = vmatprep.subr.bf16.mxu0 0
  %1241 = vmatpush1.bf16.msra.mxu0 0
  %1242 = vmatprep.subr.bf16.mxu0 0
  %1243 = vmatpush1.bf16.msra.mxu0 0
  %1244 = vmatprep.subr.bf16.mxu0 0
  %1245 = vmatpush1.bf16.msra.mxu0 0
  %1246 = vmatprep.subr.bf16.mxu0 0
  %1247 = vmatpush1.bf16.msra.mxu0 0
  %1248 = vmatprep.subr.bf16.mxu0 0
  %1249 = vmatpush1.bf16.msra.mxu0 0
  %1250 = vmatprep.subr.bf16.mxu0 0
  %1251 = vmatpush1.bf16.msra.mxu0 0
  %1252 = vmatprep.mubr.bf16.mxu0 0
  %1253 = vmatmul.mubr.bf16.gmra.mrb[0].mxu0 %v1194
  %v1254 = vpop.f32.mrb[0].mxu0
  %v1255 = vadd.f32 0.0, %v1254
  %v1256 = vpop.f32.mrb[0].mxu0
  %v1257 = vpop.f32.mrb[0].mxu0
  %v1258 = vadd.f32 0.0, %v1257
  %v1259 = vpop.f32.mrb[0].mxu0
  %1260 = vmatprep.mubr.bf16.mxu0 0
  %1261 = vmatmul.mubr.bf16.gmra.mrb[0].mxu0 %v1197
  %v1262 = vpop.f32.mrb[0].mxu0
  %v1263 = vadd.f32 0.0, %v1262
  %v1264 = vpop.f32.mrb[0].mxu0
  %v1265 = vpop.f32.mrb[0].mxu0
  %v1266 = vadd.f32 0.0, %v1265
  %v1267 = vpop.f32.mrb[0].mxu0
  %1268 = vmatprep.mubr.bf16.mxu0 0
  %1269 = vmatmul.mubr.bf16.gmra.mrb[0].mxu0 %v1200
  %v1270 = vpop.f32.mrb[0].mxu0
  %v1271 = vadd.f32 0.0, %v1270
  %v1272 = vpop.f32.mrb[0].mxu0
  %v1273 = vpop.f32.mrb[0].mxu0
  %v1274 = vadd.f32 0.0, %v1273
  %v1275 = vpop.f32.mrb[0].mxu0
  %1276 = vmatprep.mubr.bf16.mxu0 0
  %1277 = vmatmul.mubr.bf16.gmra.mrb[0].mxu0 %v1203
  %v1278 = vpop.f32.mrb[0].mxu0
  %v1279 = vadd.f32 0.0, %v1278
  %v1280 = vpop.f32.mrb[0].mxu0
  %v1281 = vpop.f32.mrb[0].mxu0
  %v1282 = vadd.f32 0.0, %v1281
  %v1283 = vpop.f32.mrb[0].mxu0
  %1284 = vmatprep.mubr.bf16.mxu0 0
  %1285 = vmatmul.mubr.bf16.gmra.mrb[0].mxu0 %v1206
  %v1286 = vpop.f32.mrb[0].mxu0
  %v1287 = vadd.f32 0.0, %v1286
  %v1288 = vpop.f32.mrb[0].mxu0
  %v1289 = vpop.f32.mrb[0].mxu0
  %v1290 = vadd.f32 0.0, %v1289
  %v1291 = vpop.f32.mrb[0].mxu0
  %1292 = vmatprep.mubr.bf16.mxu0 0
  %1293 = vmatmul.mubr.bf16.gmra.mrb[0].mxu0 %v1209
  %v1294 = vpop.f32.mrb[0].mxu0
  %v1295 = vadd.f32 0.0, %v1294
  %v1296 = vpop.f32.mrb[0].mxu0
  %v1297 = vpop.f32.mrb[0].mxu0
  %v1298 = vadd.f32 0.0, %v1297
  %v1299 = vpop.f32.mrb[0].mxu0
  %1300 = vmatprep.mubr.bf16.mxu0 0
  %1301 = vmatmul.mubr.bf16.gmra.mrb[0].mxu0 %v1212
  %v1302 = vpop.f32.mrb[0].mxu0
  %v1303 = vadd.f32 0.0, %v1302
  %v1304 = vpop.f32.mrb[0].mxu0
  %v1305 = vpop.f32.mrb[0].mxu0
  %v1306 = vadd.f32 0.0, %v1305
  %v1307 = vpop.f32.mrb[0].mxu0
  %1308 = vmatprep.mubr.bf16.mxu0 0
  %1309 = vmatmul.mubr.bf16.gmra.mrb[0].mxu0 %v1215
  %v1310 = vpop.f32.mrb[0].mxu0
  %v1311 = vadd.f32 0.0, %v1310
  %v1312 = vpop.f32.mrb[0].mxu0
  %v1313 = vpop.f32.mrb[0].mxu0
  %v1314 = vadd.f32 0.0, %v1313
  %v1315 = vpop.f32.mrb[0].mxu0
  %1316 = vdwg.mxu0
  %v1317 = vadd.f32 %v1150, %v1255
  %v1318 = vadd.f32 %v1151, %v1258
  %v1319 = vadd.f32 %v1152, %v1263
  %v1320 = vadd.f32 %v1153, %v1266
  %v1321 = vadd.f32 %v1154, %v1271
  %v1322 = vadd.f32 %v1155, %v1274
  %v1323 = vadd.f32 %v1156, %v1279
  %v1324 = vadd.f32 %v1157, %v1282
  %v1325 = vadd.f32 %v1158, %v1287
  %v1326 = vadd.f32 %v1159, %v1290
  %v1327 = vadd.f32 %v1160, %v1295
  %v1328 = vadd.f32 %v1161, %v1298
  %v1329 = vadd.f32 %v1162, %v1303
  %v1330 = vadd.f32 %v1163, %v1306
  %v1331 = vadd.f32 %v1164, %v1311
  %v1332 = vadd.f32 %v1165, %v1314
  %v1333 = vld [vmem:[%s1166 + $0x1] sm:$0xff]
  %v1334 = vld [vmem:[%s1166 + $0x11] sm:$0xff]
  %v1335 = vld [vmem:[%s1166 + $0x21] sm:$0xff]
  %v1336 = vld [vmem:[%s1166 + $0x31] sm:$0xff]
  %v1337 = vld [vmem:[%s1166 + $0x41] sm:$0xff]
  %v1338 = vld [vmem:[%s1166 + $0x51] sm:$0xff]
  %v1339 = vld [vmem:[%s1166 + $0x61] sm:$0xff]
  %v1340 = vld [vmem:[%s1166 + $0x71] sm:$0xff]
  %v1341 = vld [vmem:[%s1166 + $0xa1] sm:$0xff]
  %v1342 = vld [vmem:[%s1166 + $0xb1] sm:$0xff]
  %v1343 = vld [vmem:[%s1166 + $0xc1] sm:$0xff]
  %v1344 = vld [vmem:[%s1166 + $0xd1] sm:$0xff]
  %v1345 = vld [vmem:[%s1166 + $0xe1] sm:$0xff]
  %v1346 = vld [vmem:[%s1166 + $0xf1] sm:$0xff]
  %v1347 = vld [vmem:[%s1166 + $0x101] sm:$0xff]
  %v1348 = vld [vmem:[%s1166 + $0x111] sm:$0xff]
  %v1349 = vpack.c.bf16 %v1334, %v1333
  %v1350 = vpack.c.bf16 %v1336, %v1335
  %v1351 = vpack.c.bf16 %v1338, %v1337
  %v1352 = vpack.c.bf16 %v1340, %v1339
  %v1353 = vpack.c.bf16 %v1342, %v1341
  %v1354 = vpack.c.bf16 %v1344, %v1343
  %v1355 = vpack.c.bf16 %v1346, %v1345
  %v1356 = vpack.c.bf16 %v1348, %v1347
  %s1357 = scalar_lea.vmem %s1, 28
  %v1358 = vld [vmem:[%s1357] sm:$0xf]
  %v1360 = vsel %vm27, %v1349, 0
  %v1363 = vsel %vm27, %v1350, 0
  %v1366 = vsel %vm27, %v1351, 0
  %v1369 = vsel %vm27, %v1352, 0
  %v1372 = vsel %vm27, %v1353, 0
  %v1375 = vsel %vm27, %v1354, 0
  %v1378 = vsel %vm27, %v1355, 0
  %v1381 = vsel %vm27, %v1356, 0
  %v1384 = vsel %vm277, %v1358, 0
  %1386 = vmatprep.subr.bf16.mxu0 0
  %1387 = vmatpush1.bf16.msra.mxu0 %v1384
  %1388 = vmatprep.subr.bf16.mxu0 0
  %1389 = vmatpush1.bf16.msra.mxu0 0
  %1390 = vmatprep.subr.bf16.mxu0 0
  %1391 = vmatpush1.bf16.msra.mxu0 0
  %1392 = vmatprep.subr.bf16.mxu0 0
  %1393 = vmatpush1.bf16.msra.mxu0 0
  %1394 = vmatprep.subr.bf16.mxu0 0
  %1395 = vmatpush1.bf16.msra.mxu0 0
  %1396 = vmatprep.subr.bf16.mxu0 0
  %1397 = vmatpush1.bf16.msra.mxu0 0
  %1398 = vmatprep.subr.bf16.mxu0 0
  %1399 = vmatpush1.bf16.msra.mxu0 0
  %1400 = vmatprep.subr.bf16.mxu0 0
  %1401 = vmatpush1.bf16.msra.mxu0 0
  %1402 = vmatprep.subr.bf16.mxu0 0
  %1403 = vmatpush1.bf16.msra.mxu0 0
  %1404 = vmatprep.subr.bf16.mxu0 0
  %1405 = vmatpush1.bf16.msra.mxu0 0
  %1406 = vmatprep.subr.bf16.mxu0 0
  %1407 = vmatpush1.bf16.msra.mxu0 0
  %1408 = vmatprep.subr.bf16.mxu0 0
  %1409 = vmatpush1.bf16.msra.mxu0 0
  %1410 = vmatprep.subr.bf16.mxu0 0
  %1411 = vmatpush1.bf16.msra.mxu0 0
  %1412 = vmatprep.subr.bf16.mxu0 0
  %1413 = vmatpush1.bf16.msra.mxu0 0
  %1414 = vmatprep.subr.bf16.mxu0 0
  %1415 = vmatpush1.bf16.msra.mxu0 0
  %1416 = vmatprep.subr.bf16.mxu0 0
  %1417 = vmatpush1.bf16.msra.mxu0 0
  %1418 = vmatprep.mubr.bf16.mxu0 0
  %1419 = vmatmul.mubr.bf16.gmra.mrb[0].mxu0 %v1360
  %v1420 = vpop.f32.mrb[0].mxu0
  %v1421 = vadd.f32 0.0, %v1420
  %v1422 = vpop.f32.mrb[0].mxu0
  %v1423 = vpop.f32.mrb[0].mxu0
  %v1424 = vadd.f32 0.0, %v1423
  %v1425 = vpop.f32.mrb[0].mxu0
  %1426 = vmatprep.mubr.bf16.mxu0 0
  %1427 = vmatmul.mubr.bf16.gmra.mrb[0].mxu0 %v1363
  %v1428 = vpop.f32.mrb[0].mxu0
  %v1429 = vadd.f32 0.0, %v1428
  %v1430 = vpop.f32.mrb[0].mxu0
  %v1431 = vpop.f32.mrb[0].mxu0
  %v1432 = vadd.f32 0.0, %v1431
  %v1433 = vpop.f32.mrb[0].mxu0
  %1434 = vmatprep.mubr.bf16.mxu0 0
  %1435 = vmatmul.mubr.bf16.gmra.mrb[0].mxu0 %v1366
  %v1436 = vpop.f32.mrb[0].mxu0
  %v1437 = vadd.f32 0.0, %v1436
  %v1438 = vpop.f32.mrb[0].mxu0
  %v1439 = vpop.f32.mrb[0].mxu0
  %v1440 = vadd.f32 0.0, %v1439
  %v1441 = vpop.f32.mrb[0].mxu0
  %1442 = vmatprep.mubr.bf16.mxu0 0
  %1443 = vmatmul.mubr.bf16.gmra.mrb[0].mxu0 %v1369
  %v1444 = vpop.f32.mrb[0].mxu0
  %v1445 = vadd.f32 0.0, %v1444
  %v1446 = vpop.f32.mrb[0].mxu0
  %v1447 = vpop.f32.mrb[0].mxu0
  %v1448 = vadd.f32 0.0, %v1447
  %v1449 = vpop.f32.mrb[0].mxu0
  %1450 = vmatprep.mubr.bf16.mxu0 0
  %1451 = vmatmul.mubr.bf16.gmra.mrb[0].mxu0 %v1372
  %v1452 = vpop.f32.mrb[0].mxu0
  %v1453 = vadd.f32 0.0, %v1452
  %v1454 = vpop.f32.mrb[0].mxu0
  %v1455 = vpop.f32.mrb[0].mxu0
  %v1456 = vadd.f32 0.0, %v1455
  %v1457 = vpop.f32.mrb[0].mxu0
  %1458 = vmatprep.mubr.bf16.mxu0 0
  %1459 = vmatmul.mubr.bf16.gmra.mrb[0].mxu0 %v1375
  %v1460 = vpop.f32.mrb[0].mxu0
  %v1461 = vadd.f32 0.0, %v1460
  %v1462 = vpop.f32.mrb[0].mxu0
  %v1463 = vpop.f32.mrb[0].mxu0
  %v1464 = vadd.f32 0.0, %v1463
  %v1465 = vpop.f32.mrb[0].mxu0
  %1466 = vmatprep.mubr.bf16.mxu0 0
  %1467 = vmatmul.mubr.bf16.gmra.mrb[0].mxu0 %v1378
  %v1468 = vpop.f32.mrb[0].mxu0
  %v1469 = vadd.f32 0.0, %v1468
  %v1470 = vpop.f32.mrb[0].mxu0
  %v1471 = vpop.f32.mrb[0].mxu0
  %v1472 = vadd.f32 0.0, %v1471
  %v1473 = vpop.f32.mrb[0].mxu0
  %1474 = vmatprep.mubr.bf16.mxu0 0
  %1475 = vmatmul.mubr.bf16.gmra.mrb[0].mxu0 %v1381
  %v1476 = vpop.f32.mrb[0].mxu0
  %v1477 = vadd.f32 0.0, %v1476
  %v1478 = vpop.f32.mrb[0].mxu0
  %v1479 = vpop.f32.mrb[0].mxu0
  %v1480 = vadd.f32 0.0, %v1479
  %v1481 = vpop.f32.mrb[0].mxu0
  %1482 = vdwg.mxu0
  %v1483 = vadd.f32 %v1317, %v1421
  %v1484 = vadd.f32 %v1318, %v1424
  %v1485 = vadd.f32 %v1319, %v1429
  %v1486 = vadd.f32 %v1320, %v1432
  %v1487 = vadd.f32 %v1321, %v1437
  %v1488 = vadd.f32 %v1322, %v1440
  %v1489 = vadd.f32 %v1323, %v1445
  %v1490 = vadd.f32 %v1324, %v1448
  %v1491 = vadd.f32 %v1325, %v1453
  %v1492 = vadd.f32 %v1326, %v1456
  %v1493 = vadd.f32 %v1327, %v1461
  %v1494 = vadd.f32 %v1328, %v1464
  %v1495 = vadd.f32 %v1329, %v1469
  %v1496 = vadd.f32 %v1330, %v1472
  %v1497 = vadd.f32 %v1331, %v1477
  %v1498 = vadd.f32 %v1332, %v1480
  %v1499 = vld [vmem:[%s1166 + $0x2] sm:$0xff]
  %v1500 = vld [vmem:[%s1166 + $0x12] sm:$0xff]
  %v1501 = vld [vmem:[%s1166 + $0x22] sm:$0xff]
  %v1502 = vld [vmem:[%s1166 + $0x32] sm:$0xff]
  %v1503 = vld [vmem:[%s1166 + $0x42] sm:$0xff]
  %v1504 = vld [vmem:[%s1166 + $0x52] sm:$0xff]
  %v1505 = vld [vmem:[%s1166 + $0x62] sm:$0xff]
  %v1506 = vld [vmem:[%s1166 + $0x72] sm:$0xff]
  %v1507 = vld [vmem:[%s1166 + $0xa2] sm:$0xff]
  %v1508 = vld [vmem:[%s1166 + $0xb2] sm:$0xff]
  %v1509 = vld [vmem:[%s1166 + $0xc2] sm:$0xff]
  %v1510 = vld [vmem:[%s1166 + $0xd2] sm:$0xff]
  %v1511 = vld [vmem:[%s1166 + $0xe2] sm:$0xff]
  %v1512 = vld [vmem:[%s1166 + $0xf2] sm:$0xff]
  %v1513 = vld [vmem:[%s1166 + $0x102] sm:$0xff]
  %v1514 = vld [vmem:[%s1166 + $0x112] sm:$0xff]
  %v1515 = vpack.c.bf16 %v1500, %v1499
  %v1516 = vpack.c.bf16 %v1502, %v1501
  %v1517 = vpack.c.bf16 %v1504, %v1503
  %v1518 = vpack.c.bf16 %v1506, %v1505
  %v1519 = vpack.c.bf16 %v1508, %v1507
  %v1520 = vpack.c.bf16 %v1510, %v1509
  %v1521 = vpack.c.bf16 %v1512, %v1511
  %v1522 = vpack.c.bf16 %v1514, %v1513
  %s1523 = scalar_lea.vmem %s1, 32
  %v1524 = vld [vmem:[%s1523] sm:$0xf]
  %v1526 = vsel %vm27, %v1515, 0
  %v1529 = vsel %vm27, %v1516, 0
  %v1532 = vsel %vm27, %v1517, 0
  %v1535 = vsel %vm27, %v1518, 0
  %v1538 = vsel %vm27, %v1519, 0
  %v1541 = vsel %vm27, %v1520, 0
  %v1544 = vsel %vm27, %v1521, 0
  %v1547 = vsel %vm27, %v1522, 0
  %v1550 = vsel %vm277, %v1524, 0
  %1552 = vmatprep.subr.bf16.mxu0 0
  %1553 = vmatpush1.bf16.msra.mxu0 %v1550
  %1554 = vmatprep.subr.bf16.mxu0 0
  %1555 = vmatpush1.bf16.msra.mxu0 0
  %1556 = vmatprep.subr.bf16.mxu0 0
  %1557 = vmatpush1.bf16.msra.mxu0 0
  %1558 = vmatprep.subr.bf16.mxu0 0
  %1559 = vmatpush1.bf16.msra.mxu0 0
  %1560 = vmatprep.subr.bf16.mxu0 0
  %1561 = vmatpush1.bf16.msra.mxu0 0
  %1562 = vmatprep.subr.bf16.mxu0 0
  %1563 = vmatpush1.bf16.msra.mxu0 0
  %1564 = vmatprep.subr.bf16.mxu0 0
  %1565 = vmatpush1.bf16.msra.mxu0 0
  %1566 = vmatprep.subr.bf16.mxu0 0
  %1567 = vmatpush1.bf16.msra.mxu0 0
  %1568 = vmatprep.subr.bf16.mxu0 0
  %1569 = vmatpush1.bf16.msra.mxu0 0
  %1570 = vmatprep.subr.bf16.mxu0 0
  %1571 = vmatpush1.bf16.msra.mxu0 0
  %1572 = vmatprep.subr.bf16.mxu0 0
  %1573 = vmatpush1.bf16.msra.mxu0 0
  %1574 = vmatprep.subr.bf16.mxu0 0
  %1575 = vmatpush1.bf16.msra.mxu0 0
  %1576 = vmatprep.subr.bf16.mxu0 0
  %1577 = vmatpush1.bf16.msra.mxu0 0
  %1578 = vmatprep.subr.bf16.mxu0 0
  %1579 = vmatpush1.bf16.msra.mxu0 0
  %1580 = vmatprep.subr.bf16.mxu0 0
  %1581 = vmatpush1.bf16.msra.mxu0 0
  %1582 = vmatprep.subr.bf16.mxu0 0
  %1583 = vmatpush1.bf16.msra.mxu0 0
  %1584 = vmatprep.mubr.bf16.mxu0 0
  %1585 = vmatmul.mubr.bf16.gmra.mrb[0].mxu0 %v1526
  %v1586 = vpop.f32.mrb[0].mxu0
  %v1587 = vadd.f32 0.0, %v1586
  %v1588 = vpop.f32.mrb[0].mxu0
  %v1589 = vpop.f32.mrb[0].mxu0
  %v1590 = vadd.f32 0.0, %v1589
  %v1591 = vpop.f32.mrb[0].mxu0
  %1592 = vmatprep.mubr.bf16.mxu0 0
  %1593 = vmatmul.mubr.bf16.gmra.mrb[0].mxu0 %v1529
  %v1594 = vpop.f32.mrb[0].mxu0
  %v1595 = vadd.f32 0.0, %v1594
  %v1596 = vpop.f32.mrb[0].mxu0
  %v1597 = vpop.f32.mrb[0].mxu0
  %v1598 = vadd.f32 0.0, %v1597
  %v1599 = vpop.f32.mrb[0].mxu0
  %1600 = vmatprep.mubr.bf16.mxu0 0
  %1601 = vmatmul.mubr.bf16.gmra.mrb[0].mxu0 %v1532
  %v1602 = vpop.f32.mrb[0].mxu0
  %v1603 = vadd.f32 0.0, %v1602
  %v1604 = vpop.f32.mrb[0].mxu0
  %v1605 = vpop.f32.mrb[0].mxu0
  %v1606 = vadd.f32 0.0, %v1605
  %v1607 = vpop.f32.mrb[0].mxu0
  %1608 = vmatprep.mubr.bf16.mxu0 0
  %1609 = vmatmul.mubr.bf16.gmra.mrb[0].mxu0 %v1535
  %v1610 = vpop.f32.mrb[0].mxu0
  %v1611 = vadd.f32 0.0, %v1610
  %v1612 = vpop.f32.mrb[0].mxu0
  %v1613 = vpop.f32.mrb[0].mxu0
  %v1614 = vadd.f32 0.0, %v1613
  %v1615 = vpop.f32.mrb[0].mxu0
  %1616 = vmatprep.mubr.bf16.mxu0 0
  %1617 = vmatmul.mubr.bf16.gmra.mrb[0].mxu0 %v1538
  %v1618 = vpop.f32.mrb[0].mxu0
  %v1619 = vadd.f32 0.0, %v1618
  %v1620 = vpop.f32.mrb[0].mxu0
  %v1621 = vpop.f32.mrb[0].mxu0
  %v1622 = vadd.f32 0.0, %v1621
  %v1623 = vpop.f32.mrb[0].mxu0
  %1624 = vmatprep.mubr.bf16.mxu0 0
  %1625 = vmatmul.mubr.bf16.gmra.mrb[0].mxu0 %v1541
  %v1626 = vpop.f32.mrb[0].mxu0
  %v1627 = vadd.f32 0.0, %v1626
  %v1628 = vpop.f32.mrb[0].mxu0
  %v1629 = vpop.f32.mrb[0].mxu0
  %v1630 = vadd.f32 0.0, %v1629
  %v1631 = vpop.f32.mrb[0].mxu0
  %1632 = vmatprep.mubr.bf16.mxu0 0
  %1633 = vmatmul.mubr.bf16.gmra.mrb[0].mxu0 %v1544
  %v1634 = vpop.f32.mrb[0].mxu0
  %v1635 = vadd.f32 0.0, %v1634
  %v1636 = vpop.f32.mrb[0].mxu0
  %v1637 = vpop.f32.mrb[0].mxu0
  %v1638 = vadd.f32 0.0, %v1637
  %v1639 = vpop.f32.mrb[0].mxu0
  %1640 = vmatprep.mubr.bf16.mxu0 0
  %1641 = vmatmul.mubr.bf16.gmra.mrb[0].mxu0 %v1547
  %v1642 = vpop.f32.mrb[0].mxu0
  %v1643 = vadd.f32 0.0, %v1642
  %v1644 = vpop.f32.mrb[0].mxu0
  %v1645 = vpop.f32.mrb[0].mxu0
  %v1646 = vadd.f32 0.0, %v1645
  %v1647 = vpop.f32.mrb[0].mxu0
  %1648 = vdwg.mxu0
  %v1649 = vadd.f32 %v1483, %v1587
  %v1650 = vadd.f32 %v1484, %v1590
  %v1651 = vadd.f32 %v1485, %v1595
  %v1652 = vadd.f32 %v1486, %v1598
  %v1653 = vadd.f32 %v1487, %v1603
  %v1654 = vadd.f32 %v1488, %v1606
  %v1655 = vadd.f32 %v1489, %v1611
  %v1656 = vadd.f32 %v1490, %v1614
  %v1657 = vadd.f32 %v1491, %v1619
  %v1658 = vadd.f32 %v1492, %v1622
  %v1659 = vadd.f32 %v1493, %v1627
  %v1660 = vadd.f32 %v1494, %v1630
  %v1661 = vadd.f32 %v1495, %v1635
  %v1662 = vadd.f32 %v1496, %v1638
  %v1663 = vadd.f32 %v1497, %v1643
  %v1664 = vadd.f32 %v1498, %v1646
  %v1665 = vld [vmem:[%s2] sm:$0x1]
  %v1666 = vld [vmem:[%s3] sm:$0x1]
  %v1667 = vsel %vm27, %v1649, 0.0
  %v1668 = vsel %vm27, %v1650, 0.0
  %v1669 = vadd.f32 %v1667, %v1668
  %v1670 = vsel %vm27, %v1651, 0.0
  %v1671 = vadd.f32 %v1669, %v1670
  %v1672 = vsel %vm27, %v1652, 0.0
  %v1673 = vadd.f32 %v1671, %v1672
  %v1674 = vsel %vm27, %v1653, 0.0
  %v1675 = vadd.f32 %v1673, %v1674
  %v1676 = vsel %vm27, %v1654, 0.0
  %v1677 = vadd.f32 %v1675, %v1676
  %v1678 = vsel %vm27, %v1655, 0.0
  %v1679 = vadd.f32 %v1677, %v1678
  %v1680 = vsel %vm27, %v1656, 0.0
  %v1681 = vadd.f32 %v1679, %v1680
  %v1682 = vsel %vm27, %v1657, 0.0
  %v1683 = vadd.f32 %v1681, %v1682
  %v1684 = vsel %vm27, %v1658, 0.0
  %v1685 = vadd.f32 %v1683, %v1684
  %v1686 = vsel %vm27, %v1659, 0.0
  %v1687 = vadd.f32 %v1685, %v1686
  %v1688 = vsel %vm27, %v1660, 0.0
  %v1689 = vadd.f32 %v1687, %v1688
  %v1690 = vsel %vm27, %v1661, 0.0
  %v1691 = vadd.f32 %v1689, %v1690
  %v1692 = vsel %vm27, %v1662, 0.0
  %v1693 = vadd.f32 %v1691, %v1692
  %v1694 = vsel %vm27, %v1663, 0.0
  %v1695 = vadd.f32 %v1693, %v1694
  %v1696 = vsel %vm27, %v1664, 0.0
  %v1697 = vadd.f32 %v1695, %v1696
  %v1698 = vrot.slane %v1697, 4
  %v1699 = vadd.f32 %v1697, %v1698
  %v1700 = vrot.slane %v1699, 2
  %v1701 = vadd.f32 %v1699, %v1700
  %v1702 = vrot.slane %v1701, 1
  %v1703 = vadd.f32 %v1701, %v1702
  %v1704 = vmul.f32 %v1703, 0.0078125
  %v1705 = vmul.f32 %v1649, %v1649
  %v1706 = vmul.f32 %v1650, %v1650
  %v1707 = vmul.f32 %v1651, %v1651
  %v1708 = vmul.f32 %v1652, %v1652
  %v1709 = vmul.f32 %v1653, %v1653
  %v1710 = vmul.f32 %v1654, %v1654
  %v1711 = vmul.f32 %v1655, %v1655
  %v1712 = vmul.f32 %v1656, %v1656
  %v1713 = vmul.f32 %v1657, %v1657
  %v1714 = vmul.f32 %v1658, %v1658
  %v1715 = vmul.f32 %v1659, %v1659
  %v1716 = vmul.f32 %v1660, %v1660
  %v1717 = vmul.f32 %v1661, %v1661
  %v1718 = vmul.f32 %v1662, %v1662
  %v1719 = vmul.f32 %v1663, %v1663
  %v1720 = vmul.f32 %v1664, %v1664
  %v1721 = vsel %vm27, %v1705, 0.0
  %v1722 = vsel %vm27, %v1706, 0.0
  %v1723 = vadd.f32 %v1721, %v1722
  %v1724 = vsel %vm27, %v1707, 0.0
  %v1725 = vadd.f32 %v1723, %v1724
  %v1726 = vsel %vm27, %v1708, 0.0
  %v1727 = vadd.f32 %v1725, %v1726
  %v1728 = vsel %vm27, %v1709, 0.0
  %v1729 = vadd.f32 %v1727, %v1728
  %v1730 = vsel %vm27, %v1710, 0.0
  %v1731 = vadd.f32 %v1729, %v1730
  %v1732 = vsel %vm27, %v1711, 0.0
  %v1733 = vadd.f32 %v1731, %v1732
  %v1734 = vsel %vm27, %v1712, 0.0
  %v1735 = vadd.f32 %v1733, %v1734
  %v1736 = vsel %vm27, %v1713, 0.0
  %v1737 = vadd.f32 %v1735, %v1736
  %v1738 = vsel %vm27, %v1714, 0.0
  %v1739 = vadd.f32 %v1737, %v1738
  %v1740 = vsel %vm27, %v1715, 0.0
  %v1741 = vadd.f32 %v1739, %v1740
  %v1742 = vsel %vm27, %v1716, 0.0
  %v1743 = vadd.f32 %v1741, %v1742
  %v1744 = vsel %vm27, %v1717, 0.0
  %v1745 = vadd.f32 %v1743, %v1744
  %v1746 = vsel %vm27, %v1718, 0.0
  %v1747 = vadd.f32 %v1745, %v1746
  %v1748 = vsel %vm27, %v1719, 0.0
  %v1749 = vadd.f32 %v1747, %v1748
  %v1750 = vsel %vm27, %v1720, 0.0
  %v1751 = vadd.f32 %v1749, %v1750
  %v1752 = vrot.slane %v1751, 4
  %v1753 = vadd.f32 %v1751, %v1752
  %v1754 = vrot.slane %v1753, 2
  %v1755 = vadd.f32 %v1753, %v1754
  %v1756 = vrot.slane %v1755, 1
  %v1757 = vadd.f32 %v1755, %v1756
  %v1758 = vmul.f32 %v1757, 0.0078125
  %v1759 = vmul.f32 %v1704, %v1704
  %v1760 = vsub.f32 %v1758, %v1759
  %v1761 = vadd.f32 %v1760, 1e-05
  %v1762 = vrsqrt.pop %v1761
  %v1763 = vmul.f32 %v1665, %v1762
  %v1764 = vmul.f32 %v1704, %v1763
  %v1765 = vsub.f32 %v1666, %v1764
  %v1767 = vlaneseq
  %v1768 = vshrl.u32 %v1767, 7
  %v1769 = vsub.s32 0, %v1768
  %v1770 = vrot.slane %v1763, %v1769
  %v1772 = vmul.f32 %v1649, %v1770
  %v1773 = vmul.f32 %v1650, %v1770
  %v1774 = vmul.f32 %v1651, %v1770
  %v1775 = vmul.f32 %v1652, %v1770
  %v1776 = vmul.f32 %v1653, %v1770
  %v1777 = vmul.f32 %v1654, %v1770
  %v1778 = vmul.f32 %v1655, %v1770
  %v1779 = vmul.f32 %v1656, %v1770
  %v1780 = vmul.f32 %v1657, %v1770
  %v1781 = vmul.f32 %v1658, %v1770
  %v1782 = vmul.f32 %v1659, %v1770
  %v1783 = vmul.f32 %v1660, %v1770
  %v1784 = vmul.f32 %v1661, %v1770
  %v1785 = vmul.f32 %v1662, %v1770
  %v1786 = vmul.f32 %v1663, %v1770
  %v1787 = vmul.f32 %v1664, %v1770
  %v1789 = vlaneseq
  %v1790 = vshrl.u32 %v1789, 7
  %v1791 = vsub.s32 0, %v1790
  %v1792 = vrot.slane %v1765, %v1791
  %v1794 = vadd.f32 %v1772, %v1792
  %v1795 = vadd.f32 %v1773, %v1792
  %v1796 = vadd.f32 %v1774, %v1792
  %v1797 = vadd.f32 %v1775, %v1792
  %v1798 = vadd.f32 %v1776, %v1792
  %v1799 = vadd.f32 %v1777, %v1792
  %v1800 = vadd.f32 %v1778, %v1792
  %v1801 = vadd.f32 %v1779, %v1792
  %v1802 = vadd.f32 %v1780, %v1792
  %v1803 = vadd.f32 %v1781, %v1792
  %v1804 = vadd.f32 %v1782, %v1792
  %v1805 = vadd.f32 %v1783, %v1792
  %v1806 = vadd.f32 %v1784, %v1792
  %v1807 = vadd.f32 %v1785, %v1792
  %v1808 = vadd.f32 %v1786, %v1792
  %v1809 = vadd.f32 %v1787, %v1792
  %v1810 = vmax.f32 %v1794, 0.0
  %v1811 = vmax.f32 %v1795, 0.0
  %v1812 = vmax.f32 %v1796, 0.0
  %v1813 = vmax.f32 %v1797, 0.0
  %v1814 = vmax.f32 %v1798, 0.0
  %v1815 = vmax.f32 %v1799, 0.0
  %v1816 = vmax.f32 %v1800, 0.0
  %v1817 = vmax.f32 %v1801, 0.0
  %v1818 = vmax.f32 %v1802, 0.0
  %v1819 = vmax.f32 %v1803, 0.0
  %v1820 = vmax.f32 %v1804, 0.0
  %v1821 = vmax.f32 %v1805, 0.0
  %v1822 = vmax.f32 %v1806, 0.0
  %v1823 = vmax.f32 %v1807, 0.0
  %v1824 = vmax.f32 %v1808, 0.0
  %v1825 = vmax.f32 %v1809, 0.0
  %1826 = vst.msk [vmem:[%s184 + $0x1] sm:$0xff] %vm27, %v1810
  %1827 = vst.msk [vmem:[%s184 + $0x11] sm:$0xff] %vm27, %v1811
  %1828 = vst.msk [vmem:[%s184 + $0x21] sm:$0xff] %vm27, %v1812
  %1829 = vst.msk [vmem:[%s184 + $0x31] sm:$0xff] %vm27, %v1813
  %1830 = vst.msk [vmem:[%s184 + $0x41] sm:$0xff] %vm27, %v1814
  %1831 = vst.msk [vmem:[%s184 + $0x51] sm:$0xff] %vm27, %v1815
  %1832 = vst.msk [vmem:[%s184 + $0x61] sm:$0xff] %vm27, %v1816
  %1833 = vst.msk [vmem:[%s184 + $0x71] sm:$0xff] %vm27, %v1817
  %1834 = vst.msk [vmem:[%s184 + $0xa1] sm:$0xff] %vm27, %v1818
  %1835 = vst.msk [vmem:[%s184 + $0xb1] sm:$0xff] %vm27, %v1819
  %1836 = vst.msk [vmem:[%s184 + $0xc1] sm:$0xff] %vm27, %v1820
  %1837 = vst.msk [vmem:[%s184 + $0xd1] sm:$0xff] %vm27, %v1821
  %1838 = vst.msk [vmem:[%s184 + $0xe1] sm:$0xff] %vm27, %v1822
  %1839 = vst.msk [vmem:[%s184 + $0xf1] sm:$0xff] %vm27, %v1823
  %1840 = vst.msk [vmem:[%s184 + $0x101] sm:$0xff] %vm27, %v1824
  %1841 = vst.msk [vmem:[%s184 + $0x111] sm:$0xff] %vm27, %v1825
  %v1842 = vld [vmem:[#allocation2] sm:$0xff]
  %v1843 = vld [vmem:[#allocation2 + $0x10] sm:$0xff]
  %v1844 = vld [vmem:[#allocation2 + $0x20] sm:$0xff]
  %v1845 = vld [vmem:[#allocation2 + $0x30] sm:$0xff]
  %v1846 = vld [vmem:[#allocation2 + $0x40] sm:$0xff]
  %v1847 = vld [vmem:[#allocation2 + $0x50] sm:$0xff]
  %v1848 = vld [vmem:[#allocation2 + $0x60] sm:$0xff]
  %v1849 = vld [vmem:[#allocation2 + $0x70] sm:$0xff]
  %v1850 = vld [vmem:[#allocation2 + $0xa0] sm:$0xff]
  %v1851 = vld [vmem:[#allocation2 + $0xb0] sm:$0xff]
  %v1852 = vld [vmem:[#allocation2 + $0xc0] sm:$0xff]
  %v1853 = vld [vmem:[#allocation2 + $0xd0] sm:$0xff]
  %v1854 = vld [vmem:[#allocation2 + $0xe0] sm:$0xff]
  %v1855 = vld [vmem:[#allocation2 + $0xf0] sm:$0xff]
  %v1856 = vld [vmem:[#allocation2 + $0x100] sm:$0xff]
  %v1857 = vld [vmem:[#allocation2 + $0x110] sm:$0xff]
  %v1858 = vpack.c.bf16 %v1843, %v1842
  %v1859 = vpack.c.bf16 %v1845, %v1844
  %v1860 = vpack.c.bf16 %v1847, %v1846
  %v1861 = vpack.c.bf16 %v1849, %v1848
  %v1862 = vpack.c.bf16 %v1851, %v1850
  %v1863 = vpack.c.bf16 %v1853, %v1852
  %v1864 = vpack.c.bf16 %v1855, %v1854
  %v1865 = vpack.c.bf16 %v1857, %v1856
  %v1866 = vld [vmem:[%s4] sm:$0xf]
  %v1867 = vld [vmem:[#allocation2 + $0x1] sm:$0xff]
  %v1868 = vld [vmem:[#allocation2 + $0x11] sm:$0xff]
  %v1869 = vld [vmem:[#allocation2 + $0x21] sm:$0xff]
  %v1870 = vld [vmem:[#allocation2 + $0x31] sm:$0xff]
  %v1871 = vld [vmem:[#allocation2 + $0x41] sm:$0xff]
  %v1872 = vld [vmem:[#allocation2 + $0x51] sm:$0xff]
  %v1873 = vld [vmem:[#allocation2 + $0x61] sm:$0xff]
  %v1874 = vld [vmem:[#allocation2 + $0x71] sm:$0xff]
  %v1875 = vld [vmem:[#allocation2 + $0xa1] sm:$0xff]
  %v1876 = vld [vmem:[#allocation2 + $0xb1] sm:$0xff]
  %v1877 = vld [vmem:[#allocation2 + $0xc1] sm:$0xff]
  %v1878 = vld [vmem:[#allocation2 + $0xd1] sm:$0xff]
  %v1879 = vld [vmem:[#allocation2 + $0xe1] sm:$0xff]
  %v1880 = vld [vmem:[#allocation2 + $0xf1] sm:$0xff]
  %v1881 = vld [vmem:[#allocation2 + $0x101] sm:$0xff]
  %v1882 = vld [vmem:[#allocation2 + $0x111] sm:$0xff]
  %v1883 = vpack.c.bf16 %v1868, %v1867
  %v1884 = vpack.c.bf16 %v1870, %v1869
  %v1885 = vpack.c.bf16 %v1872, %v1871
  %v1886 = vpack.c.bf16 %v1874, %v1873
  %v1887 = vpack.c.bf16 %v1876, %v1875
  %v1888 = vpack.c.bf16 %v1878, %v1877
  %v1889 = vpack.c.bf16 %v1880, %v1879
  %v1890 = vpack.c.bf16 %v1882, %v1881
  %s1891 = scalar_lea.vmem %s4, 4
  %v1892 = vld [vmem:[%s1891] sm:$0xf]
  %v1894 = vsel %vm27, %v1883, 0
  %v1897 = vsel %vm27, %v1884, 0
  %v1900 = vsel %vm27, %v1885, 0
  %v1903 = vsel %vm27, %v1886, 0
  %v1906 = vsel %vm27, %v1887, 0
  %v1909 = vsel %vm27, %v1888, 0
  %v1912 = vsel %vm27, %v1889, 0
  %v1915 = vsel %vm27, %v1890, 0
  %v1918 = vsel %vm277, %v1892, 0
  %1920 = vmatprep.subr.bf16.mxu0 0
  %1921 = vmatpush1.bf16.msra.mxu0 %v1918
  %1922 = vmatprep.subr.bf16.mxu0 0
  %1923 = vmatpush1.bf16.msra.mxu0 0
  %1924 = vmatprep.subr.bf16.mxu0 0
  %1925 = vmatpush1.bf16.msra.mxu0 0
  %1926 = vmatprep.subr.bf16.mxu0 0
  %1927 = vmatpush1.bf16.msra.mxu0 0
  %1928 = vmatprep.subr.bf16.mxu0 0
  %1929 = vmatpush1.bf16.msra.mxu0 0
  %1930 = vmatprep.subr.bf16.mxu0 0
  %1931 = vmatpush1.bf16.msra.mxu0 0
  %1932 = vmatprep.subr.bf16.mxu0 0
  %1933 = vmatpush1.bf16.msra.mxu0 0
  %1934 = vmatprep.subr.bf16.mxu0 0
  %1935 = vmatpush1.bf16.msra.mxu0 0
  %1936 = vmatprep.subr.bf16.mxu0 0
  %1937 = vmatpush1.bf16.msra.mxu0 0
  %1938 = vmatprep.subr.bf16.mxu0 0
  %1939 = vmatpush1.bf16.msra.mxu0 0
  %1940 = vmatprep.subr.bf16.mxu0 0
  %1941 = vmatpush1.bf16.msra.mxu0 0
  %1942 = vmatprep.subr.bf16.mxu0 0
  %1943 = vmatpush1.bf16.msra.mxu0 0
  %1944 = vmatprep.subr.bf16.mxu0 0
  %1945 = vmatpush1.bf16.msra.mxu0 0
  %1946 = vmatprep.subr.bf16.mxu0 0
  %1947 = vmatpush1.bf16.msra.mxu0 0
  %1948 = vmatprep.subr.bf16.mxu0 0
  %1949 = vmatpush1.bf16.msra.mxu0 0
  %1950 = vmatprep.subr.bf16.mxu0 0
  %1951 = vmatpush1.bf16.msra.mxu0 0
  %1952 = vmatprep.mubr.bf16.mxu0 0
  %1953 = vmatmul.mubr.bf16.gmra.mrb[0].mxu0 %v1894
  %v1954 = vpop.f32.mrb[0].mxu0
  %v1955 = vadd.f32 0.0, %v1954
  %v1956 = vpop.f32.mrb[0].mxu0
  %v1957 = vpop.f32.mrb[0].mxu0
  %v1958 = vadd.f32 0.0, %v1957
  %v1959 = vpop.f32.mrb[0].mxu0
  %1960 = vmatprep.mubr.bf16.mxu0 0
  %1961 = vmatmul.mubr.bf16.gmra.mrb[0].mxu0 %v1897
  %v1962 = vpop.f32.mrb[0].mxu0
  %v1963 = vadd.f32 0.0, %v1962
  %v1964 = vpop.f32.mrb[0].mxu0
  %v1965 = vpop.f32.mrb[0].mxu0
  %v1966 = vadd.f32 0.0, %v1965
  %v1967 = vpop.f32.mrb[0].mxu0
  %1968 = vmatprep.mubr.bf16.mxu0 0
  %1969 = vmatmul.mubr.bf16.gmra.mrb[0].mxu0 %v1900
  %v1970 = vpop.f32.mrb[0].mxu0
  %v1971 = vadd.f32 0.0, %v1970
  %v1972 = vpop.f32.mrb[0].mxu0
  %v1973 = vpop.f32.mrb[0].mxu0
  %v1974 = vadd.f32 0.0, %v1973
  %v1975 = vpop.f32.mrb[0].mxu0
  %1976 = vmatprep.mubr.bf16.mxu0 0
  %1977 = vmatmul.mubr.bf16.gmra.mrb[0].mxu0 %v1903
  %v1978 = vpop.f32.mrb[0].mxu0
  %v1979 = vadd.f32 0.0, %v1978
  %v1980 = vpop.f32.mrb[0].mxu0
  %v1981 = vpop.f32.mrb[0].mxu0
  %v1982 = vadd.f32 0.0, %v1981
  %v1983 = vpop.f32.mrb[0].mxu0
  %1984 = vmatprep.mubr.bf16.mxu0 0
  %1985 = vmatmul.mubr.bf16.gmra.mrb[0].mxu0 %v1906
  %v1986 = vpop.f32.mrb[0].mxu0
  %v1987 = vadd.f32 0.0, %v1986
  %v1988 = vpop.f32.mrb[0].mxu0
  %v1989 = vpop.f32.mrb[0].mxu0
  %v1990 = vadd.f32 0.0, %v1989
  %v1991 = vpop.f32.mrb[0].mxu0
  %1992 = vmatprep.mubr.bf16.mxu0 0
  %1993 = vmatmul.mubr.bf16.gmra.mrb[0].mxu0 %v1909
  %v1994 = vpop.f32.mrb[0].mxu0
  %v1995 = vadd.f32 0.0, %v1994
  %v1996 = vpop.f32.mrb[0].mxu0
  %v1997 = vpop.f32.mrb[0].mxu0
  %v1998 = vadd.f32 0.0, %v1997
  %v1999 = vpop.f32.mrb[0].mxu0
  %2000 = vmatprep.mubr.bf16.mxu0 0
  %2001 = vmatmul.mubr.bf16.gmra.mrb[0].mxu0 %v1912
  %v2002 = vpop.f32.mrb[0].mxu0
  %v2003 = vadd.f32 0.0, %v2002
  %v2004 = vpop.f32.mrb[0].mxu0
  %v2005 = vpop.f32.mrb[0].mxu0
  %v2006 = vadd.f32 0.0, %v2005
  %v2007 = vpop.f32.mrb[0].mxu0
  %2008 = vmatprep.mubr.bf16.mxu0 0
  %2009 = vmatmul.mubr.bf16.gmra.mrb[0].mxu0 %v1915
  %v2010 = vpop.f32.mrb[0].mxu0
  %v2011 = vadd.f32 0.0, %v2010
  %v2012 = vpop.f32.mrb[0].mxu0
  %v2013 = vpop.f32.mrb[0].mxu0
  %v2014 = vadd.f32 0.0, %v2013
  %v2015 = vpop.f32.mrb[0].mxu0
  %2016 = vdwg.mxu0
  %v2018 = vsel %vm27, %v1858, 0
  %v2021 = vsel %vm27, %v1859, 0
  %v2024 = vsel %vm27, %v1860, 0
  %v2027 = vsel %vm27, %v1861, 0
  %v2030 = vsel %vm27, %v1862, 0
  %v2033 = vsel %vm27, %v1863, 0
  %v2036 = vsel %vm27, %v1864, 0
  %v2039 = vsel %vm27, %v1865, 0
  %v2042 = vsel %vm277, %v1866, 0
  %2044 = vmatprep.subr.bf16.mxu0 0
  %2045 = vmatpush1.bf16.msra.mxu0 %v2042
  %2046 = vmatprep.subr.bf16.mxu0 0
  %2047 = vmatpush1.bf16.msra.mxu0 0
  %2048 = vmatprep.subr.bf16.mxu0 0
  %2049 = vmatpush1.bf16.msra.mxu0 0
  %2050 = vmatprep.subr.bf16.mxu0 0
  %2051 = vmatpush1.bf16.msra.mxu0 0
  %2052 = vmatprep.subr.bf16.mxu0 0
  %2053 = vmatpush1.bf16.msra.mxu0 0
  %2054 = vmatprep.subr.bf16.mxu0 0
  %2055 = vmatpush1.bf16.msra.mxu0 0
  %2056 = vmatprep.subr.bf16.mxu0 0
  %2057 = vmatpush1.bf16.msra.mxu0 0
  %2058 = vmatprep.subr.bf16.mxu0 0
  %2059 = vmatpush1.bf16.msra.mxu0 0
  %2060 = vmatprep.subr.bf16.mxu0 0
  %2061 = vmatpush1.bf16.msra.mxu0 0
  %2062 = vmatprep.subr.bf16.mxu0 0
  %2063 = vmatpush1.bf16.msra.mxu0 0
  %2064 = vmatprep.subr.bf16.mxu0 0
  %2065 = vmatpush1.bf16.msra.mxu0 0
  %2066 = vmatprep.subr.bf16.mxu0 0
  %2067 = vmatpush1.bf16.msra.mxu0 0
  %2068 = vmatprep.subr.bf16.mxu0 0
  %2069 = vmatpush1.bf16.msra.mxu0 0
  %2070 = vmatprep.subr.bf16.mxu0 0
  %2071 = vmatpush1.bf16.msra.mxu0 0
  %2072 = vmatprep.subr.bf16.mxu0 0
  %2073 = vmatpush1.bf16.msra.mxu0 0
  %2074 = vmatprep.subr.bf16.mxu0 0
  %2075 = vmatpush1.bf16.msra.mxu0 0
  %2076 = vmatprep.mubr.bf16.mxu0 0
  %2077 = vmatmul.mubr.bf16.gmra.mrb[0].mxu0 %v2018
  %v2078 = vpop.f32.mrb[0].mxu0
  %v2079 = vadd.f32 %v1955, %v2078
  %v2080 = vpop.f32.mrb[0].mxu0
  %v2081 = vpop.f32.mrb[0].mxu0
  %v2082 = vadd.f32 %v1958, %v2081
  %v2083 = vpop.f32.mrb[0].mxu0
  %2084 = vmatprep.mubr.bf16.mxu0 0
  %2085 = vmatmul.mubr.bf16.gmra.mrb[0].mxu0 %v2021
  %v2086 = vpop.f32.mrb[0].mxu0
  %v2087 = vadd.f32 %v1963, %v2086
  %v2088 = vpop.f32.mrb[0].mxu0
  %v2089 = vpop.f32.mrb[0].mxu0
  %v2090 = vadd.f32 %v1966, %v2089
  %v2091 = vpop.f32.mrb[0].mxu0
  %2092 = vmatprep.mubr.bf16.mxu0 0
  %2093 = vmatmul.mubr.bf16.gmra.mrb[0].mxu0 %v2024
  %v2094 = vpop.f32.mrb[0].mxu0
  %v2095 = vadd.f32 %v1971, %v2094
  %v2096 = vpop.f32.mrb[0].mxu0
  %v2097 = vpop.f32.mrb[0].mxu0
  %v2098 = vadd.f32 %v1974, %v2097
  %v2099 = vpop.f32.mrb[0].mxu0
  %2100 = vmatprep.mubr.bf16.mxu0 0
  %2101 = vmatmul.mubr.bf16.gmra.mrb[0].mxu0 %v2027
  %v2102 = vpop.f32.mrb[0].mxu0
  %v2103 = vadd.f32 %v1979, %v2102
  %v2104 = vpop.f32.mrb[0].mxu0
  %v2105 = vpop.f32.mrb[0].mxu0
  %v2106 = vadd.f32 %v1982, %v2105
  %v2107 = vpop.f32.mrb[0].mxu0
  %2108 = vmatprep.mubr.bf16.mxu0 0
  %2109 = vmatmul.mubr.bf16.gmra.mrb[0].mxu0 %v2030
  %v2110 = vpop.f32.mrb[0].mxu0
  %v2111 = vadd.f32 %v1987, %v2110
  %v2112 = vpop.f32.mrb[0].mxu0
  %v2113 = vpop.f32.mrb[0].mxu0
  %v2114 = vadd.f32 %v1990, %v2113
  %v2115 = vpop.f32.mrb[0].mxu0
  %2116 = vmatprep.mubr.bf16.mxu0 0
  %2117 = vmatmul.mubr.bf16.gmra.mrb[0].mxu0 %v2033
  %v2118 = vpop.f32.mrb[0].mxu0
  %v2119 = vadd.f32 %v1995, %v2118
  %v2120 = vpop.f32.mrb[0].mxu0
  %v2121 = vpop.f32.mrb[0].mxu0
  %v2122 = vadd.f32 %v1998, %v2121
  %v2123 = vpop.f32.mrb[0].mxu0
  %2124 = vmatprep.mubr.bf16.mxu0 0
  %2125 = vmatmul.mubr.bf16.gmra.mrb[0].mxu0 %v2036
  %v2126 = vpop.f32.mrb[0].mxu0
  %v2127 = vadd.f32 %v2003, %v2126
  %v2128 = vpop.f32.mrb[0].mxu0
  %v2129 = vpop.f32.mrb[0].mxu0
  %v2130 = vadd.f32 %v2006, %v2129
  %v2131 = vpop.f32.mrb[0].mxu0
  %2132 = vmatprep.mubr.bf16.mxu0 0
  %2133 = vmatmul.mubr.bf16.gmra.mrb[0].mxu0 %v2039
  %v2134 = vpop.f32.mrb[0].mxu0
  %v2135 = vadd.f32 %v2011, %v2134
  %v2136 = vpop.f32.mrb[0].mxu0
  %v2137 = vpop.f32.mrb[0].mxu0
  %v2138 = vadd.f32 %v2014, %v2137
  %v2139 = vpop.f32.mrb[0].mxu0
  %2140 = vdwg.mxu0
  %v2141 = vld [vmem:[#allocation2 + $0x2] sm:$0xff]
  %v2142 = vld [vmem:[#allocation2 + $0x12] sm:$0xff]
  %v2143 = vld [vmem:[#allocation2 + $0x22] sm:$0xff]
  %v2144 = vld [vmem:[#allocation2 + $0x32] sm:$0xff]
  %v2145 = vld [vmem:[#allocation2 + $0x42] sm:$0xff]
  %v2146 = vld [vmem:[#allocation2 + $0x52] sm:$0xff]
  %v2147 = vld [vmem:[#allocation2 + $0x62] sm:$0xff]
  %v2148 = vld [vmem:[#allocation2 + $0x72] sm:$0xff]
  %v2149 = vld [vmem:[#allocation2 + $0xa2] sm:$0xff]
  %v2150 = vld [vmem:[#allocation2 + $0xb2] sm:$0xff]
  %v2151 = vld [vmem:[#allocation2 + $0xc2] sm:$0xff]
  %v2152 = vld [vmem:[#allocation2 + $0xd2] sm:$0xff]
  %v2153 = vld [vmem:[#allocation2 + $0xe2] sm:$0xff]
  %v2154 = vld [vmem:[#allocation2 + $0xf2] sm:$0xff]
  %v2155 = vld [vmem:[#allocation2 + $0x102] sm:$0xff]
  %v2156 = vld [vmem:[#allocation2 + $0x112] sm:$0xff]
  %v2157 = vpack.c.bf16 %v2142, %v2141
  %v2158 = vpack.c.bf16 %v2144, %v2143
  %v2159 = vpack.c.bf16 %v2146, %v2145
  %v2160 = vpack.c.bf16 %v2148, %v2147
  %v2161 = vpack.c.bf16 %v2150, %v2149
  %v2162 = vpack.c.bf16 %v2152, %v2151
  %v2163 = vpack.c.bf16 %v2154, %v2153
  %v2164 = vpack.c.bf16 %v2156, %v2155
  %s2165 = scalar_lea.vmem %s4, 8
  %v2166 = vld [vmem:[%s2165] sm:$0xf]
  %v2168 = vsel %vm27, %v2157, 0
  %v2171 = vsel %vm27, %v2158, 0
  %v2174 = vsel %vm27, %v2159, 0
  %v2177 = vsel %vm27, %v2160, 0
  %v2180 = vsel %vm27, %v2161, 0
  %v2183 = vsel %vm27, %v2162, 0
  %v2186 = vsel %vm27, %v2163, 0
  %v2189 = vsel %vm27, %v2164, 0
  %v2192 = vsel %vm277, %v2166, 0
  %2194 = vmatprep.subr.bf16.mxu0 0
  %2195 = vmatpush1.bf16.msra.mxu0 %v2192
  %2196 = vmatprep.subr.bf16.mxu0 0
  %2197 = vmatpush1.bf16.msra.mxu0 0
  %2198 = vmatprep.subr.bf16.mxu0 0
  %2199 = vmatpush1.bf16.msra.mxu0 0
  %2200 = vmatprep.subr.bf16.mxu0 0
  %2201 = vmatpush1.bf16.msra.mxu0 0
  %2202 = vmatprep.subr.bf16.mxu0 0
  %2203 = vmatpush1.bf16.msra.mxu0 0
  %2204 = vmatprep.subr.bf16.mxu0 0
  %2205 = vmatpush1.bf16.msra.mxu0 0
  %2206 = vmatprep.subr.bf16.mxu0 0
  %2207 = vmatpush1.bf16.msra.mxu0 0
  %2208 = vmatprep.subr.bf16.mxu0 0
  %2209 = vmatpush1.bf16.msra.mxu0 0
  %2210 = vmatprep.subr.bf16.mxu0 0
  %2211 = vmatpush1.bf16.msra.mxu0 0
  %2212 = vmatprep.subr.bf16.mxu0 0
  %2213 = vmatpush1.bf16.msra.mxu0 0
  %2214 = vmatprep.subr.bf16.mxu0 0
  %2215 = vmatpush1.bf16.msra.mxu0 0
  %2216 = vmatprep.subr.bf16.mxu0 0
  %2217 = vmatpush1.bf16.msra.mxu0 0
  %2218 = vmatprep.subr.bf16.mxu0 0
  %2219 = vmatpush1.bf16.msra.mxu0 0
  %2220 = vmatprep.subr.bf16.mxu0 0
  %2221 = vmatpush1.bf16.msra.mxu0 0
  %2222 = vmatprep.subr.bf16.mxu0 0
  %2223 = vmatpush1.bf16.msra.mxu0 0
  %2224 = vmatprep.subr.bf16.mxu0 0
  %2225 = vmatpush1.bf16.msra.mxu0 0
  %2226 = vmatprep.mubr.bf16.mxu0 0
  %2227 = vmatmul.mubr.bf16.gmra.mrb[0].mxu0 %v2168
  %v2228 = vpop.f32.mrb[0].mxu0
  %v2229 = vadd.f32 0.0, %v2228
  %v2230 = vpop.f32.mrb[0].mxu0
  %v2231 = vpop.f32.mrb[0].mxu0
  %v2232 = vadd.f32 0.0, %v2231
  %v2233 = vpop.f32.mrb[0].mxu0
  %2234 = vmatprep.mubr.bf16.mxu0 0
  %2235 = vmatmul.mubr.bf16.gmra.mrb[0].mxu0 %v2171
  %v2236 = vpop.f32.mrb[0].mxu0
  %v2237 = vadd.f32 0.0, %v2236
  %v2238 = vpop.f32.mrb[0].mxu0
  %v2239 = vpop.f32.mrb[0].mxu0
  %v2240 = vadd.f32 0.0, %v2239
  %v2241 = vpop.f32.mrb[0].mxu0
  %2242 = vmatprep.mubr.bf16.mxu0 0
  %2243 = vmatmul.mubr.bf16.gmra.mrb[0].mxu0 %v2174
  %v2244 = vpop.f32.mrb[0].mxu0
  %v2245 = vadd.f32 0.0, %v2244
  %v2246 = vpop.f32.mrb[0].mxu0
  %v2247 = vpop.f32.mrb[0].mxu0
  %v2248 = vadd.f32 0.0, %v2247
  %v2249 = vpop.f32.mrb[0].mxu0
  %2250 = vmatprep.mubr.bf16.mxu0 0
  %2251 = vmatmul.mubr.bf16.gmra.mrb[0].mxu0 %v2177
  %v2252 = vpop.f32.mrb[0].mxu0
  %v2253 = vadd.f32 0.0, %v2252
  %v2254 = vpop.f32.mrb[0].mxu0
  %v2255 = vpop.f32.mrb[0].mxu0
  %v2256 = vadd.f32 0.0, %v2255
  %v2257 = vpop.f32.mrb[0].mxu0
  %2258 = vmatprep.mubr.bf16.mxu0 0
  %2259 = vmatmul.mubr.bf16.gmra.mrb[0].mxu0 %v2180
  %v2260 = vpop.f32.mrb[0].mxu0
  %v2261 = vadd.f32 0.0, %v2260
  %v2262 = vpop.f32.mrb[0].mxu0
  %v2263 = vpop.f32.mrb[0].mxu0
  %v2264 = vadd.f32 0.0, %v2263
  %v2265 = vpop.f32.mrb[0].mxu0
  %2266 = vmatprep.mubr.bf16.mxu0 0
  %2267 = vmatmul.mubr.bf16.gmra.mrb[0].mxu0 %v2183
  %v2268 = vpop.f32.mrb[0].mxu0
  %v2269 = vadd.f32 0.0, %v2268
  %v2270 = vpop.f32.mrb[0].mxu0
  %v2271 = vpop.f32.mrb[0].mxu0
  %v2272 = vadd.f32 0.0, %v2271
  %v2273 = vpop.f32.mrb[0].mxu0
  %2274 = vmatprep.mubr.bf16.mxu0 0
  %2275 = vmatmul.mubr.bf16.gmra.mrb[0].mxu0 %v2186
  %v2276 = vpop.f32.mrb[0].mxu0
  %v2277 = vadd.f32 0.0, %v2276
  %v2278 = vpop.f32.mrb[0].mxu0
  %v2279 = vpop.f32.mrb[0].mxu0
  %v2280 = vadd.f32 0.0, %v2279
  %v2281 = vpop.f32.mrb[0].mxu0
  %2282 = vmatprep.mubr.bf16.mxu0 0
  %2283 = vmatmul.mubr.bf16.gmra.mrb[0].mxu0 %v2189
  %v2284 = vpop.f32.mrb[0].mxu0
  %v2285 = vadd.f32 0.0, %v2284
  %v2286 = vpop.f32.mrb[0].mxu0
  %v2287 = vpop.f32.mrb[0].mxu0
  %v2288 = vadd.f32 0.0, %v2287
  %v2289 = vpop.f32.mrb[0].mxu0
  %2290 = vdwg.mxu0
  %v2291 = vadd.f32 %v2079, %v2229
  %v2292 = vadd.f32 %v2082, %v2232
  %v2293 = vadd.f32 %v2087, %v2237
  %v2294 = vadd.f32 %v2090, %v2240
  %v2295 = vadd.f32 %v2095, %v2245
  %v2296 = vadd.f32 %v2098, %v2248
  %v2297 = vadd.f32 %v2103, %v2253
  %v2298 = vadd.f32 %v2106, %v2256
  %v2299 = vadd.f32 %v2111, %v2261
  %v2300 = vadd.f32 %v2114, %v2264
  %v2301 = vadd.f32 %v2119, %v2269
  %v2302 = vadd.f32 %v2122, %v2272
  %v2303 = vadd.f32 %v2127, %v2277
  %v2304 = vadd.f32 %v2130, %v2280
  %v2305 = vadd.f32 %v2135, %v2285
  %v2306 = vadd.f32 %v2138, %v2288
  %v2307 = vld [vmem:[%s184] sm:$0xff]
  %v2308 = vld [vmem:[%s184 + $0x10] sm:$0xff]
  %v2309 = vld [vmem:[%s184 + $0x20] sm:$0xff]
  %v2310 = vld [vmem:[%s184 + $0x30] sm:$0xff]
  %v2311 = vld [vmem:[%s184 + $0x40] sm:$0xff]
  %v2312 = vld [vmem:[%s184 + $0x50] sm:$0xff]
  %v2313 = vld [vmem:[%s184 + $0x60] sm:$0xff]
  %v2314 = vld [vmem:[%s184 + $0x70] sm:$0xff]
  %v2315 = vld [vmem:[%s184 + $0xa0] sm:$0xff]
  %v2316 = vld [vmem:[%s184 + $0xb0] sm:$0xff]
  %v2317 = vld [vmem:[%s184 + $0xc0] sm:$0xff]
  %v2318 = vld [vmem:[%s184 + $0xd0] sm:$0xff]
  %v2319 = vld [vmem:[%s184 + $0xe0] sm:$0xff]
  %v2320 = vld [vmem:[%s184 + $0xf0] sm:$0xff]
  %v2321 = vld [vmem:[%s184 + $0x100] sm:$0xff]
  %v2322 = vld [vmem:[%s184 + $0x110] sm:$0xff]
  %v2323 = vpack.c.bf16 %v2308, %v2307
  %v2324 = vpack.c.bf16 %v2310, %v2309
  %v2325 = vpack.c.bf16 %v2312, %v2311
  %v2326 = vpack.c.bf16 %v2314, %v2313
  %v2327 = vpack.c.bf16 %v2316, %v2315
  %v2328 = vpack.c.bf16 %v2318, %v2317
  %v2329 = vpack.c.bf16 %v2320, %v2319
  %v2330 = vpack.c.bf16 %v2322, %v2321
  %s2331 = scalar_lea.vmem %s4, 12
  %v2332 = vld [vmem:[%s2331] sm:$0xf]
  %v2334 = vsel %vm27, %v2323, 0
  %v2337 = vsel %vm27, %v2324, 0
  %v2340 = vsel %vm27, %v2325, 0
  %v2343 = vsel %vm27, %v2326, 0
  %v2346 = vsel %vm27, %v2327, 0
  %v2349 = vsel %vm27, %v2328, 0
  %v2352 = vsel %vm27, %v2329, 0
  %v2355 = vsel %vm27, %v2330, 0
  %v2358 = vsel %vm277, %v2332, 0
  %2360 = vmatprep.subr.bf16.mxu0 0
  %2361 = vmatpush1.bf16.msra.mxu0 %v2358
  %2362 = vmatprep.subr.bf16.mxu0 0
  %2363 = vmatpush1.bf16.msra.mxu0 0
  %2364 = vmatprep.subr.bf16.mxu0 0
  %2365 = vmatpush1.bf16.msra.mxu0 0
  %2366 = vmatprep.subr.bf16.mxu0 0
  %2367 = vmatpush1.bf16.msra.mxu0 0
  %2368 = vmatprep.subr.bf16.mxu0 0
  %2369 = vmatpush1.bf16.msra.mxu0 0
  %2370 = vmatprep.subr.bf16.mxu0 0
  %2371 = vmatpush1.bf16.msra.mxu0 0
  %2372 = vmatprep.subr.bf16.mxu0 0
  %2373 = vmatpush1.bf16.msra.mxu0 0
  %2374 = vmatprep.subr.bf16.mxu0 0
  %2375 = vmatpush1.bf16.msra.mxu0 0
  %2376 = vmatprep.subr.bf16.mxu0 0
  %2377 = vmatpush1.bf16.msra.mxu0 0
  %2378 = vmatprep.subr.bf16.mxu0 0
  %2379 = vmatpush1.bf16.msra.mxu0 0
  %2380 = vmatprep.subr.bf16.mxu0 0
  %2381 = vmatpush1.bf16.msra.mxu0 0
  %2382 = vmatprep.subr.bf16.mxu0 0
  %2383 = vmatpush1.bf16.msra.mxu0 0
  %2384 = vmatprep.subr.bf16.mxu0 0
  %2385 = vmatpush1.bf16.msra.mxu0 0
  %2386 = vmatprep.subr.bf16.mxu0 0
  %2387 = vmatpush1.bf16.msra.mxu0 0
  %2388 = vmatprep.subr.bf16.mxu0 0
  %2389 = vmatpush1.bf16.msra.mxu0 0
  %2390 = vmatprep.subr.bf16.mxu0 0
  %2391 = vmatpush1.bf16.msra.mxu0 0
  %2392 = vmatprep.mubr.bf16.mxu0 0
  %2393 = vmatmul.mubr.bf16.gmra.mrb[0].mxu0 %v2334
  %v2394 = vpop.f32.mrb[0].mxu0
  %v2395 = vadd.f32 0.0, %v2394
  %v2396 = vpop.f32.mrb[0].mxu0
  %v2397 = vpop.f32.mrb[0].mxu0
  %v2398 = vadd.f32 0.0, %v2397
  %v2399 = vpop.f32.mrb[0].mxu0
  %2400 = vmatprep.mubr.bf16.mxu0 0
  %2401 = vmatmul.mubr.bf16.gmra.mrb[0].mxu0 %v2337
  %v2402 = vpop.f32.mrb[0].mxu0
  %v2403 = vadd.f32 0.0, %v2402
  %v2404 = vpop.f32.mrb[0].mxu0
  %v2405 = vpop.f32.mrb[0].mxu0
  %v2406 = vadd.f32 0.0, %v2405
  %v2407 = vpop.f32.mrb[0].mxu0
  %2408 = vmatprep.mubr.bf16.mxu0 0
  %2409 = vmatmul.mubr.bf16.gmra.mrb[0].mxu0 %v2340
  %v2410 = vpop.f32.mrb[0].mxu0
  %v2411 = vadd.f32 0.0, %v2410
  %v2412 = vpop.f32.mrb[0].mxu0
  %v2413 = vpop.f32.mrb[0].mxu0
  %v2414 = vadd.f32 0.0, %v2413
  %v2415 = vpop.f32.mrb[0].mxu0
  %2416 = vmatprep.mubr.bf16.mxu0 0
  %2417 = vmatmul.mubr.bf16.gmra.mrb[0].mxu0 %v2343
  %v2418 = vpop.f32.mrb[0].mxu0
  %v2419 = vadd.f32 0.0, %v2418
  %v2420 = vpop.f32.mrb[0].mxu0
  %v2421 = vpop.f32.mrb[0].mxu0
  %v2422 = vadd.f32 0.0, %v2421
  %v2423 = vpop.f32.mrb[0].mxu0
  %2424 = vmatprep.mubr.bf16.mxu0 0
  %2425 = vmatmul.mubr.bf16.gmra.mrb[0].mxu0 %v2346
  %v2426 = vpop.f32.mrb[0].mxu0
  %v2427 = vadd.f32 0.0, %v2426
  %v2428 = vpop.f32.mrb[0].mxu0
  %v2429 = vpop.f32.mrb[0].mxu0
  %v2430 = vadd.f32 0.0, %v2429
  %v2431 = vpop.f32.mrb[0].mxu0
  %2432 = vmatprep.mubr.bf16.mxu0 0
  %2433 = vmatmul.mubr.bf16.gmra.mrb[0].mxu0 %v2349
  %v2434 = vpop.f32.mrb[0].mxu0
  %v2435 = vadd.f32 0.0, %v2434
  %v2436 = vpop.f32.mrb[0].mxu0
  %v2437 = vpop.f32.mrb[0].mxu0
  %v2438 = vadd.f32 0.0, %v2437
  %v2439 = vpop.f32.mrb[0].mxu0
  %2440 = vmatprep.mubr.bf16.mxu0 0
  %2441 = vmatmul.mubr.bf16.gmra.mrb[0].mxu0 %v2352
  %v2442 = vpop.f32.mrb[0].mxu0
  %v2443 = vadd.f32 0.0, %v2442
  %v2444 = vpop.f32.mrb[0].mxu0
  %v2445 = vpop.f32.mrb[0].mxu0
  %v2446 = vadd.f32 0.0, %v2445
  %v2447 = vpop.f32.mrb[0].mxu0
  %2448 = vmatprep.mubr.bf16.mxu0 0
  %2449 = vmatmul.mubr.bf16.gmra.mrb[0].mxu0 %v2355
  %v2450 = vpop.f32.mrb[0].mxu0
  %v2451 = vadd.f32 0.0, %v2450
  %v2452 = vpop.f32.mrb[0].mxu0
  %v2453 = vpop.f32.mrb[0].mxu0
  %v2454 = vadd.f32 0.0, %v2453
  %v2455 = vpop.f32.mrb[0].mxu0
  %2456 = vdwg.mxu0
  %v2457 = vadd.f32 %v2291, %v2395
  %v2458 = vadd.f32 %v2292, %v2398
  %v2459 = vadd.f32 %v2293, %v2403
  %v2460 = vadd.f32 %v2294, %v2406
  %v2461 = vadd.f32 %v2295, %v2411
  %v2462 = vadd.f32 %v2296, %v2414
  %v2463 = vadd.f32 %v2297, %v2419
  %v2464 = vadd.f32 %v2298, %v2422
  %v2465 = vadd.f32 %v2299, %v2427
  %v2466 = vadd.f32 %v2300, %v2430
  %v2467 = vadd.f32 %v2301, %v2435
  %v2468 = vadd.f32 %v2302, %v2438
  %v2469 = vadd.f32 %v2303, %v2443
  %v2470 = vadd.f32 %v2304, %v2446
  %v2471 = vadd.f32 %v2305, %v2451
  %v2472 = vadd.f32 %v2306, %v2454
  %v2473 = vld [vmem:[%s184 + $0x1] sm:$0xff]
  %v2474 = vld [vmem:[%s184 + $0x11] sm:$0xff]
  %v2475 = vld [vmem:[%s184 + $0x21] sm:$0xff]
  %v2476 = vld [vmem:[%s184 + $0x31] sm:$0xff]
  %v2477 = vld [vmem:[%s184 + $0x41] sm:$0xff]
  %v2478 = vld [vmem:[%s184 + $0x51] sm:$0xff]
  %v2479 = vld [vmem:[%s184 + $0x61] sm:$0xff]
  %v2480 = vld [vmem:[%s184 + $0x71] sm:$0xff]
  %v2481 = vld [vmem:[%s184 + $0xa1] sm:$0xff]
  %v2482 = vld [vmem:[%s184 + $0xb1] sm:$0xff]
  %v2483 = vld [vmem:[%s184 + $0xc1] sm:$0xff]
  %v2484 = vld [vmem:[%s184 + $0xd1] sm:$0xff]
  %v2485 = vld [vmem:[%s184 + $0xe1] sm:$0xff]
  %v2486 = vld [vmem:[%s184 + $0xf1] sm:$0xff]
  %v2487 = vld [vmem:[%s184 + $0x101] sm:$0xff]
  %v2488 = vld [vmem:[%s184 + $0x111] sm:$0xff]
  %v2489 = vpack.c.bf16 %v2474, %v2473
  %v2490 = vpack.c.bf16 %v2476, %v2475
  %v2491 = vpack.c.bf16 %v2478, %v2477
  %v2492 = vpack.c.bf16 %v2480, %v2479
  %v2493 = vpack.c.bf16 %v2482, %v2481
  %v2494 = vpack.c.bf16 %v2484, %v2483
  %v2495 = vpack.c.bf16 %v2486, %v2485
  %v2496 = vpack.c.bf16 %v2488, %v2487
  %s2497 = scalar_lea.vmem %s4, 16
  %v2498 = vld [vmem:[%s2497] sm:$0xf]
  %v2500 = vsel %vm27, %v2489, 0
  %v2503 = vsel %vm27, %v2490, 0
  %v2506 = vsel %vm27, %v2491, 0
  %v2509 = vsel %vm27, %v2492, 0
  %v2512 = vsel %vm27, %v2493, 0
  %v2515 = vsel %vm27, %v2494, 0
  %v2518 = vsel %vm27, %v2495, 0
  %v2521 = vsel %vm27, %v2496, 0
  %v2524 = vsel %vm277, %v2498, 0
  %2526 = vmatprep.subr.bf16.mxu0 0
  %2527 = vmatpush1.bf16.msra.mxu0 %v2524
  %2528 = vmatprep.subr.bf16.mxu0 0
  %2529 = vmatpush1.bf16.msra.mxu0 0
  %2530 = vmatprep.subr.bf16.mxu0 0
  %2531 = vmatpush1.bf16.msra.mxu0 0
  %2532 = vmatprep.subr.bf16.mxu0 0
  %2533 = vmatpush1.bf16.msra.mxu0 0
  %2534 = vmatprep.subr.bf16.mxu0 0
  %2535 = vmatpush1.bf16.msra.mxu0 0
  %2536 = vmatprep.subr.bf16.mxu0 0
  %2537 = vmatpush1.bf16.msra.mxu0 0
  %2538 = vmatprep.subr.bf16.mxu0 0
  %2539 = vmatpush1.bf16.msra.mxu0 0
  %2540 = vmatprep.subr.bf16.mxu0 0
  %2541 = vmatpush1.bf16.msra.mxu0 0
  %2542 = vmatprep.subr.bf16.mxu0 0
  %2543 = vmatpush1.bf16.msra.mxu0 0
  %2544 = vmatprep.subr.bf16.mxu0 0
  %2545 = vmatpush1.bf16.msra.mxu0 0
  %2546 = vmatprep.subr.bf16.mxu0 0
  %2547 = vmatpush1.bf16.msra.mxu0 0
  %2548 = vmatprep.subr.bf16.mxu0 0
  %2549 = vmatpush1.bf16.msra.mxu0 0
  %2550 = vmatprep.subr.bf16.mxu0 0
  %2551 = vmatpush1.bf16.msra.mxu0 0
  %2552 = vmatprep.subr.bf16.mxu0 0
  %2553 = vmatpush1.bf16.msra.mxu0 0
  %2554 = vmatprep.subr.bf16.mxu0 0
  %2555 = vmatpush1.bf16.msra.mxu0 0
  %2556 = vmatprep.subr.bf16.mxu0 0
  %2557 = vmatpush1.bf16.msra.mxu0 0
  %2558 = vmatprep.mubr.bf16.mxu0 0
  %2559 = vmatmul.mubr.bf16.gmra.mrb[0].mxu0 %v2500
  %v2560 = vpop.f32.mrb[0].mxu0
  %v2561 = vadd.f32 0.0, %v2560
  %v2562 = vpop.f32.mrb[0].mxu0
  %v2563 = vpop.f32.mrb[0].mxu0
  %v2564 = vadd.f32 0.0, %v2563
  %v2565 = vpop.f32.mrb[0].mxu0
  %2566 = vmatprep.mubr.bf16.mxu0 0
  %2567 = vmatmul.mubr.bf16.gmra.mrb[0].mxu0 %v2503
  %v2568 = vpop.f32.mrb[0].mxu0
  %v2569 = vadd.f32 0.0, %v2568
  %v2570 = vpop.f32.mrb[0].mxu0
  %v2571 = vpop.f32.mrb[0].mxu0
  %v2572 = vadd.f32 0.0, %v2571
  %v2573 = vpop.f32.mrb[0].mxu0
  %2574 = vmatprep.mubr.bf16.mxu0 0
  %2575 = vmatmul.mubr.bf16.gmra.mrb[0].mxu0 %v2506
  %v2576 = vpop.f32.mrb[0].mxu0
  %v2577 = vadd.f32 0.0, %v2576
  %v2578 = vpop.f32.mrb[0].mxu0
  %v2579 = vpop.f32.mrb[0].mxu0
  %v2580 = vadd.f32 0.0, %v2579
  %v2581 = vpop.f32.mrb[0].mxu0
  %2582 = vmatprep.mubr.bf16.mxu0 0
  %2583 = vmatmul.mubr.bf16.gmra.mrb[0].mxu0 %v2509
  %v2584 = vpop.f32.mrb[0].mxu0
  %v2585 = vadd.f32 0.0, %v2584
  %v2586 = vpop.f32.mrb[0].mxu0
  %v2587 = vpop.f32.mrb[0].mxu0
  %v2588 = vadd.f32 0.0, %v2587
  %v2589 = vpop.f32.mrb[0].mxu0
  %2590 = vmatprep.mubr.bf16.mxu0 0
  %2591 = vmatmul.mubr.bf16.gmra.mrb[0].mxu0 %v2512
  %v2592 = vpop.f32.mrb[0].mxu0
  %v2593 = vadd.f32 0.0, %v2592
  %v2594 = vpop.f32.mrb[0].mxu0
  %v2595 = vpop.f32.mrb[0].mxu0
  %v2596 = vadd.f32 0.0, %v2595
  %v2597 = vpop.f32.mrb[0].mxu0
  %2598 = vmatprep.mubr.bf16.mxu0 0
  %2599 = vmatmul.mubr.bf16.gmra.mrb[0].mxu0 %v2515
  %v2600 = vpop.f32.mrb[0].mxu0
  %v2601 = vadd.f32 0.0, %v2600
  %v2602 = vpop.f32.mrb[0].mxu0
  %v2603 = vpop.f32.mrb[0].mxu0
  %v2604 = vadd.f32 0.0, %v2603
  %v2605 = vpop.f32.mrb[0].mxu0
  %2606 = vmatprep.mubr.bf16.mxu0 0
  %2607 = vmatmul.mubr.bf16.gmra.mrb[0].mxu0 %v2518
  %v2608 = vpop.f32.mrb[0].mxu0
  %v2609 = vadd.f32 0.0, %v2608
  %v2610 = vpop.f32.mrb[0].mxu0
  %v2611 = vpop.f32.mrb[0].mxu0
  %v2612 = vadd.f32 0.0, %v2611
  %v2613 = vpop.f32.mrb[0].mxu0
  %2614 = vmatprep.mubr.bf16.mxu0 0
  %2615 = vmatmul.mubr.bf16.gmra.mrb[0].mxu0 %v2521
  %v2616 = vpop.f32.mrb[0].mxu0
  %v2617 = vadd.f32 0.0, %v2616
  %v2618 = vpop.f32.mrb[0].mxu0
  %v2619 = vpop.f32.mrb[0].mxu0
  %v2620 = vadd.f32 0.0, %v2619
  %v2621 = vpop.f32.mrb[0].mxu0
  %2622 = vdwg.mxu0
  %v2623 = vadd.f32 %v2457, %v2561
  %v2624 = vadd.f32 %v2458, %v2564
  %v2625 = vadd.f32 %v2459, %v2569
  %v2626 = vadd.f32 %v2460, %v2572
  %v2627 = vadd.f32 %v2461, %v2577
  %v2628 = vadd.f32 %v2462, %v2580
  %v2629 = vadd.f32 %v2463, %v2585
  %v2630 = vadd.f32 %v2464, %v2588
  %v2631 = vadd.f32 %v2465, %v2593
  %v2632 = vadd.f32 %v2466, %v2596
  %v2633 = vadd.f32 %v2467, %v2601
  %v2634 = vadd.f32 %v2468, %v2604
  %v2635 = vadd.f32 %v2469, %v2609
  %v2636 = vadd.f32 %v2470, %v2612
  %v2637 = vadd.f32 %v2471, %v2617
  %v2638 = vadd.f32 %v2472, %v2620
  %v2639 = vld [vmem:[%s184 + $0x2] sm:$0xff]
  %v2640 = vld [vmem:[%s184 + $0x12] sm:$0xff]
  %v2641 = vld [vmem:[%s184 + $0x22] sm:$0xff]
  %v2642 = vld [vmem:[%s184 + $0x32] sm:$0xff]
  %v2643 = vld [vmem:[%s184 + $0x42] sm:$0xff]
  %v2644 = vld [vmem:[%s184 + $0x52] sm:$0xff]
  %v2645 = vld [vmem:[%s184 + $0x62] sm:$0xff]
  %v2646 = vld [vmem:[%s184 + $0x72] sm:$0xff]
  %v2647 = vld [vmem:[%s184 + $0xa2] sm:$0xff]
  %v2648 = vld [vmem:[%s184 + $0xb2] sm:$0xff]
  %v2649 = vld [vmem:[%s184 + $0xc2] sm:$0xff]
  %v2650 = vld [vmem:[%s184 + $0xd2] sm:$0xff]
  %v2651 = vld [vmem:[%s184 + $0xe2] sm:$0xff]
  %v2652 = vld [vmem:[%s184 + $0xf2] sm:$0xff]
  %v2653 = vld [vmem:[%s184 + $0x102] sm:$0xff]
  %v2654 = vld [vmem:[%s184 + $0x112] sm:$0xff]
  %v2655 = vpack.c.bf16 %v2640, %v2639
  %v2656 = vpack.c.bf16 %v2642, %v2641
  %v2657 = vpack.c.bf16 %v2644, %v2643
  %v2658 = vpack.c.bf16 %v2646, %v2645
  %v2659 = vpack.c.bf16 %v2648, %v2647
  %v2660 = vpack.c.bf16 %v2650, %v2649
  %v2661 = vpack.c.bf16 %v2652, %v2651
  %v2662 = vpack.c.bf16 %v2654, %v2653
  %s2663 = scalar_lea.vmem %s4, 20
  %v2664 = vld [vmem:[%s2663] sm:$0xf]
  %v2666 = vsel %vm27, %v2655, 0
  %v2669 = vsel %vm27, %v2656, 0
  %v2672 = vsel %vm27, %v2657, 0
  %v2675 = vsel %vm27, %v2658, 0
  %v2678 = vsel %vm27, %v2659, 0
  %v2681 = vsel %vm27, %v2660, 0
  %v2684 = vsel %vm27, %v2661, 0
  %v2687 = vsel %vm27, %v2662, 0
  %v2690 = vsel %vm277, %v2664, 0
  %2692 = vmatprep.subr.bf16.mxu0 0
  %2693 = vmatpush1.bf16.msra.mxu0 %v2690
  %2694 = vmatprep.subr.bf16.mxu0 0
  %2695 = vmatpush1.bf16.msra.mxu0 0
  %2696 = vmatprep.subr.bf16.mxu0 0
  %2697 = vmatpush1.bf16.msra.mxu0 0
  %2698 = vmatprep.subr.bf16.mxu0 0
  %2699 = vmatpush1.bf16.msra.mxu0 0
  %2700 = vmatprep.subr.bf16.mxu0 0
  %2701 = vmatpush1.bf16.msra.mxu0 0
  %2702 = vmatprep.subr.bf16.mxu0 0
  %2703 = vmatpush1.bf16.msra.mxu0 0
  %2704 = vmatprep.subr.bf16.mxu0 0
  %2705 = vmatpush1.bf16.msra.mxu0 0
  %2706 = vmatprep.subr.bf16.mxu0 0
  %2707 = vmatpush1.bf16.msra.mxu0 0
  %2708 = vmatprep.subr.bf16.mxu0 0
  %2709 = vmatpush1.bf16.msra.mxu0 0
  %2710 = vmatprep.subr.bf16.mxu0 0
  %2711 = vmatpush1.bf16.msra.mxu0 0
  %2712 = vmatprep.subr.bf16.mxu0 0
  %2713 = vmatpush1.bf16.msra.mxu0 0
  %2714 = vmatprep.subr.bf16.mxu0 0
  %2715 = vmatpush1.bf16.msra.mxu0 0
  %2716 = vmatprep.subr.bf16.mxu0 0
  %2717 = vmatpush1.bf16.msra.mxu0 0
  %2718 = vmatprep.subr.bf16.mxu0 0
  %2719 = vmatpush1.bf16.msra.mxu0 0
  %2720 = vmatprep.subr.bf16.mxu0 0
  %2721 = vmatpush1.bf16.msra.mxu0 0
  %2722 = vmatprep.subr.bf16.mxu0 0
  %2723 = vmatpush1.bf16.msra.mxu0 0
  %2724 = vmatprep.mubr.bf16.mxu0 0
  %2725 = vmatmul.mubr.bf16.gmra.mrb[0].mxu0 %v2666
  %v2726 = vpop.f32.mrb[0].mxu0
  %v2727 = vadd.f32 0.0, %v2726
  %v2728 = vpop.f32.mrb[0].mxu0
  %v2729 = vpop.f32.mrb[0].mxu0
  %v2730 = vadd.f32 0.0, %v2729
  %v2731 = vpop.f32.mrb[0].mxu0
  %2732 = vmatprep.mubr.bf16.mxu0 0
  %2733 = vmatmul.mubr.bf16.gmra.mrb[0].mxu0 %v2669
  %v2734 = vpop.f32.mrb[0].mxu0
  %v2735 = vadd.f32 0.0, %v2734
  %v2736 = vpop.f32.mrb[0].mxu0
  %v2737 = vpop.f32.mrb[0].mxu0
  %v2738 = vadd.f32 0.0, %v2737
  %v2739 = vpop.f32.mrb[0].mxu0
  %2740 = vmatprep.mubr.bf16.mxu0 0
  %2741 = vmatmul.mubr.bf16.gmra.mrb[0].mxu0 %v2672
  %v2742 = vpop.f32.mrb[0].mxu0
  %v2743 = vadd.f32 0.0, %v2742
  %v2744 = vpop.f32.mrb[0].mxu0
  %v2745 = vpop.f32.mrb[0].mxu0
  %v2746 = vadd.f32 0.0, %v2745
  %v2747 = vpop.f32.mrb[0].mxu0
  %2748 = vmatprep.mubr.bf16.mxu0 0
  %2749 = vmatmul.mubr.bf16.gmra.mrb[0].mxu0 %v2675
  %v2750 = vpop.f32.mrb[0].mxu0
  %v2751 = vadd.f32 0.0, %v2750
  %v2752 = vpop.f32.mrb[0].mxu0
  %v2753 = vpop.f32.mrb[0].mxu0
  %v2754 = vadd.f32 0.0, %v2753
  %v2755 = vpop.f32.mrb[0].mxu0
  %2756 = vmatprep.mubr.bf16.mxu0 0
  %2757 = vmatmul.mubr.bf16.gmra.mrb[0].mxu0 %v2678
  %v2758 = vpop.f32.mrb[0].mxu0
  %v2759 = vadd.f32 0.0, %v2758
  %v2760 = vpop.f32.mrb[0].mxu0
  %v2761 = vpop.f32.mrb[0].mxu0
  %v2762 = vadd.f32 0.0, %v2761
  %v2763 = vpop.f32.mrb[0].mxu0
  %2764 = vmatprep.mubr.bf16.mxu0 0
  %2765 = vmatmul.mubr.bf16.gmra.mrb[0].mxu0 %v2681
  %v2766 = vpop.f32.mrb[0].mxu0
  %v2767 = vadd.f32 0.0, %v2766
  %v2768 = vpop.f32.mrb[0].mxu0
  %v2769 = vpop.f32.mrb[0].mxu0
  %v2770 = vadd.f32 0.0, %v2769
  %v2771 = vpop.f32.mrb[0].mxu0
  %2772 = vmatprep.mubr.bf16.mxu0 0
  %2773 = vmatmul.mubr.bf16.gmra.mrb[0].mxu0 %v2684
  %v2774 = vpop.f32.mrb[0].mxu0
  %v2775 = vadd.f32 0.0, %v2774
  %v2776 = vpop.f32.mrb[0].mxu0
  %v2777 = vpop.f32.mrb[0].mxu0
  %v2778 = vadd.f32 0.0, %v2777
  %v2779 = vpop.f32.mrb[0].mxu0
  %2780 = vmatprep.mubr.bf16.mxu0 0
  %2781 = vmatmul.mubr.bf16.gmra.mrb[0].mxu0 %v2687
  %v2782 = vpop.f32.mrb[0].mxu0
  %v2783 = vadd.f32 0.0, %v2782
  %v2784 = vpop.f32.mrb[0].mxu0
  %v2785 = vpop.f32.mrb[0].mxu0
  %v2786 = vadd.f32 0.0, %v2785
  %v2787 = vpop.f32.mrb[0].mxu0
  %2788 = vdwg.mxu0
  %v2789 = vadd.f32 %v2623, %v2727
  %v2790 = vadd.f32 %v2624, %v2730
  %v2791 = vadd.f32 %v2625, %v2735
  %v2792 = vadd.f32 %v2626, %v2738
  %v2793 = vadd.f32 %v2627, %v2743
  %v2794 = vadd.f32 %v2628, %v2746
  %v2795 = vadd.f32 %v2629, %v2751
  %v2796 = vadd.f32 %v2630, %v2754
  %v2797 = vadd.f32 %v2631, %v2759
  %v2798 = vadd.f32 %v2632, %v2762
  %v2799 = vadd.f32 %v2633, %v2767
  %v2800 = vadd.f32 %v2634, %v2770
  %v2801 = vadd.f32 %v2635, %v2775
  %v2802 = vadd.f32 %v2636, %v2778
  %v2803 = vadd.f32 %v2637, %v2783
  %v2804 = vadd.f32 %v2638, %v2786
  %v2805 = vld [vmem:[%s1166] sm:$0xff]
  %v2806 = vld [vmem:[%s1166 + $0x10] sm:$0xff]
  %v2807 = vld [vmem:[%s1166 + $0x20] sm:$0xff]
  %v2808 = vld [vmem:[%s1166 + $0x30] sm:$0xff]
  %v2809 = vld [vmem:[%s1166 + $0x40] sm:$0xff]
  %v2810 = vld [vmem:[%s1166 + $0x50] sm:$0xff]
  %v2811 = vld [vmem:[%s1166 + $0x60] sm:$0xff]
  %v2812 = vld [vmem:[%s1166 + $0x70] sm:$0xff]
  %v2813 = vld [vmem:[%s1166 + $0xa0] sm:$0xff]
  %v2814 = vld [vmem:[%s1166 + $0xb0] sm:$0xff]
  %v2815 = vld [vmem:[%s1166 + $0xc0] sm:$0xff]
  %v2816 = vld [vmem:[%s1166 + $0xd0] sm:$0xff]
  %v2817 = vld [vmem:[%s1166 + $0xe0] sm:$0xff]
  %v2818 = vld [vmem:[%s1166 + $0xf0] sm:$0xff]
  %v2819 = vld [vmem:[%s1166 + $0x100] sm:$0xff]
  %v2820 = vld [vmem:[%s1166 + $0x110] sm:$0xff]
  %v2821 = vpack.c.bf16 %v2806, %v2805
  %v2822 = vpack.c.bf16 %v2808, %v2807
  %v2823 = vpack.c.bf16 %v2810, %v2809
  %v2824 = vpack.c.bf16 %v2812, %v2811
  %v2825 = vpack.c.bf16 %v2814, %v2813
  %v2826 = vpack.c.bf16 %v2816, %v2815
  %v2827 = vpack.c.bf16 %v2818, %v2817
  %v2828 = vpack.c.bf16 %v2820, %v2819
  %s2829 = scalar_lea.vmem %s4, 24
  %v2830 = vld [vmem:[%s2829] sm:$0xf]
  %v2832 = vsel %vm27, %v2821, 0
  %v2835 = vsel %vm27, %v2822, 0
  %v2838 = vsel %vm27, %v2823, 0
  %v2841 = vsel %vm27, %v2824, 0
  %v2844 = vsel %vm27, %v2825, 0
  %v2847 = vsel %vm27, %v2826, 0
  %v2850 = vsel %vm27, %v2827, 0
  %v2853 = vsel %vm27, %v2828, 0
  %v2856 = vsel %vm277, %v2830, 0
  %2858 = vmatprep.subr.bf16.mxu0 0
  %2859 = vmatpush1.bf16.msra.mxu0 %v2856
  %2860 = vmatprep.subr.bf16.mxu0 0
  %2861 = vmatpush1.bf16.msra.mxu0 0
  %2862 = vmatprep.subr.bf16.mxu0 0
  %2863 = vmatpush1.bf16.msra.mxu0 0
  %2864 = vmatprep.subr.bf16.mxu0 0
  %2865 = vmatpush1.bf16.msra.mxu0 0
  %2866 = vmatprep.subr.bf16.mxu0 0
  %2867 = vmatpush1.bf16.msra.mxu0 0
  %2868 = vmatprep.subr.bf16.mxu0 0
  %2869 = vmatpush1.bf16.msra.mxu0 0
  %2870 = vmatprep.subr.bf16.mxu0 0
  %2871 = vmatpush1.bf16.msra.mxu0 0
  %2872 = vmatprep.subr.bf16.mxu0 0
  %2873 = vmatpush1.bf16.msra.mxu0 0
  %2874 = vmatprep.subr.bf16.mxu0 0
  %2875 = vmatpush1.bf16.msra.mxu0 0
  %2876 = vmatprep.subr.bf16.mxu0 0
  %2877 = vmatpush1.bf16.msra.mxu0 0
  %2878 = vmatprep.subr.bf16.mxu0 0
  %2879 = vmatpush1.bf16.msra.mxu0 0
  %2880 = vmatprep.subr.bf16.mxu0 0
  %2881 = vmatpush1.bf16.msra.mxu0 0
  %2882 = vmatprep.subr.bf16.mxu0 0
  %2883 = vmatpush1.bf16.msra.mxu0 0
  %2884 = vmatprep.subr.bf16.mxu0 0
  %2885 = vmatpush1.bf16.msra.mxu0 0
  %2886 = vmatprep.subr.bf16.mxu0 0
  %2887 = vmatpush1.bf16.msra.mxu0 0
  %2888 = vmatprep.subr.bf16.mxu0 0
  %2889 = vmatpush1.bf16.msra.mxu0 0
  %2890 = vmatprep.mubr.bf16.mxu0 0
  %2891 = vmatmul.mubr.bf16.gmra.mrb[0].mxu0 %v2832
  %v2892 = vpop.f32.mrb[0].mxu0
  %v2893 = vadd.f32 0.0, %v2892
  %v2894 = vpop.f32.mrb[0].mxu0
  %v2895 = vpop.f32.mrb[0].mxu0
  %v2896 = vadd.f32 0.0, %v2895
  %v2897 = vpop.f32.mrb[0].mxu0
  %2898 = vmatprep.mubr.bf16.mxu0 0
  %2899 = vmatmul.mubr.bf16.gmra.mrb[0].mxu0 %v2835
  %v2900 = vpop.f32.mrb[0].mxu0
  %v2901 = vadd.f32 0.0, %v2900
  %v2902 = vpop.f32.mrb[0].mxu0
  %v2903 = vpop.f32.mrb[0].mxu0
  %v2904 = vadd.f32 0.0, %v2903
  %v2905 = vpop.f32.mrb[0].mxu0
  %2906 = vmatprep.mubr.bf16.mxu0 0
  %2907 = vmatmul.mubr.bf16.gmra.mrb[0].mxu0 %v2838
  %v2908 = vpop.f32.mrb[0].mxu0
  %v2909 = vadd.f32 0.0, %v2908
  %v2910 = vpop.f32.mrb[0].mxu0
  %v2911 = vpop.f32.mrb[0].mxu0
  %v2912 = vadd.f32 0.0, %v2911
  %v2913 = vpop.f32.mrb[0].mxu0
  %2914 = vmatprep.mubr.bf16.mxu0 0
  %2915 = vmatmul.mubr.bf16.gmra.mrb[0].mxu0 %v2841
  %v2916 = vpop.f32.mrb[0].mxu0
  %v2917 = vadd.f32 0.0, %v2916
  %v2918 = vpop.f32.mrb[0].mxu0
  %v2919 = vpop.f32.mrb[0].mxu0
  %v2920 = vadd.f32 0.0, %v2919
  %v2921 = vpop.f32.mrb[0].mxu0
  %2922 = vmatprep.mubr.bf16.mxu0 0
  %2923 = vmatmul.mubr.bf16.gmra.mrb[0].mxu0 %v2844
  %v2924 = vpop.f32.mrb[0].mxu0
  %v2925 = vadd.f32 0.0, %v2924
  %v2926 = vpop.f32.mrb[0].mxu0
  %v2927 = vpop.f32.mrb[0].mxu0
  %v2928 = vadd.f32 0.0, %v2927
  %v2929 = vpop.f32.mrb[0].mxu0
  %2930 = vmatprep.mubr.bf16.mxu0 0
  %2931 = vmatmul.mubr.bf16.gmra.mrb[0].mxu0 %v2847
  %v2932 = vpop.f32.mrb[0].mxu0
  %v2933 = vadd.f32 0.0, %v2932
  %v2934 = vpop.f32.mrb[0].mxu0
  %v2935 = vpop.f32.mrb[0].mxu0
  %v2936 = vadd.f32 0.0, %v2935
  %v2937 = vpop.f32.mrb[0].mxu0
  %2938 = vmatprep.mubr.bf16.mxu0 0
  %2939 = vmatmul.mubr.bf16.gmra.mrb[0].mxu0 %v2850
  %v2940 = vpop.f32.mrb[0].mxu0
  %v2941 = vadd.f32 0.0, %v2940
  %v2942 = vpop.f32.mrb[0].mxu0
  %v2943 = vpop.f32.mrb[0].mxu0
  %v2944 = vadd.f32 0.0, %v2943
  %v2945 = vpop.f32.mrb[0].mxu0
  %2946 = vmatprep.mubr.bf16.mxu0 0
  %2947 = vmatmul.mubr.bf16.gmra.mrb[0].mxu0 %v2853
  %v2948 = vpop.f32.mrb[0].mxu0
  %v2949 = vadd.f32 0.0, %v2948
  %v2950 = vpop.f32.mrb[0].mxu0
  %v2951 = vpop.f32.mrb[0].mxu0
  %v2952 = vadd.f32 0.0, %v2951
  %v2953 = vpop.f32.mrb[0].mxu0
  %2954 = vdwg.mxu0
  %v2955 = vadd.f32 %v2789, %v2893
  %v2956 = vadd.f32 %v2790, %v2896
  %v2957 = vadd.f32 %v2791, %v2901
  %v2958 = vadd.f32 %v2792, %v2904
  %v2959 = vadd.f32 %v2793, %v2909
  %v2960 = vadd.f32 %v2794, %v2912
  %v2961 = vadd.f32 %v2795, %v2917
  %v2962 = vadd.f32 %v2796, %v2920
  %v2963 = vadd.f32 %v2797, %v2925
  %v2964 = vadd.f32 %v2798, %v2928
  %v2965 = vadd.f32 %v2799, %v2933
  %v2966 = vadd.f32 %v2800, %v2936
  %v2967 = vadd.f32 %v2801, %v2941
  %v2968 = vadd.f32 %v2802, %v2944
  %v2969 = vadd.f32 %v2803, %v2949
  %v2970 = vadd.f32 %v2804, %v2952
  %v2971 = vld [vmem:[%s1166 + $0x1] sm:$0xff]
  %v2972 = vld [vmem:[%s1166 + $0x11] sm:$0xff]
  %v2973 = vld [vmem:[%s1166 + $0x21] sm:$0xff]
  %v2974 = vld [vmem:[%s1166 + $0x31] sm:$0xff]
  %v2975 = vld [vmem:[%s1166 + $0x41] sm:$0xff]
  %v2976 = vld [vmem:[%s1166 + $0x51] sm:$0xff]
  %v2977 = vld [vmem:[%s1166 + $0x61] sm:$0xff]
  %v2978 = vld [vmem:[%s1166 + $0x71] sm:$0xff]
  %v2979 = vld [vmem:[%s1166 + $0xa1] sm:$0xff]
  %v2980 = vld [vmem:[%s1166 + $0xb1] sm:$0xff]
  %v2981 = vld [vmem:[%s1166 + $0xc1] sm:$0xff]
  %v2982 = vld [vmem:[%s1166 + $0xd1] sm:$0xff]
  %v2983 = vld [vmem:[%s1166 + $0xe1] sm:$0xff]
  %v2984 = vld [vmem:[%s1166 + $0xf1] sm:$0xff]
  %v2985 = vld [vmem:[%s1166 + $0x101] sm:$0xff]
  %v2986 = vld [vmem:[%s1166 + $0x111] sm:$0xff]
  %v2987 = vpack.c.bf16 %v2972, %v2971
  %v2988 = vpack.c.bf16 %v2974, %v2973
  %v2989 = vpack.c.bf16 %v2976, %v2975
  %v2990 = vpack.c.bf16 %v2978, %v2977
  %v2991 = vpack.c.bf16 %v2980, %v2979
  %v2992 = vpack.c.bf16 %v2982, %v2981
  %v2993 = vpack.c.bf16 %v2984, %v2983
  %v2994 = vpack.c.bf16 %v2986, %v2985
  %s2995 = scalar_lea.vmem %s4, 28
  %v2996 = vld [vmem:[%s2995] sm:$0xf]
  %v2998 = vsel %vm27, %v2987, 0
  %v3001 = vsel %vm27, %v2988, 0
  %v3004 = vsel %vm27, %v2989, 0
  %v3007 = vsel %vm27, %v2990, 0
  %v3010 = vsel %vm27, %v2991, 0
  %v3013 = vsel %vm27, %v2992, 0
  %v3016 = vsel %vm27, %v2993, 0
  %v3019 = vsel %vm27, %v2994, 0
  %v3022 = vsel %vm277, %v2996, 0
  %3024 = vmatprep.subr.bf16.mxu0 0
  %3025 = vmatpush1.bf16.msra.mxu0 %v3022
  %3026 = vmatprep.subr.bf16.mxu0 0
  %3027 = vmatpush1.bf16.msra.mxu0 0
  %3028 = vmatprep.subr.bf16.mxu0 0
  %3029 = vmatpush1.bf16.msra.mxu0 0
  %3030 = vmatprep.subr.bf16.mxu0 0
  %3031 = vmatpush1.bf16.msra.mxu0 0
  %3032 = vmatprep.subr.bf16.mxu0 0
  %3033 = vmatpush1.bf16.msra.mxu0 0
  %3034 = vmatprep.subr.bf16.mxu0 0
  %3035 = vmatpush1.bf16.msra.mxu0 0
  %3036 = vmatprep.subr.bf16.mxu0 0
  %3037 = vmatpush1.bf16.msra.mxu0 0
  %3038 = vmatprep.subr.bf16.mxu0 0
  %3039 = vmatpush1.bf16.msra.mxu0 0
  %3040 = vmatprep.subr.bf16.mxu0 0
  %3041 = vmatpush1.bf16.msra.mxu0 0
  %3042 = vmatprep.subr.bf16.mxu0 0
  %3043 = vmatpush1.bf16.msra.mxu0 0
  %3044 = vmatprep.subr.bf16.mxu0 0
  %3045 = vmatpush1.bf16.msra.mxu0 0
  %3046 = vmatprep.subr.bf16.mxu0 0
  %3047 = vmatpush1.bf16.msra.mxu0 0
  %3048 = vmatprep.subr.bf16.mxu0 0
  %3049 = vmatpush1.bf16.msra.mxu0 0
  %3050 = vmatprep.subr.bf16.mxu0 0
  %3051 = vmatpush1.bf16.msra.mxu0 0
  %3052 = vmatprep.subr.bf16.mxu0 0
  %3053 = vmatpush1.bf16.msra.mxu0 0
  %3054 = vmatprep.subr.bf16.mxu0 0
  %3055 = vmatpush1.bf16.msra.mxu0 0
  %3056 = vmatprep.mubr.bf16.mxu0 0
  %3057 = vmatmul.mubr.bf16.gmra.mrb[0].mxu0 %v2998
  %v3058 = vpop.f32.mrb[0].mxu0
  %v3059 = vadd.f32 0.0, %v3058
  %v3060 = vpop.f32.mrb[0].mxu0
  %v3061 = vpop.f32.mrb[0].mxu0
  %v3062 = vadd.f32 0.0, %v3061
  %v3063 = vpop.f32.mrb[0].mxu0
  %3064 = vmatprep.mubr.bf16.mxu0 0
  %3065 = vmatmul.mubr.bf16.gmra.mrb[0].mxu0 %v3001
  %v3066 = vpop.f32.mrb[0].mxu0
  %v3067 = vadd.f32 0.0, %v3066
  %v3068 = vpop.f32.mrb[0].mxu0
  %v3069 = vpop.f32.mrb[0].mxu0
  %v3070 = vadd.f32 0.0, %v3069
  %v3071 = vpop.f32.mrb[0].mxu0
  %3072 = vmatprep.mubr.bf16.mxu0 0
  %3073 = vmatmul.mubr.bf16.gmra.mrb[0].mxu0 %v3004
  %v3074 = vpop.f32.mrb[0].mxu0
  %v3075 = vadd.f32 0.0, %v3074
  %v3076 = vpop.f32.mrb[0].mxu0
  %v3077 = vpop.f32.mrb[0].mxu0
  %v3078 = vadd.f32 0.0, %v3077
  %v3079 = vpop.f32.mrb[0].mxu0
  %3080 = vmatprep.mubr.bf16.mxu0 0
  %3081 = vmatmul.mubr.bf16.gmra.mrb[0].mxu0 %v3007
  %v3082 = vpop.f32.mrb[0].mxu0
  %v3083 = vadd.f32 0.0, %v3082
  %v3084 = vpop.f32.mrb[0].mxu0
  %v3085 = vpop.f32.mrb[0].mxu0
  %v3086 = vadd.f32 0.0, %v3085
  %v3087 = vpop.f32.mrb[0].mxu0
  %3088 = vmatprep.mubr.bf16.mxu0 0
  %3089 = vmatmul.mubr.bf16.gmra.mrb[0].mxu0 %v3010
  %v3090 = vpop.f32.mrb[0].mxu0
  %v3091 = vadd.f32 0.0, %v3090
  %v3092 = vpop.f32.mrb[0].mxu0
  %v3093 = vpop.f32.mrb[0].mxu0
  %v3094 = vadd.f32 0.0, %v3093
  %v3095 = vpop.f32.mrb[0].mxu0
  %3096 = vmatprep.mubr.bf16.mxu0 0
  %3097 = vmatmul.mubr.bf16.gmra.mrb[0].mxu0 %v3013
  %v3098 = vpop.f32.mrb[0].mxu0
  %v3099 = vadd.f32 0.0, %v3098
  %v3100 = vpop.f32.mrb[0].mxu0
  %v3101 = vpop.f32.mrb[0].mxu0
  %v3102 = vadd.f32 0.0, %v3101
  %v3103 = vpop.f32.mrb[0].mxu0
  %3104 = vmatprep.mubr.bf16.mxu0 0
  %3105 = vmatmul.mubr.bf16.gmra.mrb[0].mxu0 %v3016
  %v3106 = vpop.f32.mrb[0].mxu0
  %v3107 = vadd.f32 0.0, %v3106
  %v3108 = vpop.f32.mrb[0].mxu0
  %v3109 = vpop.f32.mrb[0].mxu0
  %v3110 = vadd.f32 0.0, %v3109
  %v3111 = vpop.f32.mrb[0].mxu0
  %3112 = vmatprep.mubr.bf16.mxu0 0
  %3113 = vmatmul.mubr.bf16.gmra.mrb[0].mxu0 %v3019
  %v3114 = vpop.f32.mrb[0].mxu0
  %v3115 = vadd.f32 0.0, %v3114
  %v3116 = vpop.f32.mrb[0].mxu0
  %v3117 = vpop.f32.mrb[0].mxu0
  %v3118 = vadd.f32 0.0, %v3117
  %v3119 = vpop.f32.mrb[0].mxu0
  %3120 = vdwg.mxu0
  %v3121 = vadd.f32 %v2955, %v3059
  %v3122 = vadd.f32 %v2956, %v3062
  %v3123 = vadd.f32 %v2957, %v3067
  %v3124 = vadd.f32 %v2958, %v3070
  %v3125 = vadd.f32 %v2959, %v3075
  %v3126 = vadd.f32 %v2960, %v3078
  %v3127 = vadd.f32 %v2961, %v3083
  %v3128 = vadd.f32 %v2962, %v3086
  %v3129 = vadd.f32 %v2963, %v3091
  %v3130 = vadd.f32 %v2964, %v3094
  %v3131 = vadd.f32 %v2965, %v3099
  %v3132 = vadd.f32 %v2966, %v3102
  %v3133 = vadd.f32 %v2967, %v3107
  %v3134 = vadd.f32 %v2968, %v3110
  %v3135 = vadd.f32 %v2969, %v3115
  %v3136 = vadd.f32 %v2970, %v3118
  %v3137 = vld [vmem:[%s1166 + $0x2] sm:$0xff]
  %v3138 = vld [vmem:[%s1166 + $0x12] sm:$0xff]
  %v3139 = vld [vmem:[%s1166 + $0x22] sm:$0xff]
  %v3140 = vld [vmem:[%s1166 + $0x32] sm:$0xff]
  %v3141 = vld [vmem:[%s1166 + $0x42] sm:$0xff]
  %v3142 = vld [vmem:[%s1166 + $0x52] sm:$0xff]
  %v3143 = vld [vmem:[%s1166 + $0x62] sm:$0xff]
  %v3144 = vld [vmem:[%s1166 + $0x72] sm:$0xff]
  %v3145 = vld [vmem:[%s1166 + $0xa2] sm:$0xff]
  %v3146 = vld [vmem:[%s1166 + $0xb2] sm:$0xff]
  %v3147 = vld [vmem:[%s1166 + $0xc2] sm:$0xff]
  %v3148 = vld [vmem:[%s1166 + $0xd2] sm:$0xff]
  %v3149 = vld [vmem:[%s1166 + $0xe2] sm:$0xff]
  %v3150 = vld [vmem:[%s1166 + $0xf2] sm:$0xff]
  %v3151 = vld [vmem:[%s1166 + $0x102] sm:$0xff]
  %v3152 = vld [vmem:[%s1166 + $0x112] sm:$0xff]
  %v3153 = vpack.c.bf16 %v3138, %v3137
  %v3154 = vpack.c.bf16 %v3140, %v3139
  %v3155 = vpack.c.bf16 %v3142, %v3141
  %v3156 = vpack.c.bf16 %v3144, %v3143
  %v3157 = vpack.c.bf16 %v3146, %v3145
  %v3158 = vpack.c.bf16 %v3148, %v3147
  %v3159 = vpack.c.bf16 %v3150, %v3149
  %v3160 = vpack.c.bf16 %v3152, %v3151
  %s3161 = scalar_lea.vmem %s4, 32
  %v3162 = vld [vmem:[%s3161] sm:$0xf]
  %v3164 = vsel %vm27, %v3153, 0
  %v3167 = vsel %vm27, %v3154, 0
  %v3170 = vsel %vm27, %v3155, 0
  %v3173 = vsel %vm27, %v3156, 0
  %v3176 = vsel %vm27, %v3157, 0
  %v3179 = vsel %vm27, %v3158, 0
  %v3182 = vsel %vm27, %v3159, 0
  %v3185 = vsel %vm27, %v3160, 0
  %v3188 = vsel %vm277, %v3162, 0
  %3190 = vmatprep.subr.bf16.mxu0 0
  %3191 = vmatpush1.bf16.msra.mxu0 %v3188
  %3192 = vmatprep.subr.bf16.mxu0 0
  %3193 = vmatpush1.bf16.msra.mxu0 0
  %3194 = vmatprep.subr.bf16.mxu0 0
  %3195 = vmatpush1.bf16.msra.mxu0 0
  %3196 = vmatprep.subr.bf16.mxu0 0
  %3197 = vmatpush1.bf16.msra.mxu0 0
  %3198 = vmatprep.subr.bf16.mxu0 0
  %3199 = vmatpush1.bf16.msra.mxu0 0
  %3200 = vmatprep.subr.bf16.mxu0 0
  %3201 = vmatpush1.bf16.msra.mxu0 0
  %3202 = vmatprep.subr.bf16.mxu0 0
  %3203 = vmatpush1.bf16.msra.mxu0 0
  %3204 = vmatprep.subr.bf16.mxu0 0
  %3205 = vmatpush1.bf16.msra.mxu0 0
  %3206 = vmatprep.subr.bf16.mxu0 0
  %3207 = vmatpush1.bf16.msra.mxu0 0
  %3208 = vmatprep.subr.bf16.mxu0 0
  %3209 = vmatpush1.bf16.msra.mxu0 0
  %3210 = vmatprep.subr.bf16.mxu0 0
  %3211 = vmatpush1.bf16.msra.mxu0 0
  %3212 = vmatprep.subr.bf16.mxu0 0
  %3213 = vmatpush1.bf16.msra.mxu0 0
  %3214 = vmatprep.subr.bf16.mxu0 0
  %3215 = vmatpush1.bf16.msra.mxu0 0
  %3216 = vmatprep.subr.bf16.mxu0 0
  %3217 = vmatpush1.bf16.msra.mxu0 0
  %3218 = vmatprep.subr.bf16.mxu0 0
  %3219 = vmatpush1.bf16.msra.mxu0 0
  %3220 = vmatprep.subr.bf16.mxu0 0
  %3221 = vmatpush1.bf16.msra.mxu0 0
  %3222 = vmatprep.mubr.bf16.mxu0 0
  %3223 = vmatmul.mubr.bf16.gmra.mrb[0].mxu0 %v3164
  %v3224 = vpop.f32.mrb[0].mxu0
  %v3225 = vadd.f32 0.0, %v3224
  %v3226 = vpop.f32.mrb[0].mxu0
  %v3227 = vpop.f32.mrb[0].mxu0
  %v3228 = vadd.f32 0.0, %v3227
  %v3229 = vpop.f32.mrb[0].mxu0
  %3230 = vmatprep.mubr.bf16.mxu0 0
  %3231 = vmatmul.mubr.bf16.gmra.mrb[0].mxu0 %v3167
  %v3232 = vpop.f32.mrb[0].mxu0
  %v3233 = vadd.f32 0.0, %v3232
  %v3234 = vpop.f32.mrb[0].mxu0
  %v3235 = vpop.f32.mrb[0].mxu0
  %v3236 = vadd.f32 0.0, %v3235
  %v3237 = vpop.f32.mrb[0].mxu0
  %3238 = vmatprep.mubr.bf16.mxu0 0
  %3239 = vmatmul.mubr.bf16.gmra.mrb[0].mxu0 %v3170
  %v3240 = vpop.f32.mrb[0].mxu0
  %v3241 = vadd.f32 0.0, %v3240
  %v3242 = vpop.f32.mrb[0].mxu0
  %v3243 = vpop.f32.mrb[0].mxu0
  %v3244 = vadd.f32 0.0, %v3243
  %v3245 = vpop.f32.mrb[0].mxu0
  %3246 = vmatprep.mubr.bf16.mxu0 0
  %3247 = vmatmul.mubr.bf16.gmra.mrb[0].mxu0 %v3173
  %v3248 = vpop.f32.mrb[0].mxu0
  %v3249 = vadd.f32 0.0, %v3248
  %v3250 = vpop.f32.mrb[0].mxu0
  %v3251 = vpop.f32.mrb[0].mxu0
  %v3252 = vadd.f32 0.0, %v3251
  %v3253 = vpop.f32.mrb[0].mxu0
  %3254 = vmatprep.mubr.bf16.mxu0 0
  %3255 = vmatmul.mubr.bf16.gmra.mrb[0].mxu0 %v3176
  %v3256 = vpop.f32.mrb[0].mxu0
  %v3257 = vadd.f32 0.0, %v3256
  %v3258 = vpop.f32.mrb[0].mxu0
  %v3259 = vpop.f32.mrb[0].mxu0
  %v3260 = vadd.f32 0.0, %v3259
  %v3261 = vpop.f32.mrb[0].mxu0
  %3262 = vmatprep.mubr.bf16.mxu0 0
  %3263 = vmatmul.mubr.bf16.gmra.mrb[0].mxu0 %v3179
  %v3264 = vpop.f32.mrb[0].mxu0
  %v3265 = vadd.f32 0.0, %v3264
  %v3266 = vpop.f32.mrb[0].mxu0
  %v3267 = vpop.f32.mrb[0].mxu0
  %v3268 = vadd.f32 0.0, %v3267
  %v3269 = vpop.f32.mrb[0].mxu0
  %3270 = vmatprep.mubr.bf16.mxu0 0
  %3271 = vmatmul.mubr.bf16.gmra.mrb[0].mxu0 %v3182
  %v3272 = vpop.f32.mrb[0].mxu0
  %v3273 = vadd.f32 0.0, %v3272
  %v3274 = vpop.f32.mrb[0].mxu0
  %v3275 = vpop.f32.mrb[0].mxu0
  %v3276 = vadd.f32 0.0, %v3275
  %v3277 = vpop.f32.mrb[0].mxu0
  %3278 = vmatprep.mubr.bf16.mxu0 0
  %3279 = vmatmul.mubr.bf16.gmra.mrb[0].mxu0 %v3185
  %v3280 = vpop.f32.mrb[0].mxu0
  %v3281 = vadd.f32 0.0, %v3280
  %v3282 = vpop.f32.mrb[0].mxu0
  %v3283 = vpop.f32.mrb[0].mxu0
  %v3284 = vadd.f32 0.0, %v3283
  %v3285 = vpop.f32.mrb[0].mxu0
  %3286 = vdwg.mxu0
  %v3287 = vadd.f32 %v3121, %v3225
  %v3288 = vadd.f32 %v3122, %v3228
  %v3289 = vadd.f32 %v3123, %v3233
  %v3290 = vadd.f32 %v3124, %v3236
  %v3291 = vadd.f32 %v3125, %v3241
  %v3292 = vadd.f32 %v3126, %v3244
  %v3293 = vadd.f32 %v3127, %v3249
  %v3294 = vadd.f32 %v3128, %v3252
  %v3295 = vadd.f32 %v3129, %v3257
  %v3296 = vadd.f32 %v3130, %v3260
  %v3297 = vadd.f32 %v3131, %v3265
  %v3298 = vadd.f32 %v3132, %v3268
  %v3299 = vadd.f32 %v3133, %v3273
  %v3300 = vadd.f32 %v3134, %v3276
  %v3301 = vadd.f32 %v3135, %v3281
  %v3302 = vadd.f32 %v3136, %v3284
  %v3303 = vld [vmem:[%s5] sm:$0x1]
  %v3304 = vld [vmem:[%s6] sm:$0x1]
  %v3305 = vsel %vm27, %v3287, 0.0
  %v3306 = vsel %vm27, %v3288, 0.0
  %v3307 = vadd.f32 %v3305, %v3306
  %v3308 = vsel %vm27, %v3289, 0.0
  %v3309 = vadd.f32 %v3307, %v3308
  %v3310 = vsel %vm27, %v3290, 0.0
  %v3311 = vadd.f32 %v3309, %v3310
  %v3312 = vsel %vm27, %v3291, 0.0
  %v3313 = vadd.f32 %v3311, %v3312
  %v3314 = vsel %vm27, %v3292, 0.0
  %v3315 = vadd.f32 %v3313, %v3314
  %v3316 = vsel %vm27, %v3293, 0.0
  %v3317 = vadd.f32 %v3315, %v3316
  %v3318 = vsel %vm27, %v3294, 0.0
  %v3319 = vadd.f32 %v3317, %v3318
  %v3320 = vsel %vm27, %v3295, 0.0
  %v3321 = vadd.f32 %v3319, %v3320
  %v3322 = vsel %vm27, %v3296, 0.0
  %v3323 = vadd.f32 %v3321, %v3322
  %v3324 = vsel %vm27, %v3297, 0.0
  %v3325 = vadd.f32 %v3323, %v3324
  %v3326 = vsel %vm27, %v3298, 0.0
  %v3327 = vadd.f32 %v3325, %v3326
  %v3328 = vsel %vm27, %v3299, 0.0
  %v3329 = vadd.f32 %v3327, %v3328
  %v3330 = vsel %vm27, %v3300, 0.0
  %v3331 = vadd.f32 %v3329, %v3330
  %v3332 = vsel %vm27, %v3301, 0.0
  %v3333 = vadd.f32 %v3331, %v3332
  %v3334 = vsel %vm27, %v3302, 0.0
  %v3335 = vadd.f32 %v3333, %v3334
  %v3336 = vrot.slane %v3335, 4
  %v3337 = vadd.f32 %v3335, %v3336
  %v3338 = vrot.slane %v3337, 2
  %v3339 = vadd.f32 %v3337, %v3338
  %v3340 = vrot.slane %v3339, 1
  %v3341 = vadd.f32 %v3339, %v3340
  %v3342 = vmul.f32 %v3341, 0.0078125
  %v3343 = vmul.f32 %v3287, %v3287
  %v3344 = vmul.f32 %v3288, %v3288
  %v3345 = vmul.f32 %v3289, %v3289
  %v3346 = vmul.f32 %v3290, %v3290
  %v3347 = vmul.f32 %v3291, %v3291
  %v3348 = vmul.f32 %v3292, %v3292
  %v3349 = vmul.f32 %v3293, %v3293
  %v3350 = vmul.f32 %v3294, %v3294
  %v3351 = vmul.f32 %v3295, %v3295
  %v3352 = vmul.f32 %v3296, %v3296
  %v3353 = vmul.f32 %v3297, %v3297
  %v3354 = vmul.f32 %v3298, %v3298
  %v3355 = vmul.f32 %v3299, %v3299
  %v3356 = vmul.f32 %v3300, %v3300
  %v3357 = vmul.f32 %v3301, %v3301
  %v3358 = vmul.f32 %v3302, %v3302
  %v3359 = vsel %vm27, %v3343, 0.0
  %v3360 = vsel %vm27, %v3344, 0.0
  %v3361 = vadd.f32 %v3359, %v3360
  %v3362 = vsel %vm27, %v3345, 0.0
  %v3363 = vadd.f32 %v3361, %v3362
  %v3364 = vsel %vm27, %v3346, 0.0
  %v3365 = vadd.f32 %v3363, %v3364
  %v3366 = vsel %vm27, %v3347, 0.0
  %v3367 = vadd.f32 %v3365, %v3366
  %v3368 = vsel %vm27, %v3348, 0.0
  %v3369 = vadd.f32 %v3367, %v3368
  %v3370 = vsel %vm27, %v3349, 0.0
  %v3371 = vadd.f32 %v3369, %v3370
  %v3372 = vsel %vm27, %v3350, 0.0
  %v3373 = vadd.f32 %v3371, %v3372
  %v3374 = vsel %vm27, %v3351, 0.0
  %v3375 = vadd.f32 %v3373, %v3374
  %v3376 = vsel %vm27, %v3352, 0.0
  %v3377 = vadd.f32 %v3375, %v3376
  %v3378 = vsel %vm27, %v3353, 0.0
  %v3379 = vadd.f32 %v3377, %v3378
  %v3380 = vsel %vm27, %v3354, 0.0
  %v3381 = vadd.f32 %v3379, %v3380
  %v3382 = vsel %vm27, %v3355, 0.0
  %v3383 = vadd.f32 %v3381, %v3382
  %v3384 = vsel %vm27, %v3356, 0.0
  %v3385 = vadd.f32 %v3383, %v3384
  %v3386 = vsel %vm27, %v3357, 0.0
  %v3387 = vadd.f32 %v3385, %v3386
  %v3388 = vsel %vm27, %v3358, 0.0
  %v3389 = vadd.f32 %v3387, %v3388
  %v3390 = vrot.slane %v3389, 4
  %v3391 = vadd.f32 %v3389, %v3390
  %v3392 = vrot.slane %v3391, 2
  %v3393 = vadd.f32 %v3391, %v3392
  %v3394 = vrot.slane %v3393, 1
  %v3395 = vadd.f32 %v3393, %v3394
  %v3396 = vmul.f32 %v3395, 0.0078125
  %v3397 = vmul.f32 %v3342, %v3342
  %v3398 = vsub.f32 %v3396, %v3397
  %v3399 = vadd.f32 %v3398, 1e-05
  %v3400 = vrsqrt.pop %v3399
  %v3401 = vmul.f32 %v3303, %v3400
  %v3402 = vmul.f32 %v3342, %v3401
  %v3403 = vsub.f32 %v3304, %v3402
  %v3405 = vlaneseq
  %v3406 = vshrl.u32 %v3405, 7
  %v3407 = vsub.s32 0, %v3406
  %v3408 = vrot.slane %v3401, %v3407
  %v3410 = vmul.f32 %v3287, %v3408
  %v3411 = vmul.f32 %v3288, %v3408
  %v3412 = vmul.f32 %v3289, %v3408
  %v3413 = vmul.f32 %v3290, %v3408
  %v3414 = vmul.f32 %v3291, %v3408
  %v3415 = vmul.f32 %v3292, %v3408
  %v3416 = vmul.f32 %v3293, %v3408
  %v3417 = vmul.f32 %v3294, %v3408
  %v3418 = vmul.f32 %v3295, %v3408
  %v3419 = vmul.f32 %v3296, %v3408
  %v3420 = vmul.f32 %v3297, %v3408
  %v3421 = vmul.f32 %v3298, %v3408
  %v3422 = vmul.f32 %v3299, %v3408
  %v3423 = vmul.f32 %v3300, %v3408
  %v3424 = vmul.f32 %v3301, %v3408
  %v3425 = vmul.f32 %v3302, %v3408
  %v3427 = vlaneseq
  %v3428 = vshrl.u32 %v3427, 7
  %v3429 = vsub.s32 0, %v3428
  %v3430 = vrot.slane %v3403, %v3429
  %v3432 = vadd.f32 %v3410, %v3430
  %v3433 = vadd.f32 %v3411, %v3430
  %v3434 = vadd.f32 %v3412, %v3430
  %v3435 = vadd.f32 %v3413, %v3430
  %v3436 = vadd.f32 %v3414, %v3430
  %v3437 = vadd.f32 %v3415, %v3430
  %v3438 = vadd.f32 %v3416, %v3430
  %v3439 = vadd.f32 %v3417, %v3430
  %v3440 = vadd.f32 %v3418, %v3430
  %v3441 = vadd.f32 %v3419, %v3430
  %v3442 = vadd.f32 %v3420, %v3430
  %v3443 = vadd.f32 %v3421, %v3430
  %v3444 = vadd.f32 %v3422, %v3430
  %v3445 = vadd.f32 %v3423, %v3430
  %v3446 = vadd.f32 %v3424, %v3430
  %v3447 = vadd.f32 %v3425, %v3430
  %v3448 = vmax.f32 %v3432, 0.0
  %v3449 = vmax.f32 %v3433, 0.0
  %v3450 = vmax.f32 %v3434, 0.0
  %v3451 = vmax.f32 %v3435, 0.0
  %v3452 = vmax.f32 %v3436, 0.0
  %v3453 = vmax.f32 %v3437, 0.0
  %v3454 = vmax.f32 %v3438, 0.0
  %v3455 = vmax.f32 %v3439, 0.0
  %v3456 = vmax.f32 %v3440, 0.0
  %v3457 = vmax.f32 %v3441, 0.0
  %v3458 = vmax.f32 %v3442, 0.0
  %v3459 = vmax.f32 %v3443, 0.0
  %v3460 = vmax.f32 %v3444, 0.0
  %v3461 = vmax.f32 %v3445, 0.0
  %v3462 = vmax.f32 %v3446, 0.0
  %v3463 = vmax.f32 %v3447, 0.0
  %3464 = vst.msk [vmem:[%s7] sm:$0xff] %vm27, %v3448
  %3465 = vst.msk [vmem:[%s7 + $0x8] sm:$0xff] %vm27, %v3449
  %3466 = vst.msk [vmem:[%s7 + $0x10] sm:$0xff] %vm27, %v3450
  %3467 = vst.msk [vmem:[%s7 + $0x18] sm:$0xff] %vm27, %v3451
  %3468 = vst.msk [vmem:[%s7 + $0x20] sm:$0xff] %vm27, %v3452
  %3469 = vst.msk [vmem:[%s7 + $0x28] sm:$0xff] %vm27, %v3453
  %3470 = vst.msk [vmem:[%s7 + $0x30] sm:$0xff] %vm27, %v3454
  %3471 = vst.msk [vmem:[%s7 + $0x38] sm:$0xff] %vm27, %v3455
  %3472 = vst.msk [vmem:[%s7 + $0x40] sm:$0xff] %vm27, %v3456
  %3473 = vst.msk [vmem:[%s7 + $0x48] sm:$0xff] %vm27, %v3457
  %3474 = vst.msk [vmem:[%s7 + $0x50] sm:$0xff] %vm27, %v3458
  %3475 = vst.msk [vmem:[%s7 + $0x58] sm:$0xff] %vm27, %v3459
  %3476 = vst.msk [vmem:[%s7 + $0x60] sm:$0xff] %vm27, %v3460
  %3477 = vst.msk [vmem:[%s7 + $0x68] sm:$0xff] %vm27, %v3461
  %3478 = vst.msk [vmem:[%s7 + $0x70] sm:$0xff] %vm27, %v3462
  %3479 = vst.msk [vmem:[%s7 + $0x78] sm:$0xff] %vm27, %v3463
  // Predicated region
  $region30: #{tpu_custom_call.1} parent=0 // pred_check
    _
  $region31: #{tpu_custom_call.1} parent=0 // pred_check_branch
    %3481 = sbr.rel (0) target = $region33
  $region32: #{tpu_custom_call.1} parent=0 // pred_region
    _
  $region33: #{tpu_custom_call.1} parent=0 // pred_fallthru
    _
  // Predicated region
  $region34: #{tpu_custom_call.1} parent=0 // pred_check
    _
  $region35: #{tpu_custom_call.1} parent=0 // pred_check_branch
    %3483 = sbr.rel (0) target = $region37
  $region36: #{tpu_custom_call.1} parent=0 // pred_region
    _
  $region37: #{tpu_custom_call.1} parent=0 // pred_fallthru
    _

</llo_original>
